<compile_context>
chip_gen: v7x
topology: tpu7x:2x2x1
jax: 0.10.0
libtpu: 0.0.40
codegen_flags: <defaults>
</compile_context>

<pallas_src>
import math
import functools

import jax
import jax.numpy as jnp
from jax import lax
from jax.experimental import pallas as pl
from jax.experimental.pallas import tpu as pltpu  # noqa: F401  (model fits one VMEM-resident call)

# ----------------------------- model dimensions -----------------------------
B = 2            # batch
L = 16           # n_steps (power of two: exact circular-corr identity + cheap shift tricks)
F = 4            # n_features
N_LAYERS = 2
N_HEADS = 2      # heads do not change AutoCorrelation math (mean over H*E == mean over d_model)
D_MODEL = 32
D_FFN = 64
FACTOR = 1
MA_WIN = 5       # moving_avg_window_size (odd)
TOP_K = max(1, int(FACTOR * math.log(L)))   # == int(factor * log(length)) as in torch
ORT_WEIGHT = 1.0
MIT_WEIGHT = 1.0

BL = B * L
LOG2_L = L.bit_length() - 1
LOG2_F = F.bit_length() - 1
assert (1 << LOG2_L) == L, "L must be a power of two"
assert (1 << LOG2_F) == F, "F must be a power of two"

# lane offsets inside the packed data operand (BL, 10F)
_XS0, _XS1 = 0, 6 * F            # circular-conv stacked embedding input
_X0, _X1 = 6 * F, 7 * F          # X
_M0, _M1 = 7 * F, 8 * F          # missing_mask
_XO0, _XO1 = 8 * F, 9 * F        # X_ori
_IN0, _IN1 = 9 * F, 10 * F       # indicating_mask
DATA_W = 10 * F


def _tree_sum(xs):
    """Pairwise (tree) reduction of a list of arrays: chain depth O(log n)."""
    xs = list(xs)
    while len(xs) > 1:
        nxt = [xs[i] + xs[i + 1] for i in range(0, len(xs) - 1, 2)]
        if len(xs) % 2:
            nxt.append(xs[-1])
        xs = nxt
    return xs[0]


# -------------------------------- fused kernel --------------------------------
def fused_autoformer_kernel(data_ref, wmisc_ref, wA_ref, w2_ref, bias_ref,
                            imp_ref, loss_ref):
    f32 = jnp.float32
    inv_d = 1.0 / D_MODEL

    # ---------------- constants built once from iotas (no input dependence) ----
    r_bl = lax.broadcasted_iota(jnp.int32, (BL, BL), 0)
    c_bl = lax.broadcasted_iota(jnp.int32, (BL, BL), 1)
    same_batch = (r_bl >> LOG2_L) == (c_bl >> LOG2_L)
    same_batch_f = same_batch.astype(f32)
    eye_f = (r_bl == c_bl).astype(f32)
    dlt_bl = (c_bl - r_bl) & (L - 1)          # (col - row) mod L, valid within a batch block

    # block-diagonal moving-average matrix (replicate padding, window MA_WIN),
    # folded as (I - M) so series_decomp is a single matmul.
    loc_r = r_bl & (L - 1)
    loc_c = c_bl & (L - 1)
    ma_terms = []
    for j in range(-(MA_WIN // 2), MA_WIN // 2 + 1):
        idx = jnp.clip(loc_r + j, 0, L - 1)
        ma_terms.append(jnp.where((idx == loc_c) & same_batch, 1.0 / MA_WIN, 0.0))
    IM = eye_f - _tree_sum(ma_terms)          # (I - blockdiag moving average)
    IT = eye_f - same_batch_f * (1.0 / L)     # (I - per-batch time mean)

    lane_l = lax.broadcasted_iota(jnp.int32, (1, L), 1)
    lane_bl = lax.broadcasted_iota(jnp.int32, (B, L), 1)
    row_col = lax.broadcasted_iota(jnp.int32, (BL, 1), 0)
    lane8 = lax.broadcasted_iota(jnp.int32, (1, 8), 1)
    grp = ((lax.broadcasted_iota(jnp.int32, (4 * F, 4), 0) >> LOG2_F)
           == lax.broadcasted_iota(jnp.int32, (4 * F, 4), 1)).astype(f32)   # (4F, 4) group one-hot
    ones_row = jnp.ones((1, BL), f32)

    # ---------------- unpack operands ----------------
    data = data_ref[...]                                  # (BL, 10F)
    x_stack = data[:, _XS0:_XS1]
    Xd = data[:, _X0:_X1]
    m = data[:, _M0:_M1]
    xo = data[:, _XO0:_XO1]
    ind = data[:, _IN0:_IN1]

    wemb = wmisc_ref[0:6 * F, :]                          # (6F, D)  stacked conv taps
    wpT = wmisc_ref[6 * F:7 * F, :]                       # (F, D)   output-projection weight (torch layout)

    ln_g = bias_ref[N_LAYERS:N_LAYERS + 1, 0:D_MODEL]
    ln_b = bias_ref[N_LAYERS:N_LAYERS + 1, D_MODEL:2 * D_MODEL]
    bp = bias_ref[N_LAYERS:N_LAYERS + 1, 2 * D_MODEL:2 * D_MODEL + F]

    # --- TokenEmbedding: circular Conv1d(2F -> D, k=3, no bias) as ONE matmul ---
    enc = jnp.dot(x_stack, wemb, preferred_element_type=f32)               # (BL, D)

    # --------------------------- encoder layers ---------------------------
    for layer in range(N_LAYERS):
        wa = wA_ref[layer]                                                 # (D, 192)
        w_qkv = wa[:, 0:3 * D_MODEL]
        w_o = wa[:, 3 * D_MODEL:4 * D_MODEL]
        w_1 = wa[:, 4 * D_MODEL:4 * D_MODEL + D_FFN]
        w_2 = w2_ref[layer]                                                # (D_FFN, D)
        b_qkv = bias_ref[layer:layer + 1, 0:3 * D_MODEL]
        b_o = bias_ref[layer:layer + 1, 3 * D_MODEL:4 * D_MODEL]

        # fused Q|K|V projection (one MXU push for both batch elements)
        qkv = jnp.dot(enc, w_qkv, preferred_element_type=f32) + b_qkv
        q = qkv[:, 0:D_MODEL]
        k = qkv[:, D_MODEL:2 * D_MODEL]
        v = qkv[:, 2 * D_MODEL:3 * D_MODEL]

        # AutoCorrelation mean value over channels:
        #   mv[b, tau] = (1/D) * sum_s <K_b[s], Q_b[(s+tau) % L]>
        # One merged MXU push against per-batch doubled Q (no wraparound),
        # then shifted-diagonal slices combined by a TREE reduction.
        q2 = jnp.concatenate([q[b * L:(b + 1) * L] for b in range(B) for _ in range(2)],
                             axis=0)                                       # (2*BL, D) = [Q0;Q0;Q1;Q1]
        s2 = lax.dot_general(k, q2, (((1,), (1,)), ((), ())),
                             preferred_element_type=f32)                   # (BL, 2*BL)
        mv_rows = []
        for b in range(B):
            slices = [s2[b * L + s:b * L + s + 1, 2 * b * L + s:2 * b * L + s + L]
                      for s in range(L)]                                   # 16 independent (1,L) slices
            mv_rows.append(_tree_sum(slices) * inv_d)                      # (1, L)
        mv = jnp.concatenate(mv_rows, axis=0)                              # (B, L)

        # in-kernel top-k delay selection over the batch-mean correlation
        bm = _tree_sum(mv_rows) * (1.0 / B)                                # (1, L)
        delays = []
        work = bm
        for _ in range(TOP_K):
            m_val = jnp.max(work)
            d = jnp.min(jnp.where(work == m_val, lane_l, L))               # lowest index on ties
            delays.append(d)
            work = jnp.where(lane_l == d, -jnp.inf, work)

        # per-batch weights at the selected delays + softmax over TOP_K
        w_cols = [jnp.sum(jnp.where(lane_bl == d, mv, 0.0), axis=1, keepdims=True)
                  for d in delays]                                         # TOP_K x (B, 1)
        wmax = functools.reduce(jnp.maximum, w_cols)
        exps = [jnp.exp(wc - wmax) for wc in w_cols]
        denom = functools.reduce(jnp.add, exps)
        tc = [e / denom for e in exps]                                     # TOP_K x (B, 1)

        # time_delay_agg_training as ONE block-diagonal gather matmul:
        #   agg[b*L+t] = sum_i tc[b,i] * V_b[(t + delay_i) % L]
        p_terms = []
        for i in range(TOP_K):
            rep_i = functools.reduce(
                jnp.add,
                [jnp.where((row_col >> LOG2_L) == b, tc[i][b:b + 1, 0:1], 0.0)
                 for b in range(B)])                                       # (BL, 1) weight per row
            p_terms.append(rep_i * (dlt_bl == delays[i]).astype(f32))
        P = _tree_sum(p_terms) * same_batch_f                              # (BL, BL)
        agg = jnp.dot(P, v, preferred_element_type=f32)                    # (BL, D)

        # out projection + residual
        x_res = enc + jnp.dot(agg, w_o, preferred_element_type=f32) + b_o

        # series_decomp -> 1x1-conv FFN (relu, no bias) -> series_decomp,
        # each decomposition folded into a single (I - M) matmul.
        x1 = jnp.dot(IM, x_res, preferred_element_type=f32)
        y = jnp.maximum(jnp.dot(x1, w_1, preferred_element_type=f32), 0.0)
        y = jnp.dot(y, w_2, preferred_element_type=f32)
        enc = jnp.dot(IM, x1 + y, preferred_element_type=f32)

    # --- SeasonalLayerNorm -> output projection -> imputation ---
    mu = jnp.mean(enc, axis=-1, keepdims=True)
    xc = enc - mu
    var = jnp.mean(xc * xc, axis=-1, keepdims=True)
    xh = xc * lax.rsqrt(var + 1e-5) * ln_g + ln_b
    xh = jnp.dot(IT, xh, preferred_element_type=f32)                       # folded (I - time_mean)
    rec = lax.dot_general(xh, wpT, (((1,), (1,)), ((), ())),
                          preferred_element_type=f32) + bp                 # (BL, F)

    imp_ref[...] = m * Xd + (1.0 - m) * rec

    # --- SAITS loss (masked MAE, ORT + MIT): all four sums in one MXU push ---
    err = jnp.abs(rec - xo)
    lmat = jnp.concatenate([err * m, err * ind, m, ind], axis=1)           # (BL, 4F)
    totals = jnp.dot(jnp.dot(ones_row, lmat, preferred_element_type=f32), grp,
                     preferred_element_type=f32)                           # (1, 4)
    ort = ORT_WEIGHT * totals[0:1, 0:1] / (totals[0:1, 2:3] + 1e-12)
    mit = MIT_WEIGHT * totals[0:1, 1:2] / (totals[0:1, 3:4] + 1e-12)
    loss_ref[...] = (jnp.where(lane8 == 0, ort, 0.0)
                     + jnp.where(lane8 == 1, mit, 0.0)
                     + jnp.where(lane8 == 2, ort + mit, 0.0))


# ------------------------------ pallas wrapper --------------------------------
@jax.jit
def _forward_jit(params, X, missing_mask, X_ori, indicating_mask):
    # circular conv input: stack [x_{t-1} | x_t | x_{t+1}] along channels
    x_cat = jnp.concatenate([X, missing_mask], axis=2)                     # (B, L, 2F)
    x_stack = jnp.concatenate(
        [jnp.roll(x_cat, 1, axis=1), x_cat, jnp.roll(x_cat, -1, axis=1)],
        axis=-1).reshape(BL, 6 * F)                                        # (BL, 6F)
    # single packed data operand (one DMA instead of five)
    data_pack = jnp.concatenate(
        [x_stack, X.reshape(BL, F), missing_mask.reshape(BL, F),
         X_ori.reshape(BL, F), indicating_mask.reshape(BL, F)], axis=1)    # (BL, 10F)

    imp_flat, loss_vec = pl.pallas_call(
        fused_autoformer_kernel,
        out_shape=(jax.ShapeDtypeStruct((BL, F), jnp.float32),
                   jax.ShapeDtypeStruct((1, 8), jnp.float32)),
        cost_estimate=pl.CostEstimate(flops=2_300_000, transcendentals=64,
                                      bytes_accessed=90_000),
    )(data_pack, params["w_misc"], params["wA"], params["w2"], params["bias_pack"])

    return (imp_flat.reshape(B, L, F),
            loss_vec[0, 0], loss_vec[0, 1], loss_vec[0, 2])


def autoformer_forward(params, X, missing_mask, X_ori=None, indicating_mask=None,
                       norm_val=None, training=True):
    # TODO(synk): forked calc_mae's `norm_val` handling is unknown; standard pypots masked-MAE used.
    if X_ori is None:
        X_ori = jnp.zeros_like(X)
    if indicating_mask is None:
        indicating_mask = jnp.zeros_like(X)
    imputed, ort, mit, loss = _forward_jit(params, X, missing_mask, X_ori, indicating_mask)
    results = {"imputed_data": imputed}
    if training:
        results["ORT_loss"] = ort
        results["MIT_loss"] = mit
        results["loss"] = loss
    return results


# ------------------------------ parameter init --------------------------------
def init_params(key):
    keys = jax.random.split(key, 64)
    it = iter(keys)

    def rand(shape, scale=0.1):
        return (scale * jax.random.normal(next(it), shape)).astype(jnp.float32)

    # TokenEmbedding Conv1d weight (out, in, k) -> stacked taps [W0; W1; W2] (6F, D)
    wconv = rand((D_MODEL, 2 * F, 3))
    wemb = jnp.concatenate([jnp.transpose(wconv[:, :, kk]) for kk in range(3)], axis=0)
    wp = rand((F, D_MODEL))                              # output projection (torch layout: out, in)
    w_misc = jnp.concatenate([wemb, wp], axis=0)         # (6F + F, D) = (28, 32)

    wA_layers, w2_layers, bias_rows = [], [], []
    for _ in range(N_LAYERS):
        wq = jnp.transpose(rand((D_MODEL, D_MODEL)))
        wk = jnp.transpose(rand((D_MODEL, D_MODEL)))
        wv = jnp.transpose(rand((D_MODEL, D_MODEL)))
        wqkv = jnp.concatenate([wq, wk, wv], axis=1)                     # (D, 3D)
        wo = jnp.transpose(rand((D_MODEL, D_MODEL)))                     # (D, D)
        w1 = jnp.transpose(rand((D_FFN, D_MODEL)))                       # (D, D_FFN), 1x1 conv1
        w2 = jnp.transpose(rand((D_MODEL, D_FFN)))                       # (D_FFN, D), 1x1 conv2
        wA_layers.append(jnp.concatenate([wqkv, wo, w1], axis=1))        # (D, 3D + D + D_FFN) = (32, 192)
        w2_layers.append(w2)
        bqkv = jnp.concatenate([rand((1, D_MODEL)) for _ in range(3)], axis=1)   # (1, 3D)
        bo = rand((1, D_MODEL))
        bias_rows.append(jnp.concatenate([bqkv, bo], axis=1))            # (1, 128) lane-dense
    ln_g = jnp.ones((1, D_MODEL), jnp.float32)           # SeasonalLayerNorm affine
    ln_b = jnp.zeros((1, D_MODEL), jnp.float32)
    bp = rand((1, F))
    last_row = jnp.concatenate(
        [ln_g, ln_b, bp, jnp.zeros((1, 128 - 2 * D_MODEL - F), jnp.float32)], axis=1)
    bias_pack = jnp.concatenate(bias_rows + [last_row], axis=0)          # (N_LAYERS + 1, 128)

    return {
        "w_misc": w_misc,                    # (28, 32): [conv taps ; Wp]
        "wA": jnp.stack(wA_layers),          # (N_LAYERS, 32, 192): [Wqkv | Wo | W1]
        "w2": jnp.stack(w2_layers),          # (N_LAYERS, 64, 32)
        "bias_pack": bias_pack,              # (N_LAYERS + 1, 128)
    }


# ------------------------------------ main -------------------------------------
if __name__ == "__main__":
    key = jax.random.PRNGKey(0)
    kp, kx, km, ki = jax.random.split(key, 4)
    params = init_params(kp)

    X_full = jax.random.normal(kx, (B, L, F), jnp.float32)
    missing_mask = (jax.random.uniform(km, (B, L, F)) > 0.3).astype(jnp.float32)
    indicating_mask = ((jax.random.uniform(ki, (B, L, F)) > 0.7).astype(jnp.float32)
                       * (1.0 - missing_mask))
    X = X_full * missing_mask
    X_ori = X_full
    norm_val = jnp.ones((B,), jnp.float32)

    results = autoformer_forward(params, X, missing_mask, X_ori, indicating_mask,
                                 norm_val, training=True)
    jax.block_until_ready(results)
    assert results["imputed_data"].shape == (B, L, F)
    print("KERNEL_OK")
</pallas_src>

<mosaic_0001>
module attributes {stable_mosaic.version = 11 : i64} {
  func.func @fused_autoformer_kernel(%arg0: memref<32x40xf32, #tpu.memory_space<vmem>>, %arg1: memref<28x32xf32, #tpu.memory_space<vmem>>, %arg2: memref<2x32x192xf32, #tpu.memory_space<vmem>>, %arg3: memref<2x64x32xf32, #tpu.memory_space<vmem>>, %arg4: memref<3x128xf32, #tpu.memory_space<vmem>>, %arg5: memref<32x4xf32, #tpu.memory_space<vmem>>, %arg6: memref<1x8xf32, #tpu.memory_space<vmem>>) attributes {dimension_semantics = [], scalar_prefetch = 0 : i64, scratch_operands = 0 : i64, tpu.core_type = #tpu.core_type<tc>} {
    %0 = tpu.iota {dimensions = array<i32: 0>} : vector<32x32xi32>
    %1 = tpu.iota {dimensions = array<i32: 1>} : vector<32x32xi32>
    %c4_i32 = arith.constant 4 : i32
    %2 = vector.broadcast %c4_i32 : i32 to vector<32x32xi32>
    %3 = arith.shrsi %0, %2 : vector<32x32xi32>
    %c4_i32_0 = arith.constant 4 : i32
    %4 = vector.broadcast %c4_i32_0 : i32 to vector<32x32xi32>
    %5 = arith.shrsi %1, %4 : vector<32x32xi32>
    %6 = arith.cmpi eq, %3, %5 : vector<32x32xi32>
    %7 = arith.extui %6 : vector<32x32xi1> to vector<32x32xi32>
    %8 = arith.sitofp %7 : vector<32x32xi32> to vector<32x32xf32>
    %9 = arith.cmpi eq, %0, %1 : vector<32x32xi32>
    %10 = arith.extui %9 : vector<32x32xi1> to vector<32x32xi32>
    %11 = arith.sitofp %10 : vector<32x32xi32> to vector<32x32xf32>
    %12 = arith.subi %1, %0 : vector<32x32xi32>
    %c15_i32 = arith.constant 15 : i32
    %13 = vector.broadcast %c15_i32 : i32 to vector<32x32xi32>
    %14 = arith.andi %12, %13 : vector<32x32xi32>
    %c15_i32_1 = arith.constant 15 : i32
    %15 = vector.broadcast %c15_i32_1 : i32 to vector<32x32xi32>
    %16 = arith.andi %0, %15 : vector<32x32xi32>
    %c15_i32_2 = arith.constant 15 : i32
    %17 = vector.broadcast %c15_i32_2 : i32 to vector<32x32xi32>
    %18 = arith.andi %1, %17 : vector<32x32xi32>
    %c-2_i32 = arith.constant -2 : i32
    %19 = vector.broadcast %c-2_i32 : i32 to vector<32x32xi32>
    %20 = arith.addi %16, %19 : vector<32x32xi32>
    %c0_i32 = arith.constant 0 : i32
    %c15_i32_3 = arith.constant 15 : i32
    %21 = vector.broadcast %c0_i32 : i32 to vector<32x32xi32>
    %22 = arith.maxsi %21, %20 : vector<32x32xi32>
    %23 = vector.broadcast %c15_i32_3 : i32 to vector<32x32xi32>
    %24 = arith.minsi %23, %22 : vector<32x32xi32>
    %25 = arith.cmpi eq, %24, %18 : vector<32x32xi32>
    %26 = arith.andi %25, %6 : vector<32x32xi1>
    %cst = arith.constant 2.000000e-01 : f32
    %cst_4 = arith.constant 0.000000e+00 : f32
    %27 = vector.broadcast %cst : f32 to vector<32x32xf32>
    %28 = vector.broadcast %cst_4 : f32 to vector<32x32xf32>
    %29 = arith.select %26, %27, %28 : vector<32x32xi1>, vector<32x32xf32>
    %c-1_i32 = arith.constant -1 : i32
    %30 = vector.broadcast %c-1_i32 : i32 to vector<32x32xi32>
    %31 = arith.addi %16, %30 : vector<32x32xi32>
    %c0_i32_5 = arith.constant 0 : i32
    %c15_i32_6 = arith.constant 15 : i32
    %32 = vector.broadcast %c0_i32_5 : i32 to vector<32x32xi32>
    %33 = arith.maxsi %32, %31 : vector<32x32xi32>
    %34 = vector.broadcast %c15_i32_6 : i32 to vector<32x32xi32>
    %35 = arith.minsi %34, %33 : vector<32x32xi32>
    %36 = arith.cmpi eq, %35, %18 : vector<32x32xi32>
    %37 = arith.andi %36, %6 : vector<32x32xi1>
    %cst_7 = arith.constant 2.000000e-01 : f32
    %cst_8 = arith.constant 0.000000e+00 : f32
    %38 = vector.broadcast %cst_7 : f32 to vector<32x32xf32>
    %39 = vector.broadcast %cst_8 : f32 to vector<32x32xf32>
    %40 = arith.select %37, %38, %39 : vector<32x32xi1>, vector<32x32xf32>
    %c0_i32_9 = arith.constant 0 : i32
    %41 = vector.broadcast %c0_i32_9 : i32 to vector<32x32xi32>
    %42 = arith.addi %16, %41 : vector<32x32xi32>
    %c0_i32_10 = arith.constant 0 : i32
    %c15_i32_11 = arith.constant 15 : i32
    %43 = vector.broadcast %c0_i32_10 : i32 to vector<32x32xi32>
    %44 = arith.maxsi %43, %42 : vector<32x32xi32>
    %45 = vector.broadcast %c15_i32_11 : i32 to vector<32x32xi32>
    %46 = arith.minsi %45, %44 : vector<32x32xi32>
    %47 = arith.cmpi eq, %46, %18 : vector<32x32xi32>
    %48 = arith.andi %47, %6 : vector<32x32xi1>
    %cst_12 = arith.constant 2.000000e-01 : f32
    %cst_13 = arith.constant 0.000000e+00 : f32
    %49 = vector.broadcast %cst_12 : f32 to vector<32x32xf32>
    %50 = vector.broadcast %cst_13 : f32 to vector<32x32xf32>
    %51 = arith.select %48, %49, %50 : vector<32x32xi1>, vector<32x32xf32>
    %c1_i32 = arith.constant 1 : i32
    %52 = vector.broadcast %c1_i32 : i32 to vector<32x32xi32>
    %53 = arith.addi %16, %52 : vector<32x32xi32>
    %c0_i32_14 = arith.constant 0 : i32
    %c15_i32_15 = arith.constant 15 : i32
    %54 = vector.broadcast %c0_i32_14 : i32 to vector<32x32xi32>
    %55 = arith.maxsi %54, %53 : vector<32x32xi32>
    %56 = vector.broadcast %c15_i32_15 : i32 to vector<32x32xi32>
    %57 = arith.minsi %56, %55 : vector<32x32xi32>
    %58 = arith.cmpi eq, %57, %18 : vector<32x32xi32>
    %59 = arith.andi %58, %6 : vector<32x32xi1>
    %cst_16 = arith.constant 2.000000e-01 : f32
    %cst_17 = arith.constant 0.000000e+00 : f32
    %60 = vector.broadcast %cst_16 : f32 to vector<32x32xf32>
    %61 = vector.broadcast %cst_17 : f32 to vector<32x32xf32>
    %62 = arith.select %59, %60, %61 : vector<32x32xi1>, vector<32x32xf32>
    %c2_i32 = arith.constant 2 : i32
    %63 = vector.broadcast %c2_i32 : i32 to vector<32x32xi32>
    %64 = arith.addi %16, %63 : vector<32x32xi32>
    %c0_i32_18 = arith.constant 0 : i32
    %c15_i32_19 = arith.constant 15 : i32
    %65 = vector.broadcast %c0_i32_18 : i32 to vector<32x32xi32>
    %66 = arith.maxsi %65, %64 : vector<32x32xi32>
    %67 = vector.broadcast %c15_i32_19 : i32 to vector<32x32xi32>
    %68 = arith.minsi %67, %66 : vector<32x32xi32>
    %69 = arith.cmpi eq, %68, %18 : vector<32x32xi32>
    %70 = arith.andi %69, %6 : vector<32x32xi1>
    %cst_20 = arith.constant 2.000000e-01 : f32
    %cst_21 = arith.constant 0.000000e+00 : f32
    %71 = vector.broadcast %cst_20 : f32 to vector<32x32xf32>
    %72 = vector.broadcast %cst_21 : f32 to vector<32x32xf32>
    %73 = arith.select %70, %71, %72 : vector<32x32xi1>, vector<32x32xf32>
    %74 = arith.addf %29, %40 : vector<32x32xf32>
    %75 = arith.addf %51, %62 : vector<32x32xf32>
    %76 = arith.addf %74, %75 : vector<32x32xf32>
    %77 = arith.addf %76, %73 : vector<32x32xf32>
    %78 = arith.subf %11, %77 : vector<32x32xf32>
    %cst_22 = arith.constant 6.250000e-02 : f32
    %79 = vector.broadcast %cst_22 : f32 to vector<32x32xf32>
    %80 = arith.mulf %8, %79 : vector<32x32xf32>
    %81 = arith.subf %11, %80 : vector<32x32xf32>
    %82 = tpu.iota {dimensions = array<i32: 1>} : vector<1x16xi32>
    %83 = tpu.iota {dimensions = array<i32: 1>} : vector<2x16xi32>
    %84 = tpu.iota {dimensions = array<i32: 0>} : vector<32x1xi32>
    %85 = tpu.iota {dimensions = array<i32: 1>} : vector<1x8xi32>
    %86 = tpu.iota {dimensions = array<i32: 0>} : vector<16x4xi32>
    %c2_i32_23 = arith.constant 2 : i32
    %87 = vector.broadcast %c2_i32_23 : i32 to vector<16x4xi32>
    %88 = arith.shrsi %86, %87 : vector<16x4xi32>
    %89 = tpu.iota {dimensions = array<i32: 1>} : vector<16x4xi32>
    %90 = arith.cmpi eq, %88, %89 : vector<16x4xi32>
    %91 = arith.extui %90 : vector<16x4xi1> to vector<16x4xi32>
    %92 = arith.sitofp %91 : vector<16x4xi32> to vector<16x4xf32>
    %cst_24 = arith.constant 1.000000e+00 : f32
    %93 = vector.broadcast %cst_24 : f32 to vector<1x32xf32>
    %c0 = arith.constant 0 : index
    %c0_25 = arith.constant 0 : index
    %94 = vector.load %arg0[%c0, %c0_25] : memref<32x40xf32, #tpu.memory_space<vmem>>, vector<32x40xf32>
    %95 = vector.extract_strided_slice %94 {offsets = [0, 0], sizes = [32, 24], strides = [1, 1]} : vector<32x40xf32> to vector<32x24xf32>
    %96 = vector.extract_strided_slice %94 {offsets = [0, 24], sizes = [32, 4], strides = [1, 1]} : vector<32x40xf32> to vector<32x4xf32>
    %97 = vector.extract_strided_slice %94 {offsets = [0, 28], sizes = [32, 4], strides = [1, 1]} : vector<32x40xf32> to vector<32x4xf32>
    %98 = vector.extract_strided_slice %94 {offsets = [0, 32], sizes = [32, 4], strides = [1, 1]} : vector<32x40xf32> to vector<32x4xf32>
    %99 = vector.extract_strided_slice %94 {offsets = [0, 36], sizes = [32, 4], strides = [1, 1]} : vector<32x40xf32> to vector<32x4xf32>
    %c0_26 = arith.constant 0 : index
    %c0_27 = arith.constant 0 : index
    %100 = vector.load %arg1[%c0_26, %c0_27] : memref<28x32xf32, #tpu.memory_space<vmem>>, vector<24x32xf32>
    %c24 = arith.constant 24 : index
    %c0_28 = arith.constant 0 : index
    %101 = vector.load %arg1[%c24, %c0_28] : memref<28x32xf32, #tpu.memory_space<vmem>>, vector<4x32xf32>
    %c2 = arith.constant 2 : index
    %c0_29 = arith.constant 0 : index
    %102 = vector.load %arg4[%c2, %c0_29] : memref<3x128xf32, #tpu.memory_space<vmem>>, vector<1x32xf32>
    %c2_30 = arith.constant 2 : index
    %c32 = arith.constant 32 : index
    %103 = vector.load %arg4[%c2_30, %c32] : memref<3x128xf32, #tpu.memory_space<vmem>>, vector<1x32xf32>
    %c2_31 = arith.constant 2 : index
    %c64 = arith.constant 64 : index
    %104 = vector.load %arg4[%c2_31, %c64] : memref<3x128xf32, #tpu.memory_space<vmem>>, vector<1x4xf32>
    %cst_32 = arith.constant dense<0.000000e+00> : vector<32x32xf32>
    %105 = tpu.matmul %95, %100, %cst_32 {dimension_numbers = #tpu.dot_dimension_numbers<[1], [0], [0], [1], [0, 0, 1, 1], [], []>} : vector<32x24xf32>, vector<24x32xf32>, vector<32x32xf32> -> vector<32x32xf32>
    %c0_33 = arith.constant 0 : index
    %c0_34 = arith.constant 0 : index
    %c0_35 = arith.constant 0 : index
    %106 = vector.load %arg2[%c0_33, %c0_34, %c0_35] : memref<2x32x192xf32, #tpu.memory_space<vmem>>, vector<1x32x192xf32>
    %107 = vector.shape_cast %106 : vector<1x32x192xf32> to vector<32x192xf32>
    %108 = vector.extract_strided_slice %107 {offsets = [0, 0], sizes = [32, 96], strides = [1, 1]} : vector<32x192xf32> to vector<32x96xf32>
    %109 = vector.extract_strided_slice %107 {offsets = [0, 96], sizes = [32, 32], strides = [1, 1]} : vector<32x192xf32> to vector<32x32xf32>
    %110 = vector.extract_strided_slice %107 {offsets = [0, 128], sizes = [32, 64], strides = [1, 1]} : vector<32x192xf32> to vector<32x64xf32>
    %c0_36 = arith.constant 0 : index
    %c0_37 = arith.constant 0 : index
    %c0_38 = arith.constant 0 : index
    %111 = vector.load %arg3[%c0_36, %c0_37, %c0_38] : memref<2x64x32xf32, #tpu.memory_space<vmem>>, vector<1x64x32xf32>
    %112 = vector.shape_cast %111 : vector<1x64x32xf32> to vector<64x32xf32>
    %c0_39 = arith.constant 0 : index
    %c0_40 = arith.constant 0 : index
    %113 = vector.load %arg4[%c0_39, %c0_40] : memref<3x128xf32, #tpu.memory_space<vmem>>, vector<1x96xf32>
    %c0_41 = arith.constant 0 : index
    %c96 = arith.constant 96 : index
    %114 = vector.load %arg4[%c0_41, %c96] : memref<3x128xf32, #tpu.memory_space<vmem>>, vector<1x32xf32>
    %cst_42 = arith.constant dense<0.000000e+00> : vector<32x96xf32>
    %115 = tpu.matmul %105, %108, %cst_42 {dimension_numbers = #tpu.dot_dimension_numbers<[1], [0], [0], [1], [0, 0, 1, 1], [], []>} : vector<32x32xf32>, vector<32x96xf32>, vector<32x96xf32> -> vector<32x96xf32>
    %116 = vector.broadcast %113 : vector<1x96xf32> to vector<32x96xf32>
    %117 = arith.addf %115, %116 : vector<32x96xf32>
    %118 = vector.extract_strided_slice %117 {offsets = [0, 0], sizes = [32, 32], strides = [1, 1]} : vector<32x96xf32> to vector<32x32xf32>
    %119 = vector.extract_strided_slice %117 {offsets = [0, 32], sizes = [32, 32], strides = [1, 1]} : vector<32x96xf32> to vector<32x32xf32>
    %120 = vector.extract_strided_slice %117 {offsets = [0, 64], sizes = [32, 32], strides = [1, 1]} : vector<32x96xf32> to vector<32x32xf32>
    %121 = vector.extract_strided_slice %118 {offsets = [0, 0], sizes = [16, 32], strides = [1, 1]} : vector<32x32xf32> to vector<16x32xf32>
    %122 = vector.extract_strided_slice %118 {offsets = [0, 0], sizes = [16, 32], strides = [1, 1]} : vector<32x32xf32> to vector<16x32xf32>
    %123 = vector.extract_strided_slice %118 {offsets = [16, 0], sizes = [16, 32], strides = [1, 1]} : vector<32x32xf32> to vector<16x32xf32>
    %124 = vector.extract_strided_slice %118 {offsets = [16, 0], sizes = [16, 32], strides = [1, 1]} : vector<32x32xf32> to vector<16x32xf32>
    %125 = tpu.concatenate %121, %122, %123, %124 in 0 : vector<16x32xf32>, vector<16x32xf32>, vector<16x32xf32>, vector<16x32xf32> -> vector<64x32xf32>
    %cst_43 = arith.constant dense<0.000000e+00> : vector<32x64xf32>
    %126 = tpu.matmul %119, %125, %cst_43 {dimension_numbers = #tpu.dot_dimension_numbers<[1], [1], [0], [0], [0, 0, 1, 0], [], []>} : vector<32x32xf32>, vector<64x32xf32>, vector<32x64xf32> -> vector<32x64xf32>
    %127 = vector.extract_strided_slice %126 {offsets = [0, 0], sizes = [1, 16], strides = [1, 1]} : vector<32x64xf32> to vector<1x16xf32>
    %128 = vector.extract_strided_slice %126 {offsets = [1, 1], sizes = [1, 16], strides = [1, 1]} : vector<32x64xf32> to vector<1x16xf32>
    %129 = vector.extract_strided_slice %126 {offsets = [2, 2], sizes = [1, 16], strides = [1, 1]} : vector<32x64xf32> to vector<1x16xf32>
    %130 = vector.extract_strided_slice %126 {offsets = [3, 3], sizes = [1, 16], strides = [1, 1]} : vector<32x64xf32> to vector<1x16xf32>
    %131 = vector.extract_strided_slice %126 {offsets = [4, 4], sizes = [1, 16], strides = [1, 1]} : vector<32x64xf32> to vector<1x16xf32>
    %132 = vector.extract_strided_slice %126 {offsets = [5, 5], sizes = [1, 16], strides = [1, 1]} : vector<32x64xf32> to vector<1x16xf32>
    %133 = vector.extract_strided_slice %126 {offsets = [6, 6], sizes = [1, 16], strides = [1, 1]} : vector<32x64xf32> to vector<1x16xf32>
    %134 = vector.extract_strided_slice %126 {offsets = [7, 7], sizes = [1, 16], strides = [1, 1]} : vector<32x64xf32> to vector<1x16xf32>
    %135 = vector.extract_strided_slice %126 {offsets = [8, 8], sizes = [1, 16], strides = [1, 1]} : vector<32x64xf32> to vector<1x16xf32>
    %136 = vector.extract_strided_slice %126 {offsets = [9, 9], sizes = [1, 16], strides = [1, 1]} : vector<32x64xf32> to vector<1x16xf32>
    %137 = vector.extract_strided_slice %126 {offsets = [10, 10], sizes = [1, 16], strides = [1, 1]} : vector<32x64xf32> to vector<1x16xf32>
    %138 = vector.extract_strided_slice %126 {offsets = [11, 11], sizes = [1, 16], strides = [1, 1]} : vector<32x64xf32> to vector<1x16xf32>
    %139 = vector.extract_strided_slice %126 {offsets = [12, 12], sizes = [1, 16], strides = [1, 1]} : vector<32x64xf32> to vector<1x16xf32>
    %140 = vector.extract_strided_slice %126 {offsets = [13, 13], sizes = [1, 16], strides = [1, 1]} : vector<32x64xf32> to vector<1x16xf32>
    %141 = vector.extract_strided_slice %126 {offsets = [14, 14], sizes = [1, 16], strides = [1, 1]} : vector<32x64xf32> to vector<1x16xf32>
    %142 = vector.extract_strided_slice %126 {offsets = [15, 15], sizes = [1, 16], strides = [1, 1]} : vector<32x64xf32> to vector<1x16xf32>
    %143 = arith.addf %127, %128 : vector<1x16xf32>
    %144 = arith.addf %129, %130 : vector<1x16xf32>
    %145 = arith.addf %131, %132 : vector<1x16xf32>
    %146 = arith.addf %133, %134 : vector<1x16xf32>
    %147 = arith.addf %135, %136 : vector<1x16xf32>
    %148 = arith.addf %137, %138 : vector<1x16xf32>
    %149 = arith.addf %139, %140 : vector<1x16xf32>
    %150 = arith.addf %141, %142 : vector<1x16xf32>
    %151 = arith.addf %143, %144 : vector<1x16xf32>
    %152 = arith.addf %145, %146 : vector<1x16xf32>
    %153 = arith.addf %147, %148 : vector<1x16xf32>
    %154 = arith.addf %149, %150 : vector<1x16xf32>
    %155 = arith.addf %151, %152 : vector<1x16xf32>
    %156 = arith.addf %153, %154 : vector<1x16xf32>
    %157 = arith.addf %155, %156 : vector<1x16xf32>
    %cst_44 = arith.constant 3.125000e-02 : f32
    %158 = vector.broadcast %cst_44 : f32 to vector<1x16xf32>
    %159 = arith.mulf %157, %158 : vector<1x16xf32>
    %160 = vector.extract_strided_slice %126 {offsets = [16, 32], sizes = [1, 16], strides = [1, 1]} : vector<32x64xf32> to vector<1x16xf32>
    %161 = vector.extract_strided_slice %126 {offsets = [17, 33], sizes = [1, 16], strides = [1, 1]} : vector<32x64xf32> to vector<1x16xf32>
    %162 = vector.extract_strided_slice %126 {offsets = [18, 34], sizes = [1, 16], strides = [1, 1]} : vector<32x64xf32> to vector<1x16xf32>
    %163 = vector.extract_strided_slice %126 {offsets = [19, 35], sizes = [1, 16], strides = [1, 1]} : vector<32x64xf32> to vector<1x16xf32>
    %164 = vector.extract_strided_slice %126 {offsets = [20, 36], sizes = [1, 16], strides = [1, 1]} : vector<32x64xf32> to vector<1x16xf32>
    %165 = vector.extract_strided_slice %126 {offsets = [21, 37], sizes = [1, 16], strides = [1, 1]} : vector<32x64xf32> to vector<1x16xf32>
    %166 = vector.extract_strided_slice %126 {offsets = [22, 38], sizes = [1, 16], strides = [1, 1]} : vector<32x64xf32> to vector<1x16xf32>
    %167 = vector.extract_strided_slice %126 {offsets = [23, 39], sizes = [1, 16], strides = [1, 1]} : vector<32x64xf32> to vector<1x16xf32>
    %168 = vector.extract_strided_slice %126 {offsets = [24, 40], sizes = [1, 16], strides = [1, 1]} : vector<32x64xf32> to vector<1x16xf32>
    %169 = vector.extract_strided_slice %126 {offsets = [25, 41], sizes = [1, 16], strides = [1, 1]} : vector<32x64xf32> to vector<1x16xf32>
    %170 = vector.extract_strided_slice %126 {offsets = [26, 42], sizes = [1, 16], strides = [1, 1]} : vector<32x64xf32> to vector<1x16xf32>
    %171 = vector.extract_strided_slice %126 {offsets = [27, 43], sizes = [1, 16], strides = [1, 1]} : vector<32x64xf32> to vector<1x16xf32>
    %172 = vector.extract_strided_slice %126 {offsets = [28, 44], sizes = [1, 16], strides = [1, 1]} : vector<32x64xf32> to vector<1x16xf32>
    %173 = vector.extract_strided_slice %126 {offsets = [29, 45], sizes = [1, 16], strides = [1, 1]} : vector<32x64xf32> to vector<1x16xf32>
    %174 = vector.extract_strided_slice %126 {offsets = [30, 46], sizes = [1, 16], strides = [1, 1]} : vector<32x64xf32> to vector<1x16xf32>
    %175 = vector.extract_strided_slice %126 {offsets = [31, 47], sizes = [1, 16], strides = [1, 1]} : vector<32x64xf32> to vector<1x16xf32>
    %176 = arith.addf %160, %161 : vector<1x16xf32>
    %177 = arith.addf %162, %163 : vector<1x16xf32>
    %178 = arith.addf %164, %165 : vector<1x16xf32>
    %179 = arith.addf %166, %167 : vector<1x16xf32>
    %180 = arith.addf %168, %169 : vector<1x16xf32>
    %181 = arith.addf %170, %171 : vector<1x16xf32>
    %182 = arith.addf %172, %173 : vector<1x16xf32>
    %183 = arith.addf %174, %175 : vector<1x16xf32>
    %184 = arith.addf %176, %177 : vector<1x16xf32>
    %185 = arith.addf %178, %179 : vector<1x16xf32>
    %186 = arith.addf %180, %181 : vector<1x16xf32>
    %187 = arith.addf %182, %183 : vector<1x16xf32>
    %188 = arith.addf %184, %185 : vector<1x16xf32>
    %189 = arith.addf %186, %187 : vector<1x16xf32>
    %190 = arith.addf %188, %189 : vector<1x16xf32>
    %cst_45 = arith.constant 3.125000e-02 : f32
    %191 = vector.broadcast %cst_45 : f32 to vector<1x16xf32>
    %192 = arith.mulf %190, %191 : vector<1x16xf32>
    %193 = tpu.concatenate %159, %192 in 0 : vector<1x16xf32>, vector<1x16xf32> -> vector<2x16xf32>
    %194 = arith.addf %159, %192 : vector<1x16xf32>
    %cst_46 = arith.constant 5.000000e-01 : f32
    %195 = vector.broadcast %cst_46 : f32 to vector<1x16xf32>
    %196 = arith.mulf %194, %195 : vector<1x16xf32>
    %197 = vector.shape_cast %196 : vector<1x16xf32> to vector<1x1x16xf32>
    %cst_47 = arith.constant dense<0xFF800000> : vector<1xf32>
    %198 = vector.multi_reduction <maximumf>, %197, %cst_47 [1, 2] : vector<1x1x16xf32> to vector<1xf32>
    %199 = vector.shape_cast %198 : vector<1xf32> to vector<1x1x1xf32>
    %200 = vector.extract %199[0, 0, 0] : f32 from vector<1x1x1xf32>
    %201 = vector.broadcast %200 : f32 to vector<1x16xf32>
    %202 = arith.cmpf oeq, %196, %201 : vector<1x16xf32>
    %c16_i32 = arith.constant 16 : i32
    %203 = vector.broadcast %c16_i32 : i32 to vector<1x16xi32>
    %204 = arith.select %202, %82, %203 : vector<1x16xi1>, vector<1x16xi32>
    %205 = vector.shape_cast %204 : vector<1x16xi32> to vector<1x1x16xi32>
    %cst_48 = arith.constant dense<2147483647> : vector<1xi32>
    %206 = vector.multi_reduction <minsi>, %205, %cst_48 [1, 2] : vector<1x1x16xi32> to vector<1xi32>
    %207 = vector.shape_cast %206 : vector<1xi32> to vector<1x1x1xi32>
    %208 = vector.extract %207[0, 0, 0] : i32 from vector<1x1x1xi32>
    %209 = vector.broadcast %208 : i32 to vector<1x16xi32>
    %210 = arith.cmpi eq, %82, %209 : vector<1x16xi32>
    %cst_49 = arith.constant 0xFF800000 : f32
    %211 = vector.broadcast %cst_49 : f32 to vector<1x16xf32>
    %212 = arith.select %210, %211, %196 : vector<1x16xi1>, vector<1x16xf32>
    %213 = vector.shape_cast %212 : vector<1x16xf32> to vector<1x1x16xf32>
    %cst_50 = arith.constant dense<0xFF800000> : vector<1xf32>
    %214 = vector.multi_reduction <maximumf>, %213, %cst_50 [1, 2] : vector<1x1x16xf32> to vector<1xf32>
    %215 = vector.shape_cast %214 : vector<1xf32> to vector<1x1x1xf32>
    %216 = vector.extract %215[0, 0, 0] : f32 from vector<1x1x1xf32>
    %217 = vector.broadcast %216 : f32 to vector<1x16xf32>
    %218 = arith.cmpf oeq, %212, %217 : vector<1x16xf32>
    %c16_i32_51 = arith.constant 16 : i32
    %219 = vector.broadcast %c16_i32_51 : i32 to vector<1x16xi32>
    %220 = arith.select %218, %82, %219 : vector<1x16xi1>, vector<1x16xi32>
    %221 = vector.shape_cast %220 : vector<1x16xi32> to vector<1x1x16xi32>
    %cst_52 = arith.constant dense<2147483647> : vector<1xi32>
    %222 = vector.multi_reduction <minsi>, %221, %cst_52 [1, 2] : vector<1x1x16xi32> to vector<1xi32>
    %223 = vector.shape_cast %222 : vector<1xi32> to vector<1x1x1xi32>
    %224 = vector.extract %223[0, 0, 0] : i32 from vector<1x1x1xi32>
    %225 = vector.broadcast %208 : i32 to vector<2x16xi32>
    %226 = arith.cmpi eq, %83, %225 : vector<2x16xi32>
    %cst_53 = arith.constant 0.000000e+00 : f32
    %227 = vector.broadcast %cst_53 : f32 to vector<2x16xf32>
    %228 = arith.select %226, %193, %227 : vector<2x16xi1>, vector<2x16xf32>
    %cst_54 = arith.constant dense<0.000000e+00> : vector<2xf32>
    %229 = vector.multi_reduction <add>, %228, %cst_54 [1] : vector<2x16xf32> to vector<2xf32>
    %230 = vector.shape_cast %229 : vector<2xf32> to vector<2x1xf32>
    %231 = vector.broadcast %224 : i32 to vector<2x16xi32>
    %232 = arith.cmpi eq, %83, %231 : vector<2x16xi32>
    %cst_55 = arith.constant 0.000000e+00 : f32
    %233 = vector.broadcast %cst_55 : f32 to vector<2x16xf32>
    %234 = arith.select %232, %193, %233 : vector<2x16xi1>, vector<2x16xf32>
    %cst_56 = arith.constant dense<0.000000e+00> : vector<2xf32>
    %235 = vector.multi_reduction <add>, %234, %cst_56 [1] : vector<2x16xf32> to vector<2xf32>
    %236 = vector.shape_cast %235 : vector<2xf32> to vector<2x1xf32>
    %237 = arith.maximumf %230, %236 : vector<2x1xf32>
    %238 = arith.subf %230, %237 : vector<2x1xf32>
    %239 = math.exp %238 : vector<2x1xf32>
    %240 = arith.subf %236, %237 : vector<2x1xf32>
    %241 = math.exp %240 : vector<2x1xf32>
    %242 = arith.addf %239, %241 : vector<2x1xf32>
    %243 = arith.divf %239, %242 : vector<2x1xf32>
    %244 = arith.divf %241, %242 : vector<2x1xf32>
    %c4_i32_57 = arith.constant 4 : i32
    %245 = vector.broadcast %c4_i32_57 : i32 to vector<32x1xi32>
    %246 = arith.shrsi %84, %245 : vector<32x1xi32>
    %c0_i32_58 = arith.constant 0 : i32
    %247 = vector.broadcast %c0_i32_58 : i32 to vector<32x1xi32>
    %248 = arith.cmpi eq, %246, %247 : vector<32x1xi32>
    %249 = vector.extract_strided_slice %243 {offsets = [0, 0], sizes = [1, 1], strides = [1, 1]} : vector<2x1xf32> to vector<1x1xf32>
    %cst_59 = arith.constant 0.000000e+00 : f32
    %250 = vector.shape_cast %249 : vector<1x1xf32> to vector<1x1xf32>
    %251 = vector.broadcast %250 : vector<1x1xf32> to vector<32x1xf32>
    %252 = vector.broadcast %cst_59 : f32 to vector<32x1xf32>
    %253 = arith.select %248, %251, %252 : vector<32x1xi1>, vector<32x1xf32>
    %c4_i32_60 = arith.constant 4 : i32
    %254 = vector.broadcast %c4_i32_60 : i32 to vector<32x1xi32>
    %255 = arith.shrsi %84, %254 : vector<32x1xi32>
    %c1_i32_61 = arith.constant 1 : i32
    %256 = vector.broadcast %c1_i32_61 : i32 to vector<32x1xi32>
    %257 = arith.cmpi eq, %255, %256 : vector<32x1xi32>
    %258 = vector.extract_strided_slice %243 {offsets = [1, 0], sizes = [1, 1], strides = [1, 1]} : vector<2x1xf32> to vector<1x1xf32>
    %cst_62 = arith.constant 0.000000e+00 : f32
    %259 = vector.shape_cast %258 : vector<1x1xf32> to vector<1x1xf32>
    %260 = vector.broadcast %259 : vector<1x1xf32> to vector<32x1xf32>
    %261 = vector.broadcast %cst_62 : f32 to vector<32x1xf32>
    %262 = arith.select %257, %260, %261 : vector<32x1xi1>, vector<32x1xf32>
    %263 = arith.addf %253, %262 : vector<32x1xf32>
    %264 = vector.broadcast %208 : i32 to vector<32x32xi32>
    %265 = arith.cmpi eq, %14, %264 : vector<32x32xi32>
    %266 = arith.extui %265 : vector<32x32xi1> to vector<32x32xi32>
    %267 = arith.sitofp %266 : vector<32x32xi32> to vector<32x32xf32>
    %268 = vector.broadcast %263 : vector<32x1xf32> to vector<32x32xf32>
    %269 = arith.mulf %268, %267 : vector<32x32xf32>
    %c4_i32_63 = arith.constant 4 : i32
    %270 = vector.broadcast %c4_i32_63 : i32 to vector<32x1xi32>
    %271 = arith.shrsi %84, %270 : vector<32x1xi32>
    %c0_i32_64 = arith.constant 0 : i32
    %272 = vector.broadcast %c0_i32_64 : i32 to vector<32x1xi32>
    %273 = arith.cmpi eq, %271, %272 : vector<32x1xi32>
    %274 = vector.extract_strided_slice %244 {offsets = [0, 0], sizes = [1, 1], strides = [1, 1]} : vector<2x1xf32> to vector<1x1xf32>
    %cst_65 = arith.constant 0.000000e+00 : f32
    %275 = vector.shape_cast %274 : vector<1x1xf32> to vector<1x1xf32>
    %276 = vector.broadcast %275 : vector<1x1xf32> to vector<32x1xf32>
    %277 = vector.broadcast %cst_65 : f32 to vector<32x1xf32>
    %278 = arith.select %273, %276, %277 : vector<32x1xi1>, vector<32x1xf32>
    %c4_i32_66 = arith.constant 4 : i32
    %279 = vector.broadcast %c4_i32_66 : i32 to vector<32x1xi32>
    %280 = arith.shrsi %84, %279 : vector<32x1xi32>
    %c1_i32_67 = arith.constant 1 : i32
    %281 = vector.broadcast %c1_i32_67 : i32 to vector<32x1xi32>
    %282 = arith.cmpi eq, %280, %281 : vector<32x1xi32>
    %283 = vector.extract_strided_slice %244 {offsets = [1, 0], sizes = [1, 1], strides = [1, 1]} : vector<2x1xf32> to vector<1x1xf32>
    %cst_68 = arith.constant 0.000000e+00 : f32
    %284 = vector.shape_cast %283 : vector<1x1xf32> to vector<1x1xf32>
    %285 = vector.broadcast %284 : vector<1x1xf32> to vector<32x1xf32>
    %286 = vector.broadcast %cst_68 : f32 to vector<32x1xf32>
    %287 = arith.select %282, %285, %286 : vector<32x1xi1>, vector<32x1xf32>
    %288 = arith.addf %278, %287 : vector<32x1xf32>
    %289 = vector.broadcast %224 : i32 to vector<32x32xi32>
    %290 = arith.cmpi eq, %14, %289 : vector<32x32xi32>
    %291 = arith.extui %290 : vector<32x32xi1> to vector<32x32xi32>
    %292 = arith.sitofp %291 : vector<32x32xi32> to vector<32x32xf32>
    %293 = vector.broadcast %288 : vector<32x1xf32> to vector<32x32xf32>
    %294 = arith.mulf %293, %292 : vector<32x32xf32>
    %295 = arith.addf %269, %294 : vector<32x32xf32>
    %296 = arith.mulf %295, %8 : vector<32x32xf32>
    %cst_69 = arith.constant dense<0.000000e+00> : vector<32x32xf32>
    %297 = tpu.matmul %296, %120, %cst_69 {dimension_numbers = #tpu.dot_dimension_numbers<[1], [0], [0], [1], [0, 0, 1, 1], [], []>} : vector<32x32xf32>, vector<32x32xf32>, vector<32x32xf32> -> vector<32x32xf32>
    %cst_70 = arith.constant dense<0.000000e+00> : vector<32x32xf32>
    %298 = tpu.matmul %297, %109, %cst_70 {dimension_numbers = #tpu.dot_dimension_numbers<[1], [0], [0], [1], [0, 0, 1, 1], [], []>} : vector<32x32xf32>, vector<32x32xf32>, vector<32x32xf32> -> vector<32x32xf32>
    %299 = arith.addf %105, %298 : vector<32x32xf32>
    %300 = vector.broadcast %114 : vector<1x32xf32> to vector<32x32xf32>
    %301 = arith.addf %299, %300 : vector<32x32xf32>
    %cst_71 = arith.constant dense<0.000000e+00> : vector<32x32xf32>
    %302 = tpu.matmul %78, %301, %cst_71 {dimension_numbers = #tpu.dot_dimension_numbers<[1], [0], [0], [1], [0, 0, 1, 1], [], []>} : vector<32x32xf32>, vector<32x32xf32>, vector<32x32xf32> -> vector<32x32xf32>
    %cst_72 = arith.constant dense<0.000000e+00> : vector<32x64xf32>
    %303 = tpu.matmul %302, %110, %cst_72 {dimension_numbers = #tpu.dot_dimension_numbers<[1], [0], [0], [1], [0, 0, 1, 1], [], []>} : vector<32x32xf32>, vector<32x64xf32>, vector<32x64xf32> -> vector<32x64xf32>
    %cst_73 = arith.constant 0.000000e+00 : f32
    %304 = vector.broadcast %cst_73 : f32 to vector<32x64xf32>
    %305 = arith.maximumf %303, %304 : vector<32x64xf32>
    %cst_74 = arith.constant dense<0.000000e+00> : vector<32x32xf32>
    %306 = tpu.matmul %305, %112, %cst_74 {dimension_numbers = #tpu.dot_dimension_numbers<[1], [0], [0], [1], [0, 0, 1, 1], [], []>} : vector<32x64xf32>, vector<64x32xf32>, vector<32x32xf32> -> vector<32x32xf32>
    %307 = arith.addf %302, %306 : vector<32x32xf32>
    %cst_75 = arith.constant dense<0.000000e+00> : vector<32x32xf32>
    %308 = tpu.matmul %78, %307, %cst_75 {dimension_numbers = #tpu.dot_dimension_numbers<[1], [0], [0], [1], [0, 0, 1, 1], [], []>} : vector<32x32xf32>, vector<32x32xf32>, vector<32x32xf32> -> vector<32x32xf32>
    %c1 = arith.constant 1 : index
    %c0_76 = arith.constant 0 : index
    %c0_77 = arith.constant 0 : index
    %309 = vector.load %arg2[%c1, %c0_76, %c0_77] : memref<2x32x192xf32, #tpu.memory_space<vmem>>, vector<1x32x192xf32>
    %310 = vector.shape_cast %309 : vector<1x32x192xf32> to vector<32x192xf32>
    %311 = vector.extract_strided_slice %310 {offsets = [0, 0], sizes = [32, 96], strides = [1, 1]} : vector<32x192xf32> to vector<32x96xf32>
    %312 = vector.extract_strided_slice %310 {offsets = [0, 96], sizes = [32, 32], strides = [1, 1]} : vector<32x192xf32> to vector<32x32xf32>
    %313 = vector.extract_strided_slice %310 {offsets = [0, 128], sizes = [32, 64], strides = [1, 1]} : vector<32x192xf32> to vector<32x64xf32>
    %c1_78 = arith.constant 1 : index
    %c0_79 = arith.constant 0 : index
    %c0_80 = arith.constant 0 : index
    %314 = vector.load %arg3[%c1_78, %c0_79, %c0_80] : memref<2x64x32xf32, #tpu.memory_space<vmem>>, vector<1x64x32xf32>
    %315 = vector.shape_cast %314 : vector<1x64x32xf32> to vector<64x32xf32>
    %c1_81 = arith.constant 1 : index
    %c0_82 = arith.constant 0 : index
    %316 = vector.load %arg4[%c1_81, %c0_82] : memref<3x128xf32, #tpu.memory_space<vmem>>, vector<1x96xf32>
    %c1_83 = arith.constant 1 : index
    %c96_84 = arith.constant 96 : index
    %317 = vector.load %arg4[%c1_83, %c96_84] : memref<3x128xf32, #tpu.memory_space<vmem>>, vector<1x32xf32>
    %cst_85 = arith.constant dense<0.000000e+00> : vector<32x96xf32>
    %318 = tpu.matmul %308, %311, %cst_85 {dimension_numbers = #tpu.dot_dimension_numbers<[1], [0], [0], [1], [0, 0, 1, 1], [], []>} : vector<32x32xf32>, vector<32x96xf32>, vector<32x96xf32> -> vector<32x96xf32>
    %319 = vector.broadcast %316 : vector<1x96xf32> to vector<32x96xf32>
    %320 = arith.addf %318, %319 : vector<32x96xf32>
    %321 = vector.extract_strided_slice %320 {offsets = [0, 0], sizes = [32, 32], strides = [1, 1]} : vector<32x96xf32> to vector<32x32xf32>
    %322 = vector.extract_strided_slice %320 {offsets = [0, 32], sizes = [32, 32], strides = [1, 1]} : vector<32x96xf32> to vector<32x32xf32>
    %323 = vector.extract_strided_slice %320 {offsets = [0, 64], sizes = [32, 32], strides = [1, 1]} : vector<32x96xf32> to vector<32x32xf32>
    %324 = vector.extract_strided_slice %321 {offsets = [0, 0], sizes = [16, 32], strides = [1, 1]} : vector<32x32xf32> to vector<16x32xf32>
    %325 = vector.extract_strided_slice %321 {offsets = [0, 0], sizes = [16, 32], strides = [1, 1]} : vector<32x32xf32> to vector<16x32xf32>
    %326 = vector.extract_strided_slice %321 {offsets = [16, 0], sizes = [16, 32], strides = [1, 1]} : vector<32x32xf32> to vector<16x32xf32>
    %327 = vector.extract_strided_slice %321 {offsets = [16, 0], sizes = [16, 32], strides = [1, 1]} : vector<32x32xf32> to vector<16x32xf32>
    %328 = tpu.concatenate %324, %325, %326, %327 in 0 : vector<16x32xf32>, vector<16x32xf32>, vector<16x32xf32>, vector<16x32xf32> -> vector<64x32xf32>
    %cst_86 = arith.constant dense<0.000000e+00> : vector<32x64xf32>
    %329 = tpu.matmul %322, %328, %cst_86 {dimension_numbers = #tpu.dot_dimension_numbers<[1], [1], [0], [0], [0, 0, 1, 0], [], []>} : vector<32x32xf32>, vector<64x32xf32>, vector<32x64xf32> -> vector<32x64xf32>
    %330 = vector.extract_strided_slice %329 {offsets = [0, 0], sizes = [1, 16], strides = [1, 1]} : vector<32x64xf32> to vector<1x16xf32>
    %331 = vector.extract_strided_slice %329 {offsets = [1, 1], sizes = [1, 16], strides = [1, 1]} : vector<32x64xf32> to vector<1x16xf32>
    %332 = vector.extract_strided_slice %329 {offsets = [2, 2], sizes = [1, 16], strides = [1, 1]} : vector<32x64xf32> to vector<1x16xf32>
    %333 = vector.extract_strided_slice %329 {offsets = [3, 3], sizes = [1, 16], strides = [1, 1]} : vector<32x64xf32> to vector<1x16xf32>
    %334 = vector.extract_strided_slice %329 {offsets = [4, 4], sizes = [1, 16], strides = [1, 1]} : vector<32x64xf32> to vector<1x16xf32>
    %335 = vector.extract_strided_slice %329 {offsets = [5, 5], sizes = [1, 16], strides = [1, 1]} : vector<32x64xf32> to vector<1x16xf32>
    %336 = vector.extract_strided_slice %329 {offsets = [6, 6], sizes = [1, 16], strides = [1, 1]} : vector<32x64xf32> to vector<1x16xf32>
    %337 = vector.extract_strided_slice %329 {offsets = [7, 7], sizes = [1, 16], strides = [1, 1]} : vector<32x64xf32> to vector<1x16xf32>
    %338 = vector.extract_strided_slice %329 {offsets = [8, 8], sizes = [1, 16], strides = [1, 1]} : vector<32x64xf32> to vector<1x16xf32>
    %339 = vector.extract_strided_slice %329 {offsets = [9, 9], sizes = [1, 16], strides = [1, 1]} : vector<32x64xf32> to vector<1x16xf32>
    %340 = vector.extract_strided_slice %329 {offsets = [10, 10], sizes = [1, 16], strides = [1, 1]} : vector<32x64xf32> to vector<1x16xf32>
    %341 = vector.extract_strided_slice %329 {offsets = [11, 11], sizes = [1, 16], strides = [1, 1]} : vector<32x64xf32> to vector<1x16xf32>
    %342 = vector.extract_strided_slice %329 {offsets = [12, 12], sizes = [1, 16], strides = [1, 1]} : vector<32x64xf32> to vector<1x16xf32>
    %343 = vector.extract_strided_slice %329 {offsets = [13, 13], sizes = [1, 16], strides = [1, 1]} : vector<32x64xf32> to vector<1x16xf32>
    %344 = vector.extract_strided_slice %329 {offsets = [14, 14], sizes = [1, 16], strides = [1, 1]} : vector<32x64xf32> to vector<1x16xf32>
    %345 = vector.extract_strided_slice %329 {offsets = [15, 15], sizes = [1, 16], strides = [1, 1]} : vector<32x64xf32> to vector<1x16xf32>
    %346 = arith.addf %330, %331 : vector<1x16xf32>
    %347 = arith.addf %332, %333 : vector<1x16xf32>
    %348 = arith.addf %334, %335 : vector<1x16xf32>
    %349 = arith.addf %336, %337 : vector<1x16xf32>
    %350 = arith.addf %338, %339 : vector<1x16xf32>
    %351 = arith.addf %340, %341 : vector<1x16xf32>
    %352 = arith.addf %342, %343 : vector<1x16xf32>
    %353 = arith.addf %344, %345 : vector<1x16xf32>
    %354 = arith.addf %346, %347 : vector<1x16xf32>
    %355 = arith.addf %348, %349 : vector<1x16xf32>
    %356 = arith.addf %350, %351 : vector<1x16xf32>
    %357 = arith.addf %352, %353 : vector<1x16xf32>
    %358 = arith.addf %354, %355 : vector<1x16xf32>
    %359 = arith.addf %356, %357 : vector<1x16xf32>
    %360 = arith.addf %358, %359 : vector<1x16xf32>
    %cst_87 = arith.constant 3.125000e-02 : f32
    %361 = vector.broadcast %cst_87 : f32 to vector<1x16xf32>
    %362 = arith.mulf %360, %361 : vector<1x16xf32>
    %363 = vector.extract_strided_slice %329 {offsets = [16, 32], sizes = [1, 16], strides = [1, 1]} : vector<32x64xf32> to vector<1x16xf32>
    %364 = vector.extract_strided_slice %329 {offsets = [17, 33], sizes = [1, 16], strides = [1, 1]} : vector<32x64xf32> to vector<1x16xf32>
    %365 = vector.extract_strided_slice %329 {offsets = [18, 34], sizes = [1, 16], strides = [1, 1]} : vector<32x64xf32> to vector<1x16xf32>
    %366 = vector.extract_strided_slice %329 {offsets = [19, 35], sizes = [1, 16], strides = [1, 1]} : vector<32x64xf32> to vector<1x16xf32>
    %367 = vector.extract_strided_slice %329 {offsets = [20, 36], sizes = [1, 16], strides = [1, 1]} : vector<32x64xf32> to vector<1x16xf32>
    %368 = vector.extract_strided_slice %329 {offsets = [21, 37], sizes = [1, 16], strides = [1, 1]} : vector<32x64xf32> to vector<1x16xf32>
    %369 = vector.extract_strided_slice %329 {offsets = [22, 38], sizes = [1, 16], strides = [1, 1]} : vector<32x64xf32> to vector<1x16xf32>
    %370 = vector.extract_strided_slice %329 {offsets = [23, 39], sizes = [1, 16], strides = [1, 1]} : vector<32x64xf32> to vector<1x16xf32>
    %371 = vector.extract_strided_slice %329 {offsets = [24, 40], sizes = [1, 16], strides = [1, 1]} : vector<32x64xf32> to vector<1x16xf32>
    %372 = vector.extract_strided_slice %329 {offsets = [25, 41], sizes = [1, 16], strides = [1, 1]} : vector<32x64xf32> to vector<1x16xf32>
    %373 = vector.extract_strided_slice %329 {offsets = [26, 42], sizes = [1, 16], strides = [1, 1]} : vector<32x64xf32> to vector<1x16xf32>
    %374 = vector.extract_strided_slice %329 {offsets = [27, 43], sizes = [1, 16], strides = [1, 1]} : vector<32x64xf32> to vector<1x16xf32>
    %375 = vector.extract_strided_slice %329 {offsets = [28, 44], sizes = [1, 16], strides = [1, 1]} : vector<32x64xf32> to vector<1x16xf32>
    %376 = vector.extract_strided_slice %329 {offsets = [29, 45], sizes = [1, 16], strides = [1, 1]} : vector<32x64xf32> to vector<1x16xf32>
    %377 = vector.extract_strided_slice %329 {offsets = [30, 46], sizes = [1, 16], strides = [1, 1]} : vector<32x64xf32> to vector<1x16xf32>
    %378 = vector.extract_strided_slice %329 {offsets = [31, 47], sizes = [1, 16], strides = [1, 1]} : vector<32x64xf32> to vector<1x16xf32>
    %379 = arith.addf %363, %364 : vector<1x16xf32>
    %380 = arith.addf %365, %366 : vector<1x16xf32>
    %381 = arith.addf %367, %368 : vector<1x16xf32>
    %382 = arith.addf %369, %370 : vector<1x16xf32>
    %383 = arith.addf %371, %372 : vector<1x16xf32>
    %384 = arith.addf %373, %374 : vector<1x16xf32>
    %385 = arith.addf %375, %376 : vector<1x16xf32>
    %386 = arith.addf %377, %378 : vector<1x16xf32>
    %387 = arith.addf %379, %380 : vector<1x16xf32>
    %388 = arith.addf %381, %382 : vector<1x16xf32>
    %389 = arith.addf %383, %384 : vector<1x16xf32>
    %390 = arith.addf %385, %386 : vector<1x16xf32>
    %391 = arith.addf %387, %388 : vector<1x16xf32>
    %392 = arith.addf %389, %390 : vector<1x16xf32>
    %393 = arith.addf %391, %392 : vector<1x16xf32>
    %cst_88 = arith.constant 3.125000e-02 : f32
    %394 = vector.broadcast %cst_88 : f32 to vector<1x16xf32>
    %395 = arith.mulf %393, %394 : vector<1x16xf32>
    %396 = tpu.concatenate %362, %395 in 0 : vector<1x16xf32>, vector<1x16xf32> -> vector<2x16xf32>
    %397 = arith.addf %362, %395 : vector<1x16xf32>
    %cst_89 = arith.constant 5.000000e-01 : f32
    %398 = vector.broadcast %cst_89 : f32 to vector<1x16xf32>
    %399 = arith.mulf %397, %398 : vector<1x16xf32>
    %400 = vector.shape_cast %399 : vector<1x16xf32> to vector<1x1x16xf32>
    %cst_90 = arith.constant dense<0xFF800000> : vector<1xf32>
    %401 = vector.multi_reduction <maximumf>, %400, %cst_90 [1, 2] : vector<1x1x16xf32> to vector<1xf32>
    %402 = vector.shape_cast %401 : vector<1xf32> to vector<1x1x1xf32>
    %403 = vector.extract %402[0, 0, 0] : f32 from vector<1x1x1xf32>
    %404 = vector.broadcast %403 : f32 to vector<1x16xf32>
    %405 = arith.cmpf oeq, %399, %404 : vector<1x16xf32>
    %c16_i32_91 = arith.constant 16 : i32
    %406 = vector.broadcast %c16_i32_91 : i32 to vector<1x16xi32>
    %407 = arith.select %405, %82, %406 : vector<1x16xi1>, vector<1x16xi32>
    %408 = vector.shape_cast %407 : vector<1x16xi32> to vector<1x1x16xi32>
    %cst_92 = arith.constant dense<2147483647> : vector<1xi32>
    %409 = vector.multi_reduction <minsi>, %408, %cst_92 [1, 2] : vector<1x1x16xi32> to vector<1xi32>
    %410 = vector.shape_cast %409 : vector<1xi32> to vector<1x1x1xi32>
    %411 = vector.extract %410[0, 0, 0] : i32 from vector<1x1x1xi32>
    %412 = vector.broadcast %411 : i32 to vector<1x16xi32>
    %413 = arith.cmpi eq, %82, %412 : vector<1x16xi32>
    %cst_93 = arith.constant 0xFF800000 : f32
    %414 = vector.broadcast %cst_93 : f32 to vector<1x16xf32>
    %415 = arith.select %413, %414, %399 : vector<1x16xi1>, vector<1x16xf32>
    %416 = vector.shape_cast %415 : vector<1x16xf32> to vector<1x1x16xf32>
    %cst_94 = arith.constant dense<0xFF800000> : vector<1xf32>
    %417 = vector.multi_reduction <maximumf>, %416, %cst_94 [1, 2] : vector<1x1x16xf32> to vector<1xf32>
    %418 = vector.shape_cast %417 : vector<1xf32> to vector<1x1x1xf32>
    %419 = vector.extract %418[0, 0, 0] : f32 from vector<1x1x1xf32>
    %420 = vector.broadcast %419 : f32 to vector<1x16xf32>
    %421 = arith.cmpf oeq, %415, %420 : vector<1x16xf32>
    %c16_i32_95 = arith.constant 16 : i32
    %422 = vector.broadcast %c16_i32_95 : i32 to vector<1x16xi32>
    %423 = arith.select %421, %82, %422 : vector<1x16xi1>, vector<1x16xi32>
    %424 = vector.shape_cast %423 : vector<1x16xi32> to vector<1x1x16xi32>
    %cst_96 = arith.constant dense<2147483647> : vector<1xi32>
    %425 = vector.multi_reduction <minsi>, %424, %cst_96 [1, 2] : vector<1x1x16xi32> to vector<1xi32>
    %426 = vector.shape_cast %425 : vector<1xi32> to vector<1x1x1xi32>
    %427 = vector.extract %426[0, 0, 0] : i32 from vector<1x1x1xi32>
    %428 = vector.broadcast %411 : i32 to vector<2x16xi32>
    %429 = arith.cmpi eq, %83, %428 : vector<2x16xi32>
    %cst_97 = arith.constant 0.000000e+00 : f32
    %430 = vector.broadcast %cst_97 : f32 to vector<2x16xf32>
    %431 = arith.select %429, %396, %430 : vector<2x16xi1>, vector<2x16xf32>
    %cst_98 = arith.constant dense<0.000000e+00> : vector<2xf32>
    %432 = vector.multi_reduction <add>, %431, %cst_98 [1] : vector<2x16xf32> to vector<2xf32>
    %433 = vector.shape_cast %432 : vector<2xf32> to vector<2x1xf32>
    %434 = vector.broadcast %427 : i32 to vector<2x16xi32>
    %435 = arith.cmpi eq, %83, %434 : vector<2x16xi32>
    %cst_99 = arith.constant 0.000000e+00 : f32
    %436 = vector.broadcast %cst_99 : f32 to vector<2x16xf32>
    %437 = arith.select %435, %396, %436 : vector<2x16xi1>, vector<2x16xf32>
    %cst_100 = arith.constant dense<0.000000e+00> : vector<2xf32>
    %438 = vector.multi_reduction <add>, %437, %cst_100 [1] : vector<2x16xf32> to vector<2xf32>
    %439 = vector.shape_cast %438 : vector<2xf32> to vector<2x1xf32>
    %440 = arith.maximumf %433, %439 : vector<2x1xf32>
    %441 = arith.subf %433, %440 : vector<2x1xf32>
    %442 = math.exp %441 : vector<2x1xf32>
    %443 = arith.subf %439, %440 : vector<2x1xf32>
    %444 = math.exp %443 : vector<2x1xf32>
    %445 = arith.addf %442, %444 : vector<2x1xf32>
    %446 = arith.divf %442, %445 : vector<2x1xf32>
    %447 = arith.divf %444, %445 : vector<2x1xf32>
    %c4_i32_101 = arith.constant 4 : i32
    %448 = vector.broadcast %c4_i32_101 : i32 to vector<32x1xi32>
    %449 = arith.shrsi %84, %448 : vector<32x1xi32>
    %c0_i32_102 = arith.constant 0 : i32
    %450 = vector.broadcast %c0_i32_102 : i32 to vector<32x1xi32>
    %451 = arith.cmpi eq, %449, %450 : vector<32x1xi32>
    %452 = vector.extract_strided_slice %446 {offsets = [0, 0], sizes = [1, 1], strides = [1, 1]} : vector<2x1xf32> to vector<1x1xf32>
    %cst_103 = arith.constant 0.000000e+00 : f32
    %453 = vector.shape_cast %452 : vector<1x1xf32> to vector<1x1xf32>
    %454 = vector.broadcast %453 : vector<1x1xf32> to vector<32x1xf32>
    %455 = vector.broadcast %cst_103 : f32 to vector<32x1xf32>
    %456 = arith.select %451, %454, %455 : vector<32x1xi1>, vector<32x1xf32>
    %c4_i32_104 = arith.constant 4 : i32
    %457 = vector.broadcast %c4_i32_104 : i32 to vector<32x1xi32>
    %458 = arith.shrsi %84, %457 : vector<32x1xi32>
    %c1_i32_105 = arith.constant 1 : i32
    %459 = vector.broadcast %c1_i32_105 : i32 to vector<32x1xi32>
    %460 = arith.cmpi eq, %458, %459 : vector<32x1xi32>
    %461 = vector.extract_strided_slice %446 {offsets = [1, 0], sizes = [1, 1], strides = [1, 1]} : vector<2x1xf32> to vector<1x1xf32>
    %cst_106 = arith.constant 0.000000e+00 : f32
    %462 = vector.shape_cast %461 : vector<1x1xf32> to vector<1x1xf32>
    %463 = vector.broadcast %462 : vector<1x1xf32> to vector<32x1xf32>
    %464 = vector.broadcast %cst_106 : f32 to vector<32x1xf32>
    %465 = arith.select %460, %463, %464 : vector<32x1xi1>, vector<32x1xf32>
    %466 = arith.addf %456, %465 : vector<32x1xf32>
    %467 = vector.broadcast %411 : i32 to vector<32x32xi32>
    %468 = arith.cmpi eq, %14, %467 : vector<32x32xi32>
    %469 = arith.extui %468 : vector<32x32xi1> to vector<32x32xi32>
    %470 = arith.sitofp %469 : vector<32x32xi32> to vector<32x32xf32>
    %471 = vector.broadcast %466 : vector<32x1xf32> to vector<32x32xf32>
    %472 = arith.mulf %471, %470 : vector<32x32xf32>
    %c4_i32_107 = arith.constant 4 : i32
    %473 = vector.broadcast %c4_i32_107 : i32 to vector<32x1xi32>
    %474 = arith.shrsi %84, %473 : vector<32x1xi32>
    %c0_i32_108 = arith.constant 0 : i32
    %475 = vector.broadcast %c0_i32_108 : i32 to vector<32x1xi32>
    %476 = arith.cmpi eq, %474, %475 : vector<32x1xi32>
    %477 = vector.extract_strided_slice %447 {offsets = [0, 0], sizes = [1, 1], strides = [1, 1]} : vector<2x1xf32> to vector<1x1xf32>
    %cst_109 = arith.constant 0.000000e+00 : f32
    %478 = vector.shape_cast %477 : vector<1x1xf32> to vector<1x1xf32>
    %479 = vector.broadcast %478 : vector<1x1xf32> to vector<32x1xf32>
    %480 = vector.broadcast %cst_109 : f32 to vector<32x1xf32>
    %481 = arith.select %476, %479, %480 : vector<32x1xi1>, vector<32x1xf32>
    %c4_i32_110 = arith.constant 4 : i32
    %482 = vector.broadcast %c4_i32_110 : i32 to vector<32x1xi32>
    %483 = arith.shrsi %84, %482 : vector<32x1xi32>
    %c1_i32_111 = arith.constant 1 : i32
    %484 = vector.broadcast %c1_i32_111 : i32 to vector<32x1xi32>
    %485 = arith.cmpi eq, %483, %484 : vector<32x1xi32>
    %486 = vector.extract_strided_slice %447 {offsets = [1, 0], sizes = [1, 1], strides = [1, 1]} : vector<2x1xf32> to vector<1x1xf32>
    %cst_112 = arith.constant 0.000000e+00 : f32
    %487 = vector.shape_cast %486 : vector<1x1xf32> to vector<1x1xf32>
    %488 = vector.broadcast %487 : vector<1x1xf32> to vector<32x1xf32>
    %489 = vector.broadcast %cst_112 : f32 to vector<32x1xf32>
    %490 = arith.select %485, %488, %489 : vector<32x1xi1>, vector<32x1xf32>
    %491 = arith.addf %481, %490 : vector<32x1xf32>
    %492 = vector.broadcast %427 : i32 to vector<32x32xi32>
    %493 = arith.cmpi eq, %14, %492 : vector<32x32xi32>
    %494 = arith.extui %493 : vector<32x32xi1> to vector<32x32xi32>
    %495 = arith.sitofp %494 : vector<32x32xi32> to vector<32x32xf32>
    %496 = vector.broadcast %491 : vector<32x1xf32> to vector<32x32xf32>
    %497 = arith.mulf %496, %495 : vector<32x32xf32>
    %498 = arith.addf %472, %497 : vector<32x32xf32>
    %499 = arith.mulf %498, %8 : vector<32x32xf32>
    %cst_113 = arith.constant dense<0.000000e+00> : vector<32x32xf32>
    %500 = tpu.matmul %499, %323, %cst_113 {dimension_numbers = #tpu.dot_dimension_numbers<[1], [0], [0], [1], [0, 0, 1, 1], [], []>} : vector<32x32xf32>, vector<32x32xf32>, vector<32x32xf32> -> vector<32x32xf32>
    %cst_114 = arith.constant dense<0.000000e+00> : vector<32x32xf32>
    %501 = tpu.matmul %500, %312, %cst_114 {dimension_numbers = #tpu.dot_dimension_numbers<[1], [0], [0], [1], [0, 0, 1, 1], [], []>} : vector<32x32xf32>, vector<32x32xf32>, vector<32x32xf32> -> vector<32x32xf32>
    %502 = arith.addf %308, %501 : vector<32x32xf32>
    %503 = vector.broadcast %317 : vector<1x32xf32> to vector<32x32xf32>
    %504 = arith.addf %502, %503 : vector<32x32xf32>
    %cst_115 = arith.constant dense<0.000000e+00> : vector<32x32xf32>
    %505 = tpu.matmul %78, %504, %cst_115 {dimension_numbers = #tpu.dot_dimension_numbers<[1], [0], [0], [1], [0, 0, 1, 1], [], []>} : vector<32x32xf32>, vector<32x32xf32>, vector<32x32xf32> -> vector<32x32xf32>
    %cst_116 = arith.constant dense<0.000000e+00> : vector<32x64xf32>
    %506 = tpu.matmul %505, %313, %cst_116 {dimension_numbers = #tpu.dot_dimension_numbers<[1], [0], [0], [1], [0, 0, 1, 1], [], []>} : vector<32x32xf32>, vector<32x64xf32>, vector<32x64xf32> -> vector<32x64xf32>
    %cst_117 = arith.constant 0.000000e+00 : f32
    %507 = vector.broadcast %cst_117 : f32 to vector<32x64xf32>
    %508 = arith.maximumf %506, %507 : vector<32x64xf32>
    %cst_118 = arith.constant dense<0.000000e+00> : vector<32x32xf32>
    %509 = tpu.matmul %508, %315, %cst_118 {dimension_numbers = #tpu.dot_dimension_numbers<[1], [0], [0], [1], [0, 0, 1, 1], [], []>} : vector<32x64xf32>, vector<64x32xf32>, vector<32x32xf32> -> vector<32x32xf32>
    %510 = arith.addf %505, %509 : vector<32x32xf32>
    %cst_119 = arith.constant dense<0.000000e+00> : vector<32x32xf32>
    %511 = tpu.matmul %78, %510, %cst_119 {dimension_numbers = #tpu.dot_dimension_numbers<[1], [0], [0], [1], [0, 0, 1, 1], [], []>} : vector<32x32xf32>, vector<32x32xf32>, vector<32x32xf32> -> vector<32x32xf32>
    %cst_120 = arith.constant dense<0.000000e+00> : vector<32xf32>
    %512 = vector.multi_reduction <add>, %511, %cst_120 [1] : vector<32x32xf32> to vector<32xf32>
    %513 = vector.shape_cast %512 : vector<32xf32> to vector<32x1xf32>
    %cst_121 = arith.constant 3.200000e+01 : f32
    %514 = vector.broadcast %cst_121 : f32 to vector<32x1xf32>
    %515 = arith.divf %513, %514 : vector<32x1xf32>
    %516 = vector.broadcast %515 : vector<32x1xf32> to vector<32x32xf32>
    %517 = arith.subf %511, %516 : vector<32x32xf32>
    %518 = arith.mulf %517, %517 : vector<32x32xf32>
    %cst_122 = arith.constant dense<0.000000e+00> : vector<32xf32>
    %519 = vector.multi_reduction <add>, %518, %cst_122 [1] : vector<32x32xf32> to vector<32xf32>
    %520 = vector.shape_cast %519 : vector<32xf32> to vector<32x1xf32>
    %cst_123 = arith.constant 3.200000e+01 : f32
    %521 = vector.broadcast %cst_123 : f32 to vector<32x1xf32>
    %522 = arith.divf %520, %521 : vector<32x1xf32>
    %cst_124 = arith.constant 9.99999974E-6 : f32
    %523 = vector.broadcast %cst_124 : f32 to vector<32x1xf32>
    %524 = arith.addf %522, %523 : vector<32x1xf32>
    %525 = math.rsqrt %524 : vector<32x1xf32>
    %526 = vector.broadcast %525 : vector<32x1xf32> to vector<32x32xf32>
    %527 = arith.mulf %517, %526 : vector<32x32xf32>
    %528 = vector.broadcast %102 : vector<1x32xf32> to vector<32x32xf32>
    %529 = arith.mulf %527, %528 : vector<32x32xf32>
    %530 = vector.broadcast %103 : vector<1x32xf32> to vector<32x32xf32>
    %531 = arith.addf %529, %530 : vector<32x32xf32>
    %cst_125 = arith.constant dense<0.000000e+00> : vector<32x32xf32>
    %532 = tpu.matmul %81, %531, %cst_125 {dimension_numbers = #tpu.dot_dimension_numbers<[1], [0], [0], [1], [0, 0, 1, 1], [], []>} : vector<32x32xf32>, vector<32x32xf32>, vector<32x32xf32> -> vector<32x32xf32>
    %cst_126 = arith.constant dense<0.000000e+00> : vector<32x4xf32>
    %533 = tpu.matmul %532, %101, %cst_126 {dimension_numbers = #tpu.dot_dimension_numbers<[1], [1], [0], [0], [0, 0, 1, 0], [], []>} : vector<32x32xf32>, vector<4x32xf32>, vector<32x4xf32> -> vector<32x4xf32>
    %534 = vector.broadcast %104 : vector<1x4xf32> to vector<32x4xf32>
    %535 = arith.addf %533, %534 : vector<32x4xf32>
    %536 = arith.mulf %97, %96 : vector<32x4xf32>
    %cst_127 = arith.constant 1.000000e+00 : f32
    %537 = vector.broadcast %cst_127 : f32 to vector<32x4xf32>
    %538 = arith.subf %537, %97 : vector<32x4xf32>
    %539 = arith.mulf %538, %535 : vector<32x4xf32>
    %540 = arith.addf %536, %539 : vector<32x4xf32>
    %c0_128 = arith.constant 0 : index
    %c0_129 = arith.constant 0 : index
    %541 = vector.load %arg5[%c0_128, %c0_129] : memref<32x4xf32, #tpu.memory_space<vmem>>, vector<32x4xf32>
    tpu.vector_store %arg5[%c0_128, %c0_129], %540 {strides = array<i32>} : memref<32x4xf32, #tpu.memory_space<vmem>>, vector<32x4xf32>,
    %542 = arith.subf %535, %98 : vector<32x4xf32>
    %543 = math.absf %542 : vector<32x4xf32>
    %544 = arith.mulf %543, %97 : vector<32x4xf32>
    %545 = arith.mulf %543, %99 : vector<32x4xf32>
    %546 = tpu.concatenate %544, %545, %97, %99 in 1 : vector<32x4xf32>, vector<32x4xf32>, vector<32x4xf32>, vector<32x4xf32> -> vector<32x16xf32>
    %cst_130 = arith.constant dense<0.000000e+00> : vector<1x16xf32>
    %547 = tpu.matmul %93, %546, %cst_130 {dimension_numbers = #tpu.dot_dimension_numbers<[1], [0], [0], [1], [0, 0, 1, 1], [], []>} : vector<1x32xf32>, vector<32x16xf32>, vector<1x16xf32> -> vector<1x16xf32>
    %cst_131 = arith.constant dense<0.000000e+00> : vector<1x4xf32>
    %548 = tpu.matmul %547, %92, %cst_131 {dimension_numbers = #tpu.dot_dimension_numbers<[1], [0], [0], [1], [0, 0, 1, 1], [], []>} : vector<1x16xf32>, vector<16x4xf32>, vector<1x4xf32> -> vector<1x4xf32>
    %549 = vector.extract_strided_slice %548 {offsets = [0, 0], sizes = [1, 1], strides = [1, 1]} : vector<1x4xf32> to vector<1x1xf32>
    %cst_132 = arith.constant 1.000000e+00 : f32
    %550 = vector.broadcast %cst_132 : f32 to vector<1x1xf32>
    %551 = arith.mulf %550, %549 : vector<1x1xf32>
    %552 = vector.extract_strided_slice %548 {offsets = [0, 2], sizes = [1, 1], strides = [1, 1]} : vector<1x4xf32> to vector<1x1xf32>
    %cst_133 = arith.constant 9.99999996E-13 : f32
    %553 = vector.broadcast %cst_133 : f32 to vector<1x1xf32>
    %554 = arith.addf %552, %553 : vector<1x1xf32>
    %555 = arith.divf %551, %554 : vector<1x1xf32>
    %556 = vector.extract_strided_slice %548 {offsets = [0, 1], sizes = [1, 1], strides = [1, 1]} : vector<1x4xf32> to vector<1x1xf32>
    %cst_134 = arith.constant 1.000000e+00 : f32
    %557 = vector.broadcast %cst_134 : f32 to vector<1x1xf32>
    %558 = arith.mulf %557, %556 : vector<1x1xf32>
    %559 = vector.extract_strided_slice %548 {offsets = [0, 3], sizes = [1, 1], strides = [1, 1]} : vector<1x4xf32> to vector<1x1xf32>
    %cst_135 = arith.constant 9.99999996E-13 : f32
    %560 = vector.broadcast %cst_135 : f32 to vector<1x1xf32>
    %561 = arith.addf %559, %560 : vector<1x1xf32>
    %562 = arith.divf %558, %561 : vector<1x1xf32>
    %c0_i32_136 = arith.constant 0 : i32
    %563 = vector.broadcast %c0_i32_136 : i32 to vector<1x8xi32>
    %564 = arith.cmpi eq, %85, %563 : vector<1x8xi32>
    %cst_137 = arith.constant 0.000000e+00 : f32
    %565 = vector.shape_cast %555 : vector<1x1xf32> to vector<1x1xf32>
    %566 = vector.broadcast %565 : vector<1x1xf32> to vector<1x8xf32>
    %567 = vector.broadcast %cst_137 : f32 to vector<1x8xf32>
    %568 = arith.select %564, %566, %567 : vector<1x8xi1>, vector<1x8xf32>
    %c1_i32_138 = arith.constant 1 : i32
    %569 = vector.broadcast %c1_i32_138 : i32 to vector<1x8xi32>
    %570 = arith.cmpi eq, %85, %569 : vector<1x8xi32>
    %cst_139 = arith.constant 0.000000e+00 : f32
    %571 = vector.shape_cast %562 : vector<1x1xf32> to vector<1x1xf32>
    %572 = vector.broadcast %571 : vector<1x1xf32> to vector<1x8xf32>
    %573 = vector.broadcast %cst_139 : f32 to vector<1x8xf32>
    %574 = arith.select %570, %572, %573 : vector<1x8xi1>, vector<1x8xf32>
    %575 = arith.addf %568, %574 : vector<1x8xf32>
    %c2_i32_140 = arith.constant 2 : i32
    %576 = vector.broadcast %c2_i32_140 : i32 to vector<1x8xi32>
    %577 = arith.cmpi eq, %85, %576 : vector<1x8xi32>
    %578 = arith.addf %555, %562 : vector<1x1xf32>
    %cst_141 = arith.constant 0.000000e+00 : f32
    %579 = vector.shape_cast %578 : vector<1x1xf32> to vector<1x1xf32>
    %580 = vector.broadcast %579 : vector<1x1xf32> to vector<1x8xf32>
    %581 = vector.broadcast %cst_141 : f32 to vector<1x8xf32>
    %582 = arith.select %577, %580, %581 : vector<1x8xi1>, vector<1x8xf32>
    %583 = arith.addf %575, %582 : vector<1x8xf32>
    %c0_142 = arith.constant 0 : index
    %c0_143 = arith.constant 0 : index
    %584 = vector.load %arg6[%c0_142, %c0_143] : memref<1x8xf32, #tpu.memory_space<vmem>>, vector<1x8xf32>
    tpu.vector_store %arg6[%c0_142, %c0_143], %583 {strides = array<i32>} : memref<1x8xf32, #tpu.memory_space<vmem>>, vector<1x8xf32>,
    return
  }
}

</mosaic_0001>

<llo_original>
// kernel: _forward_jit.1
$region0: #{_forward_jit.1}
  #allocation0 [shape = 'u32[]', space=smem, size = 0x4, offset = 0x4, fixed_abs, tag = 'smem constant byte address 0x4 - core index']
  #allocation1 [shape = 'u32[144,128]{1,0:T(1,128)}', space=vmem, size = 0x12000, scoped, tag = 'internal scratch']
  %s0 = inlined_call_operand.vmem [shape: f32[32,40], index: 0, kind: input, shape index: {}]
  %s1 = inlined_call_operand.vmem [shape: f32[28,32], index: 1, kind: input, shape index: {}]
  %s2 = inlined_call_operand.vmem [shape: f32[2,32,192], index: 2, kind: input, shape index: {}]
  %s3 = inlined_call_operand.vmem [shape: f32[2,64,32], index: 3, kind: input, shape index: {}]
  %s4 = inlined_call_operand.vmem [shape: f32[3,128], index: 4, kind: input, shape index: {}]
  %s5 = inlined_call_operand.vmem [shape: f32[32,4], index: 5, kind: output, shape index: {0}]
  %s6 = inlined_call_operand.vmem [shape: f32[1,8], index: 6, kind: output, shape index: {1}]
  %7 = xla_tuple %s5, %s6
  %s8 = sld [smem:[#allocation0]]
  $region38: #{_forward_jit.1} parent=0
    _
  %s10 = ssub.s32 1, %s8
  %s11 = scalar_select 0, %s10, %s8
  // Predicated region
  $region2: #{_forward_jit.1} parent=0 // pred_check
    _
  $region3: #{_forward_jit.1} parent=0 // pred_check_branch
    %13 = sbr.rel (0) target = $region5
  $region4: #{_forward_jit.1} parent=0 // pred_region
    _
  $region5: #{_forward_jit.1} parent=0 // pred_fallthru
    _
  // Predicated region
  $region6: #{_forward_jit.1} parent=0 // pred_check
    _
  $region7: #{_forward_jit.1} parent=0 // pred_check_branch
    %15 = sbr.rel (0) target = $region9
  $region8: #{_forward_jit.1} parent=0 // pred_region
    _
  $region9: #{_forward_jit.1} parent=0 // pred_fallthru
    _
  // Predicated region
  $region10: #{_forward_jit.1} parent=0 // pred_check
    _
  $region11: #{_forward_jit.1} parent=0 // pred_check_branch
    %17 = sbr.rel (0) target = $region13
  $region12: #{_forward_jit.1} parent=0 // pred_region
    _
  $region13: #{_forward_jit.1} parent=0 // pred_fallthru
    _
  // Predicated region
  $region14: #{_forward_jit.1} parent=0 // pred_check
    _
  $region15: #{_forward_jit.1} parent=0 // pred_check_branch
    %19 = sbr.rel (0) target = $region17
  $region16: #{_forward_jit.1} parent=0 // pred_region
    _
  $region17: #{_forward_jit.1} parent=0 // pred_fallthru
    _
  // Predicated region
  $region18: #{_forward_jit.1} parent=0 // pred_check
    _
  $region19: #{_forward_jit.1} parent=0 // pred_check_branch
    %21 = sbr.rel (0) target = $region21
  $region20: #{_forward_jit.1} parent=0 // pred_region
    _
  $region21: #{_forward_jit.1} parent=0 // pred_fallthru
    _
  %v22 = vlaneseq
  %v23 = vshrl.u32 %v22, 7
  %v24 = vadd.s32 %v23, 8
  %v25 = vadd.s32 %v23, 16
  %v26 = vadd.s32 %v23, 24
  %v27 = vlaneseq
  %v28 = vand.u32 %v27, 127
  %v29 = vshra.s32 %v23, 4
  %v30 = vshra.s32 %v24, 4
  %v31 = vshra.s32 %v25, 4
  %v32 = vshra.s32 %v26, 4
  %v33 = vshra.s32 %v28, 4
  %vm34 = vcmp.eq.s32.totalorder %v29, %v33
  %vm35 = vcmp.eq.s32.totalorder %v30, %v33
  %vm36 = vcmp.eq.s32.totalorder %v31, %v33
  %vm37 = vcmp.eq.s32.totalorder %v32, %v33
  %v38 = vsel %vm34, 1, 0
  %v39 = vsel %vm35, 1, 0
  %v40 = vsel %vm36, 1, 0
  %v41 = vsel %vm37, 1, 0
  %v42 = vcvt.s32.f32 %v38
  %v43 = vcvt.s32.f32 %v39
  %v44 = vcvt.s32.f32 %v40
  %v45 = vcvt.s32.f32 %v41
  %vm46 = vcmp.eq.s32.totalorder %v23, %v28
  %vm47 = vcmp.eq.s32.totalorder %v24, %v28
  %vm48 = vcmp.eq.s32.totalorder %v25, %v28
  %vm49 = vcmp.eq.s32.totalorder %v26, %v28
  %v50 = vsel %vm46, 1, 0
  %v51 = vsel %vm47, 1, 0
  %v52 = vsel %vm48, 1, 0
  %v53 = vsel %vm49, 1, 0
  %v54 = vcvt.s32.f32 %v50
  %v55 = vcvt.s32.f32 %v51
  %v56 = vcvt.s32.f32 %v52
  %v57 = vcvt.s32.f32 %v53
  %v58 = vsub.s32 %v28, %v23
  %v59 = vsub.s32 %v28, %v24
  %v60 = vsub.s32 %v28, %v25
  %v61 = vsub.s32 %v28, %v26
  %v62 = vand.u32 %v58, 15
  %v63 = vand.u32 %v59, 15
  %v64 = vand.u32 %v60, 15
  %v65 = vand.u32 %v61, 15
  %v66 = vand.u32 %v23, 15
  %v67 = vand.u32 %v24, 15
  %v68 = vand.u32 %v25, 15
  %v69 = vand.u32 %v26, 15
  %v70 = vand.u32 %v28, 15
  %v71 = vadd.s32 %v66, 4294967294
  %v72 = vadd.s32 %v67, 4294967294
  %v73 = vadd.s32 %v68, 4294967294
  %v74 = vadd.s32 %v69, 4294967294
  %vm75 = vcmp.gt.s32.totalorder %v71, 0
  %v76 = vsel %vm75, %v71, 0
  %vm77 = vcmp.gt.s32.totalorder %v72, 0
  %v78 = vsel %vm77, %v72, 0
  %vm79 = vcmp.gt.s32.totalorder %v73, 0
  %v80 = vsel %vm79, %v73, 0
  %vm81 = vcmp.gt.s32.totalorder %v74, 0
  %v82 = vsel %vm81, %v74, 0
  %vm83 = vcmp.lt.s32.totalorder %v76, 15
  %v84 = vsel %vm83, %v76, 15
  %vm85 = vcmp.lt.s32.totalorder %v78, 15
  %v86 = vsel %vm85, %v78, 15
  %vm87 = vcmp.lt.s32.totalorder %v80, 15
  %v88 = vsel %vm87, %v80, 15
  %vm89 = vcmp.lt.s32.totalorder %v82, 15
  %v90 = vsel %vm89, %v82, 15
  %vm91 = vcmp.eq.s32.totalorder %v84, %v70
  %vm92 = vcmp.eq.s32.totalorder %v86, %v70
  %vm93 = vcmp.eq.s32.totalorder %v88, %v70
  %vm94 = vcmp.eq.s32.totalorder %v90, %v70
  %vm95 = vmand %vm91, %vm34
  %vm96 = vmand %vm92, %vm35
  %vm97 = vmand %vm93, %vm36
  %vm98 = vmand %vm94, %vm37
  %v99 = vsel %vm95, 0.2, 0.0
  %v100 = vsel %vm96, 0.2, 0.0
  %v101 = vsel %vm97, 0.2, 0.0
  %v102 = vsel %vm98, 0.2, 0.0
  %v103 = vadd.s32 %v66, 4294967295
  %v104 = vadd.s32 %v67, 4294967295
  %v105 = vadd.s32 %v68, 4294967295
  %v106 = vadd.s32 %v69, 4294967295
  %vm107 = vcmp.gt.s32.totalorder %v103, 0
  %v108 = vsel %vm107, %v103, 0
  %vm109 = vcmp.gt.s32.totalorder %v104, 0
  %v110 = vsel %vm109, %v104, 0
  %vm111 = vcmp.gt.s32.totalorder %v105, 0
  %v112 = vsel %vm111, %v105, 0
  %vm113 = vcmp.gt.s32.totalorder %v106, 0
  %v114 = vsel %vm113, %v106, 0
  %vm115 = vcmp.lt.s32.totalorder %v108, 15
  %v116 = vsel %vm115, %v108, 15
  %vm117 = vcmp.lt.s32.totalorder %v110, 15
  %v118 = vsel %vm117, %v110, 15
  %vm119 = vcmp.lt.s32.totalorder %v112, 15
  %v120 = vsel %vm119, %v112, 15
  %vm121 = vcmp.lt.s32.totalorder %v114, 15
  %v122 = vsel %vm121, %v114, 15
  %vm123 = vcmp.eq.s32.totalorder %v116, %v70
  %vm124 = vcmp.eq.s32.totalorder %v118, %v70
  %vm125 = vcmp.eq.s32.totalorder %v120, %v70
  %vm126 = vcmp.eq.s32.totalorder %v122, %v70
  %vm127 = vmand %vm123, %vm34
  %vm128 = vmand %vm124, %vm35
  %vm129 = vmand %vm125, %vm36
  %vm130 = vmand %vm126, %vm37
  %v131 = vsel %vm127, 0.2, 0.0
  %v132 = vsel %vm128, 0.2, 0.0
  %v133 = vsel %vm129, 0.2, 0.0
  %v134 = vsel %vm130, 0.2, 0.0
  %vm135 = vcmp.gt.s32.totalorder %v66, 0
  %v136 = vsel %vm135, %v66, 0
  %vm137 = vcmp.gt.s32.totalorder %v67, 0
  %v138 = vsel %vm137, %v67, 0
  %vm139 = vcmp.gt.s32.totalorder %v68, 0
  %v140 = vsel %vm139, %v68, 0
  %vm141 = vcmp.gt.s32.totalorder %v69, 0
  %v142 = vsel %vm141, %v69, 0
  %vm143 = vcmp.lt.s32.totalorder %v136, 15
  %v144 = vsel %vm143, %v136, 15
  %vm145 = vcmp.lt.s32.totalorder %v138, 15
  %v146 = vsel %vm145, %v138, 15
  %vm147 = vcmp.lt.s32.totalorder %v140, 15
  %v148 = vsel %vm147, %v140, 15
  %vm149 = vcmp.lt.s32.totalorder %v142, 15
  %v150 = vsel %vm149, %v142, 15
  %vm151 = vcmp.eq.s32.totalorder %v144, %v70
  %vm152 = vcmp.eq.s32.totalorder %v146, %v70
  %vm153 = vcmp.eq.s32.totalorder %v148, %v70
  %vm154 = vcmp.eq.s32.totalorder %v150, %v70
  %vm155 = vmand %vm151, %vm34
  %vm156 = vmand %vm152, %vm35
  %vm157 = vmand %vm153, %vm36
  %vm158 = vmand %vm154, %vm37
  %v159 = vsel %vm155, 0.2, 0.0
  %v160 = vsel %vm156, 0.2, 0.0
  %v161 = vsel %vm157, 0.2, 0.0
  %v162 = vsel %vm158, 0.2, 0.0
  %v163 = vadd.s32 %v66, 1
  %v164 = vadd.s32 %v67, 1
  %v165 = vadd.s32 %v68, 1
  %v166 = vadd.s32 %v69, 1
  %vm167 = vcmp.gt.s32.totalorder %v163, 0
  %v168 = vsel %vm167, %v163, 0
  %vm169 = vcmp.gt.s32.totalorder %v164, 0
  %v170 = vsel %vm169, %v164, 0
  %vm171 = vcmp.gt.s32.totalorder %v165, 0
  %v172 = vsel %vm171, %v165, 0
  %vm173 = vcmp.gt.s32.totalorder %v166, 0
  %v174 = vsel %vm173, %v166, 0
  %vm175 = vcmp.lt.s32.totalorder %v168, 15
  %v176 = vsel %vm175, %v168, 15
  %vm177 = vcmp.lt.s32.totalorder %v170, 15
  %v178 = vsel %vm177, %v170, 15
  %vm179 = vcmp.lt.s32.totalorder %v172, 15
  %v180 = vsel %vm179, %v172, 15
  %vm181 = vcmp.lt.s32.totalorder %v174, 15
  %v182 = vsel %vm181, %v174, 15
  %vm183 = vcmp.eq.s32.totalorder %v176, %v70
  %vm184 = vcmp.eq.s32.totalorder %v178, %v70
  %vm185 = vcmp.eq.s32.totalorder %v180, %v70
  %vm186 = vcmp.eq.s32.totalorder %v182, %v70
  %vm187 = vmand %vm183, %vm34
  %vm188 = vmand %vm184, %vm35
  %vm189 = vmand %vm185, %vm36
  %vm190 = vmand %vm186, %vm37
  %v191 = vsel %vm187, 0.2, 0.0
  %v192 = vsel %vm188, 0.2, 0.0
  %v193 = vsel %vm189, 0.2, 0.0
  %v194 = vsel %vm190, 0.2, 0.0
  %v195 = vadd.s32 %v66, 2
  %v196 = vadd.s32 %v67, 2
  %v197 = vadd.s32 %v68, 2
  %v198 = vadd.s32 %v69, 2
  %vm199 = vcmp.gt.s32.totalorder %v195, 0
  %v200 = vsel %vm199, %v195, 0
  %vm201 = vcmp.gt.s32.totalorder %v196, 0
  %v202 = vsel %vm201, %v196, 0
  %vm203 = vcmp.gt.s32.totalorder %v197, 0
  %v204 = vsel %vm203, %v197, 0
  %vm205 = vcmp.gt.s32.totalorder %v198, 0
  %v206 = vsel %vm205, %v198, 0
  %vm207 = vcmp.lt.s32.totalorder %v200, 15
  %v208 = vsel %vm207, %v200, 15
  %vm209 = vcmp.lt.s32.totalorder %v202, 15
  %v210 = vsel %vm209, %v202, 15
  %vm211 = vcmp.lt.s32.totalorder %v204, 15
  %v212 = vsel %vm211, %v204, 15
  %vm213 = vcmp.lt.s32.totalorder %v206, 15
  %v214 = vsel %vm213, %v206, 15
  %vm215 = vcmp.eq.s32.totalorder %v208, %v70
  %vm216 = vcmp.eq.s32.totalorder %v210, %v70
  %vm217 = vcmp.eq.s32.totalorder %v212, %v70
  %vm218 = vcmp.eq.s32.totalorder %v214, %v70
  %vm219 = vmand %vm215, %vm34
  %vm220 = vmand %vm216, %vm35
  %vm221 = vmand %vm217, %vm36
  %vm222 = vmand %vm218, %vm37
  %v223 = vsel %vm219, 0.2, 0.0
  %v224 = vsel %vm220, 0.2, 0.0
  %v225 = vsel %vm221, 0.2, 0.0
  %v226 = vsel %vm222, 0.2, 0.0
  %v227 = vadd.f32 %v99, %v131
  %v228 = vadd.f32 %v100, %v132
  %v229 = vadd.f32 %v101, %v133
  %v230 = vadd.f32 %v102, %v134
  %v231 = vadd.f32 %v159, %v191
  %v232 = vadd.f32 %v160, %v192
  %v233 = vadd.f32 %v161, %v193
  %v234 = vadd.f32 %v162, %v194
  %v235 = vadd.f32 %v227, %v231
  %v236 = vadd.f32 %v228, %v232
  %v237 = vadd.f32 %v229, %v233
  %v238 = vadd.f32 %v230, %v234
  %v239 = vadd.f32 %v235, %v223
  %v240 = vadd.f32 %v236, %v224
  %v241 = vadd.f32 %v237, %v225
  %v242 = vadd.f32 %v238, %v226
  %v243 = vsub.f32 %v54, %v239
  %v244 = vsub.f32 %v55, %v240
  %v245 = vsub.f32 %v56, %v241
  %v246 = vsub.f32 %v57, %v242
  %v247 = vmul.f32 %v42, 0.0625
  %v248 = vmul.f32 %v43, 0.0625
  %v249 = vmul.f32 %v44, 0.0625
  %v250 = vmul.f32 %v45, 0.0625
  %v251 = vsub.f32 %v54, %v247
  %v252 = vsub.f32 %v55, %v248
  %v253 = vsub.f32 %v56, %v249
  %v254 = vsub.f32 %v57, %v250
  %v255 = vshra.s32 %v23, 2
  %v256 = vshra.s32 %v24, 2
  %vm257 = vcmp.eq.s32.totalorder %v255, %v28
  %vm258 = vcmp.eq.s32.totalorder %v256, %v28
  %v259 = vsel %vm257, 1, 0
  %v260 = vsel %vm258, 1, 0
  %v261 = vcvt.s32.f32 %v259
  %v262 = vcvt.s32.f32 %v260
  %v263 = vld [vmem:[%s0] sm:$0xff]
  %v264 = vld [vmem:[%s0 + $0x8] sm:$0xff]
  %v265 = vld [vmem:[%s0 + $0x10] sm:$0xff]
  %v266 = vld [vmem:[%s0 + $0x18] sm:$0xff]
  %v267 = vld [vmem:[%s1] sm:$0xff]
  %v268 = vld [vmem:[%s1 + $0x8] sm:$0xff]
  %v269 = vld [vmem:[%s1 + $0x10] sm:$0xff]
  %v270 = vld [vmem:[%s1 + $0x18] sm:$0xf]
  %v271 = vld [vmem:[%s4 + $0x2] sm:$0x1]
  %vm272 = vcmask 195584
  %v274 = vsel %vm272, %v263, 0
  %v277 = vsel %vm272, %v264, 0
  %v280 = vsel %vm272, %v265, 0
  %v283 = vsel %vm272, %v266, 0
  %285 = vmatprep.subr.mxu0 0.0
  %286 = vmatpush1.msra.mxu0 %v267
  %287 = vmatprep.subr.mxu0 0.0
  %288 = vmatpush1.msra.mxu0 %v268
  %289 = vmatprep.subr.mxu0 0.0
  %290 = vmatpush1.msra.mxu0 %v269
  %291 = vmatprep.subr.mxu0 0.0
  %292 = vmatpush1.msra.mxu0 0.0
  %293 = vmatprep.subr.mxu0 0.0
  %294 = vmatpush1.msra.mxu0 0.0
  %295 = vmatprep.subr.mxu0 0.0
  %296 = vmatpush1.msra.mxu0 0.0
  %297 = vmatprep.subr.mxu0 0.0
  %298 = vmatpush1.msra.mxu0 0.0
  %299 = vmatprep.subr.mxu0 0.0
  %300 = vmatpush1.msra.mxu0 0.0
  %301 = vmatprep.subr.mxu0 0.0
  %302 = vmatpush1.msra.mxu0 0.0
  %303 = vmatprep.subr.mxu0 0.0
  %304 = vmatpush1.msra.mxu0 0.0
  %305 = vmatprep.subr.mxu0 0.0
  %306 = vmatpush1.msra.mxu0 0.0
  %307 = vmatprep.subr.mxu0 0.0
  %308 = vmatpush1.msra.mxu0 0.0
  %309 = vmatprep.subr.mxu0 0.0
  %310 = vmatpush1.msra.mxu0 0.0
  %311 = vmatprep.subr.mxu0 0.0
  %312 = vmatpush1.msra.mxu0 0.0
  %313 = vmatprep.subr.mxu0 0.0
  %314 = vmatpush1.msra.mxu0 0.0
  %315 = vmatprep.subr.mxu0 0.0
  %316 = vmatpush1.msra.mxu0 0.0
  %317 = vmatprep.subr.mxu0 0.0
  %318 = vmatpush1.msra.mxu0 0.0
  %319 = vmatprep.subr.mxu0 0.0
  %320 = vmatpush1.msra.mxu0 0.0
  %321 = vmatprep.subr.mxu0 0.0
  %322 = vmatpush1.msra.mxu0 0.0
  %323 = vmatprep.subr.mxu0 0.0
  %324 = vmatpush1.msra.mxu0 0.0
  %325 = vmatprep.subr.mxu0 0.0
  %326 = vmatpush1.msra.mxu0 0.0
  %327 = vmatprep.subr.mxu0 0.0
  %328 = vmatpush1.msra.mxu0 0.0
  %329 = vmatprep.subr.mxu0 0.0
  %330 = vmatpush1.msra.mxu0 0.0
  %331 = vmatprep.subr.mxu0 0.0
  %332 = vmatpush1.msra.mxu0 0.0
  %333 = vmatprep.subr.mxu0 0.0
  %334 = vmatpush1.msra.mxu0 0.0
  %335 = vmatprep.subr.mxu0 0.0
  %336 = vmatpush1.msra.mxu0 0.0
  %337 = vmatprep.subr.mxu0 0.0
  %338 = vmatpush1.msra.mxu0 0.0
  %339 = vmatprep.subr.mxu0 0.0
  %340 = vmatpush1.msra.mxu0 0.0
  %341 = vmatprep.subr.mxu0 0.0
  %342 = vmatpush1.msra.mxu0 0.0
  %343 = vmatprep.subr.mxu0 0.0
  %344 = vmatpush1.msra.mxu0 0.0
  %345 = vmatprep.subr.mxu0 0.0
  %346 = vmatpush1.msra.mxu0 0.0
  %347 = vmatprep.subr.mxu0 0.0
  %348 = vmatpush1.msra.mxu0 0.0
  %349 = vmatprep.mubr.f32.mxu0 0.0
  %350 = vmatmul.mubr.f32.gmra.mrb[0].mxu0 %v274
  %v351 = vpop.f32.mrb[0].mxu0
  %v352 = vadd.f32 0.0, %v351
  %v353 = vpop.f32.mrb[0].mxu0
  %354 = vmatprep.mubr.f32.mxu0 0.0
  %355 = vmatmul.mubr.f32.gmra.mrb[0].mxu0 %v277
  %v356 = vpop.f32.mrb[0].mxu0
  %v357 = vadd.f32 0.0, %v356
  %v358 = vpop.f32.mrb[0].mxu0
  %359 = vmatprep.mubr.f32.mxu0 0.0
  %360 = vmatmul.mubr.f32.gmra.mrb[0].mxu0 %v280
  %v361 = vpop.f32.mrb[0].mxu0
  %v362 = vadd.f32 0.0, %v361
  %v363 = vpop.f32.mrb[0].mxu0
  %364 = vmatprep.mubr.f32.mxu0 0.0
  %365 = vmatmul.mubr.f32.gmra.mrb[0].mxu0 %v283
  %v366 = vpop.f32.mrb[0].mxu0
  %v367 = vadd.f32 0.0, %v366
  %v368 = vpop.f32.mrb[0].mxu0
  %369 = vdwg.mxu0
  %v370 = vld [vmem:[%s2] sm:$0xff]
  %v371 = vld [vmem:[%s2 + $0x8] sm:$0xff]
  %v372 = vld [vmem:[%s2 + $0x10] sm:$0xff]
  %v373 = vld [vmem:[%s2 + $0x18] sm:$0xff]
  %v374 = vld [vmem:[%s2 + $0x20] sm:$0xff]
  %v375 = vld [vmem:[%s2 + $0x28] sm:$0xff]
  %v376 = vld [vmem:[%s2 + $0x30] sm:$0xff]
  %v377 = vld [vmem:[%s2 + $0x38] sm:$0xff]
  %v378 = vld [vmem:[%s3] sm:$0xff]
  %v379 = vld [vmem:[%s3 + $0x8] sm:$0xff]
  %v380 = vld [vmem:[%s3 + $0x10] sm:$0xff]
  %v381 = vld [vmem:[%s3 + $0x18] sm:$0xff]
  %v382 = vld [vmem:[%s3 + $0x20] sm:$0xff]
  %v383 = vld [vmem:[%s3 + $0x28] sm:$0xff]
  %v384 = vld [vmem:[%s3 + $0x30] sm:$0xff]
  %v385 = vld [vmem:[%s3 + $0x38] sm:$0xff]
  %v386 = vld [vmem:[%s4] sm:$0x1]
  %v387 = vlaneseq
  %v388 = vshrl.u32 %v387, 7
  %v389 = vsub.s32 0, %v388
  %v390 = vrot.slane %v386, %v389
  %vm391 = vcmask 261120
  %v393 = vsel %vm391, %v352, 0
  %v396 = vsel %vm391, %v357, 0
  %v399 = vsel %vm391, %v362, 0
  %v402 = vsel %vm391, %v367, 0
  %404 = vmatprep.subr.mxu0 0.0
  %405 = vmatpush1.msra.mxu0 %v370
  %406 = vmatprep.subr.mxu0 0.0
  %407 = vmatpush1.msra.mxu0 %v372
  %408 = vmatprep.subr.mxu0 0.0
  %409 = vmatpush1.msra.mxu0 %v374
  %410 = vmatprep.subr.mxu0 0.0
  %411 = vmatpush1.msra.mxu0 %v376
  %412 = vmatprep.subr.mxu0 0.0
  %413 = vmatpush1.msra.mxu0 0.0
  %414 = vmatprep.subr.mxu0 0.0
  %415 = vmatpush1.msra.mxu0 0.0
  %416 = vmatprep.subr.mxu0 0.0
  %417 = vmatpush1.msra.mxu0 0.0
  %418 = vmatprep.subr.mxu0 0.0
  %419 = vmatpush1.msra.mxu0 0.0
  %420 = vmatprep.subr.mxu0 0.0
  %421 = vmatpush1.msra.mxu0 0.0
  %422 = vmatprep.subr.mxu0 0.0
  %423 = vmatpush1.msra.mxu0 0.0
  %424 = vmatprep.subr.mxu0 0.0
  %425 = vmatpush1.msra.mxu0 0.0
  %426 = vmatprep.subr.mxu0 0.0
  %427 = vmatpush1.msra.mxu0 0.0
  %428 = vmatprep.subr.mxu0 0.0
  %429 = vmatpush1.msra.mxu0 0.0
  %430 = vmatprep.subr.mxu0 0.0
  %431 = vmatpush1.msra.mxu0 0.0
  %432 = vmatprep.subr.mxu0 0.0
  %433 = vmatpush1.msra.mxu0 0.0
  %434 = vmatprep.subr.mxu0 0.0
  %435 = vmatpush1.msra.mxu0 0.0
  %436 = vmatprep.subr.mxu0 0.0
  %437 = vmatpush1.msra.mxu0 0.0
  %438 = vmatprep.subr.mxu0 0.0
  %439 = vmatpush1.msra.mxu0 0.0
  %440 = vmatprep.subr.mxu0 0.0
  %441 = vmatpush1.msra.mxu0 0.0
  %442 = vmatprep.subr.mxu0 0.0
  %443 = vmatpush1.msra.mxu0 0.0
  %444 = vmatprep.subr.mxu0 0.0
  %445 = vmatpush1.msra.mxu0 0.0
  %446 = vmatprep.subr.mxu0 0.0
  %447 = vmatpush1.msra.mxu0 0.0
  %448 = vmatprep.subr.mxu0 0.0
  %449 = vmatpush1.msra.mxu0 0.0
  %450 = vmatprep.subr.mxu0 0.0
  %451 = vmatpush1.msra.mxu0 0.0
  %452 = vmatprep.subr.mxu0 0.0
  %453 = vmatpush1.msra.mxu0 0.0
  %454 = vmatprep.subr.mxu0 0.0
  %455 = vmatpush1.msra.mxu0 0.0
  %456 = vmatprep.subr.mxu0 0.0
  %457 = vmatpush1.msra.mxu0 0.0
  %458 = vmatprep.subr.mxu0 0.0
  %459 = vmatpush1.msra.mxu0 0.0
  %460 = vmatprep.subr.mxu0 0.0
  %461 = vmatpush1.msra.mxu0 0.0
  %462 = vmatprep.subr.mxu0 0.0
  %463 = vmatpush1.msra.mxu0 0.0
  %464 = vmatprep.subr.mxu0 0.0
  %465 = vmatpush1.msra.mxu0 0.0
  %466 = vmatprep.subr.mxu0 0.0
  %467 = vmatpush1.msra.mxu0 0.0
  %468 = vmatprep.mubr.f32.mxu0 0.0
  %469 = vmatmul.mubr.f32.gmra.mrb[0].mxu0 %v393
  %v470 = vpop.f32.mrb[0].mxu0
  %v471 = vadd.f32 %v390, %v470
  %v472 = vpop.f32.mrb[0].mxu0
  %473 = vmatprep.mubr.f32.mxu0 0.0
  %474 = vmatmul.mubr.f32.gmra.mrb[0].mxu0 %v396
  %v475 = vpop.f32.mrb[0].mxu0
  %v476 = vadd.f32 %v390, %v475
  %v477 = vpop.f32.mrb[0].mxu0
  %478 = vmatprep.mubr.f32.mxu0 0.0
  %479 = vmatmul.mubr.f32.gmra.mrb[0].mxu0 %v399
  %v480 = vpop.f32.mrb[0].mxu0
  %v481 = vadd.f32 %v390, %v480
  %v482 = vpop.f32.mrb[0].mxu0
  %483 = vmatprep.mubr.f32.mxu0 0.0
  %484 = vmatmul.mubr.f32.gmra.mrb[0].mxu0 %v402
  %v485 = vpop.f32.mrb[0].mxu0
  %v486 = vadd.f32 %v390, %v485
  %v487 = vpop.f32.mrb[0].mxu0
  %488 = vdwg.mxu0
  %493 = vrot.lane.b32.xlu0 %v471, 96
  %v494 = vpop.permute.xlu0 %493
  %495 = vrot.lane.b32.xlu0 %v476, 96
  %v496 = vpop.permute.xlu0 %495
  %497 = vrot.lane.b32.xlu0 %v481, 96
  %v498 = vpop.permute.xlu0 %497
  %499 = vrot.lane.b32.xlu0 %v486, 96
  %v500 = vpop.permute.xlu0 %499
  %v501 = vsel %vm391, %v494, 0
  %v503 = vsel %vm391, %v496, 0
  %v505 = vsel %vm391, %v498, 0
  %v507 = vsel %vm391, %v500, 0
  %v509 = vsel %vm391, %v471, 0
  %v511 = vsel %vm391, %v476, 0
  %v513 = vsel %vm391, %v481, 0
  %v515 = vsel %vm391, %v486, 0
  %517 = vmatprep.subr.mxu0 0.0
  %518 = vmatpush1.xpose.msra.mxu0 %v509
  %519 = vmatprep.subr.mxu0 0.0
  %520 = vmatpush1.xpose.msra.mxu0 %v511
  %521 = vmatprep.subr.mxu0 0.0
  %522 = vmatpush1.xpose.msra.mxu0 %v509
  %523 = vmatprep.subr.mxu0 0.0
  %524 = vmatpush1.xpose.msra.mxu0 %v511
  %525 = vmatprep.subr.mxu0 0.0
  %526 = vmatpush1.xpose.msra.mxu0 %v513
  %527 = vmatprep.subr.mxu0 0.0
  %528 = vmatpush1.xpose.msra.mxu0 %v515
  %529 = vmatprep.subr.mxu0 0.0
  %530 = vmatpush1.xpose.msra.mxu0 %v513
  %531 = vmatprep.subr.mxu0 0.0
  %532 = vmatpush1.xpose.msra.mxu0 %v515
  %533 = vmatprep.subr.mxu0 0.0
  %534 = vmatpush1.xpose.msra.mxu0 0.0
  %535 = vmatprep.subr.mxu0 0.0
  %536 = vmatpush1.xpose.msra.mxu0 0.0
  %537 = vmatprep.subr.mxu0 0.0
  %538 = vmatpush1.xpose.msra.mxu0 0.0
  %539 = vmatprep.subr.mxu0 0.0
  %540 = vmatpush1.xpose.msra.mxu0 0.0
  %541 = vmatprep.subr.mxu0 0.0
  %542 = vmatpush1.xpose.msra.mxu0 0.0
  %543 = vmatprep.subr.mxu0 0.0
  %544 = vmatpush1.xpose.msra.mxu0 0.0
  %545 = vmatprep.subr.mxu0 0.0
  %546 = vmatpush1.xpose.msra.mxu0 0.0
  %547 = vmatprep.subr.mxu0 0.0
  %548 = vmatpush1.xpose.msra.mxu0 0.0
  %549 = vmatprep.subr.mxu0 0.0
  %550 = vmatpush1.xpose.msra.mxu0 0.0
  %551 = vmatprep.subr.mxu0 0.0
  %552 = vmatpush1.xpose.msra.mxu0 0.0
  %553 = vmatprep.subr.mxu0 0.0
  %554 = vmatpush1.xpose.msra.mxu0 0.0
  %555 = vmatprep.subr.mxu0 0.0
  %556 = vmatpush1.xpose.msra.mxu0 0.0
  %557 = vmatprep.subr.mxu0 0.0
  %558 = vmatpush1.xpose.msra.mxu0 0.0
  %559 = vmatprep.subr.mxu0 0.0
  %560 = vmatpush1.xpose.msra.mxu0 0.0
  %561 = vmatprep.subr.mxu0 0.0
  %562 = vmatpush1.xpose.msra.mxu0 0.0
  %563 = vmatprep.subr.mxu0 0.0
  %564 = vmatpush1.xpose.msra.mxu0 0.0
  %565 = vmatprep.subr.mxu0 0.0
  %566 = vmatpush1.xpose.msra.mxu0 0.0
  %567 = vmatprep.subr.mxu0 0.0
  %568 = vmatpush1.xpose.msra.mxu0 0.0
  %569 = vmatprep.subr.mxu0 0.0
  %570 = vmatpush1.xpose.msra.mxu0 0.0
  %571 = vmatprep.subr.mxu0 0.0
  %572 = vmatpush1.xpose.msra.mxu0 0.0
  %573 = vmatprep.subr.mxu0 0.0
  %574 = vmatpush1.xpose.msra.mxu0 0.0
  %575 = vmatprep.subr.mxu0 0.0
  %576 = vmatpush1.xpose.msra.mxu0 0.0
  %577 = vmatprep.subr.mxu0 0.0
  %578 = vmatpush1.xpose.msra.mxu0 0.0
  %579 = vmatprep.subr.mxu0 0.0
  %580 = vmatpush1.xpose.msra.mxu0 0.0
  %581 = vmatprep.mubr.f32.mxu0 0.0
  %582 = vmatmul.mubr.f32.gmra.mrb[0].mxu0 %v501
  %v583 = vpop.f32.mrb[0].mxu0
  %v584 = vadd.f32 0.0, %v583
  %v585 = vpop.f32.mrb[0].mxu0
  %586 = vmatprep.mubr.f32.mxu0 0.0
  %587 = vmatmul.mubr.f32.gmra.mrb[0].mxu0 %v503
  %v588 = vpop.f32.mrb[0].mxu0
  %v589 = vadd.f32 0.0, %v588
  %v590 = vpop.f32.mrb[0].mxu0
  %591 = vmatprep.mubr.f32.mxu0 0.0
  %592 = vmatmul.mubr.f32.gmra.mrb[0].mxu0 %v505
  %v593 = vpop.f32.mrb[0].mxu0
  %v594 = vadd.f32 0.0, %v593
  %v595 = vpop.f32.mrb[0].mxu0
  %596 = vmatprep.mubr.f32.mxu0 0.0
  %597 = vmatmul.mubr.f32.gmra.mrb[0].mxu0 %v507
  %v598 = vpop.f32.mrb[0].mxu0
  %v599 = vadd.f32 0.0, %v598
  %v600 = vpop.f32.mrb[0].mxu0
  %601 = vdwg.mxu0
  %v603 = vrot.slane %v584, 1
  %604 = vrot.lane.b32.xlu0 %v603, 127
  %v605 = vpop.permute.xlu0 %604
  %v607 = vadd.f32 %v584, %v605
  %v609 = vrot.slane %v589, 1
  %610 = vrot.lane.b32.xlu0 %v609, 127
  %v611 = vpop.permute.xlu0 %610
  %v613 = vadd.f32 %v589, %v611
  %v615 = vrot.slane %v607, 2
  %616 = vrot.lane.b32.xlu0 %v615, 126
  %v617 = vpop.permute.xlu0 %616
  %v619 = vadd.f32 %v607, %v617
  %v621 = vrot.slane %v613, 2
  %622 = vrot.lane.b32.xlu0 %v621, 126
  %v623 = vpop.permute.xlu0 %622
  %v625 = vadd.f32 %v613, %v623
  %v627 = vrot.slane %v619, 4
  %628 = vrot.lane.b32.xlu0 %v627, 124
  %v629 = vpop.permute.xlu0 %628
  %v631 = vadd.f32 %v619, %v629
  %v633 = vrot.slane %v625, 4
  %634 = vrot.lane.b32.xlu0 %v633, 124
  %v635 = vpop.permute.xlu0 %634
  %v637 = vadd.f32 %v625, %v635
  %639 = vrot.lane.b32.xlu0 %v637, 120
  %v640 = vpop.permute.xlu0 %639
  %v642 = vadd.f32 %v631, %v640
  %v643 = vmul.f32 %v642, 0.03125
  %v645 = vrot.slane %v594, 1
  %646 = vrot.lane.b32.xlu0 %v645, 127
  %v647 = vpop.permute.xlu0 %646
  %v649 = vadd.f32 %v594, %v647
  %v651 = vrot.slane %v599, 1
  %652 = vrot.lane.b32.xlu0 %v651, 127
  %v653 = vpop.permute.xlu0 %652
  %v655 = vadd.f32 %v599, %v653
  %v657 = vrot.slane %v649, 2
  %658 = vrot.lane.b32.xlu0 %v657, 126
  %v659 = vpop.permute.xlu0 %658
  %v661 = vadd.f32 %v649, %v659
  %v663 = vrot.slane %v655, 2
  %664 = vrot.lane.b32.xlu0 %v663, 126
  %v665 = vpop.permute.xlu0 %664
  %v667 = vadd.f32 %v655, %v665
  %v669 = vrot.slane %v661, 4
  %670 = vrot.lane.b32.xlu0 %v669, 124
  %v671 = vpop.permute.xlu0 %670
  %v673 = vadd.f32 %v661, %v671
  %v675 = vrot.slane %v667, 4
  %676 = vrot.lane.b32.xlu0 %v675, 124
  %v677 = vpop.permute.xlu0 %676
  %v679 = vadd.f32 %v667, %v677
  %681 = vrot.lane.b32.xlu0 %v679, 120
  %v682 = vpop.permute.xlu0 %681
  %v684 = vadd.f32 %v673, %v682
  %v685 = vmul.f32 %v684, 0.03125
  %v687 = vrot.slane %v685, 7
  %688 = vrot.lane.b32.xlu0 %v687, 96
  %v689 = vpop.permute.xlu0 %688
  %vm691 = vcmask 1040384
  %v692 = vsel %vm691, %v643, %v689
  %693 = vrot.lane.b32.xlu0 %v685, 96
  %v694 = vpop.permute.xlu0 %693
  %v696 = vadd.f32 %v643, %v694
  %v697 = vmul.f32 %v696, 0.5
  %vm698 = vcmask 122880
  %v699 = vsel %vm698, %v697, -inf
  %700 = vmax.xlane.f32.xlu0 %v699
  %v701 = vpop.xlane.xlu0 %700
  %v702 = vrot.slane %v701, 4
  %v703 = vmax.f32 %v701, %v702
  %v704 = vrot.slane %v703, 2
  %v705 = vmax.f32 %v703, %v704
  %v706 = vrot.slane %v705, 1
  %v707 = vmax.f32 %v705, %v706
  %s708 = vtos %v707
  %v709 = vstv %s708
  %vm710 = vcmp.eq.f32.partialorder %v697, %v709
  %v711 = vsel %vm710, %v28, 16
  %v712 = vsel %vm698, %v711, 2147483647
  %v713 = vand.u32 %v712, 65535
  %v714 = vshra.s32 %v712, 16
  %v715 = vcvt.s32.f32 %v713
  %v716 = vcvt.s32.f32 %v714
  %717 = vmin.xlane.f32.xlu0 %v716
  %v718 = vpop.xlane.xlu0 %717
  %vm719 = vcmp.eq.f32.partialorder %v716, %v718
  %v720 = vsel %vm719, %v715, inf
  %721 = vmin.xlane.f32.xlu0 %v720
  %v722 = vpop.xlane.xlu0 %721
  %v723 = vcvt.f32.s32 %v722
  %v724 = vcvt.f32.s32 %v718
  %v725 = vshll.u32 %v724, 16
  %v726 = vadd.s32 %v725, %v723
  %v727 = vrot.slane %v726, 4
  %vm728 = vcmp.lt.s32.totalorder %v726, %v727
  %v729 = vsel %vm728, %v726, %v727
  %v730 = vrot.slane %v729, 2
  %vm731 = vcmp.lt.s32.totalorder %v729, %v730
  %v732 = vsel %vm731, %v729, %v730
  %v733 = vrot.slane %v732, 1
  %vm734 = vcmp.lt.s32.totalorder %v732, %v733
  %v735 = vsel %vm734, %v732, %v733
  %s736 = vtos %v735
  %v737 = vstv %s736
  %vm738 = vcmp.eq.s32.totalorder %v28, %v737
  %v739 = vsel %vm738, -inf, %v697
  %v740 = vsel %vm698, %v739, -inf
  %741 = vmax.xlane.f32.xlu0 %v740
  %v742 = vpop.xlane.xlu0 %741
  %v743 = vrot.slane %v742, 4
  %v744 = vmax.f32 %v742, %v743
  %v745 = vrot.slane %v744, 2
  %v746 = vmax.f32 %v744, %v745
  %v747 = vrot.slane %v746, 1
  %v748 = vmax.f32 %v746, %v747
  %s749 = vtos %v748
  %v750 = vstv %s749
  %vm751 = vcmp.eq.f32.partialorder %v739, %v750
  %v752 = vsel %vm751, %v28, 16
  %v753 = vsel %vm698, %v752, 2147483647
  %v754 = vand.u32 %v753, 65535
  %v755 = vshra.s32 %v753, 16
  %v756 = vcvt.s32.f32 %v754
  %v757 = vcvt.s32.f32 %v755
  %758 = vmin.xlane.f32.xlu0 %v757
  %v759 = vpop.xlane.xlu0 %758
  %vm760 = vcmp.eq.f32.partialorder %v757, %v759
  %v761 = vsel %vm760, %v756, inf
  %762 = vmin.xlane.f32.xlu0 %v761
  %v763 = vpop.xlane.xlu0 %762
  %v764 = vcvt.f32.s32 %v763
  %v765 = vcvt.f32.s32 %v759
  %v766 = vshll.u32 %v765, 16
  %v767 = vadd.s32 %v766, %v764
  %v768 = vrot.slane %v767, 4
  %vm769 = vcmp.lt.s32.totalorder %v767, %v768
  %v770 = vsel %vm769, %v767, %v768
  %v771 = vrot.slane %v770, 2
  %vm772 = vcmp.lt.s32.totalorder %v770, %v771
  %v773 = vsel %vm772, %v770, %v771
  %v774 = vrot.slane %v773, 1
  %vm775 = vcmp.lt.s32.totalorder %v773, %v774
  %v776 = vsel %vm775, %v773, %v774
  %s777 = vtos %v776
  %v778 = vsel %vm738, %v692, 0.0
  %vm779 = vcmask 123904
  %v780 = vsel %vm779, %v778, 0.0
  %781 = vadd.xlane.f32.xlu0 %v780
  %v782 = vpop.xlane.xlu0 %781
  %v783 = vstv %s777
  %vm784 = vcmp.eq.s32.totalorder %v28, %v783
  %v785 = vsel %vm784, %v692, 0.0
  %v786 = vsel %vm779, %v785, 0.0
  %787 = vadd.xlane.f32.xlu0 %v786
  %v788 = vpop.xlane.xlu0 %787
  %v789 = vmax.f32 %v782, %v788
  %v790 = vsub.f32 %v782, %v789
  %v791 = vmul.f32 %v790, 1.442695
  %v792 = vpow.pop %v791
  %v793 = vsub.f32 %v788, %v789
  %v794 = vmul.f32 %v793, 1.442695
  %v795 = vpow.pop %v794
  %v796 = vadd.f32 %v792, %v795
  %v797 = vrcp.pop %v796
  %v798 = vmul.f32 %v792, %v797
  %v799 = vmul.f32 %v795, %v797
  %vm800 = vcmp.eq.s32.totalorder %v29, 0
  %vm801 = vcmp.eq.s32.totalorder %v30, 0
  %vm802 = vcmp.eq.s32.totalorder %v31, 0
  %vm803 = vcmp.eq.s32.totalorder %v32, 0
  %v804 = vlaneseq
  %v805 = vshrl.u32 %v804, 7
  %v806 = vsub.s32 0, %v805
  %v807 = vrot.slane %v798, %v806
  %v808 = vsel %vm800, %v807, 0.0
  %v809 = vsel %vm801, %v807, 0.0
  %v810 = vsel %vm802, %v807, 0.0
  %v811 = vsel %vm803, %v807, 0.0
  %vm812 = vcmp.eq.s32.totalorder %v29, 1
  %vm813 = vcmp.eq.s32.totalorder %v30, 1
  %vm814 = vcmp.eq.s32.totalorder %v31, 1
  %vm815 = vcmp.eq.s32.totalorder %v32, 1
  %v816 = vlaneseq
  %v817 = vshrl.u32 %v816, 7
  %v818 = vsub.s32 1, %v817
  %v819 = vrot.slane %v798, %v818
  %v820 = vsel %vm812, %v819, 0.0
  %v821 = vsel %vm813, %v819, 0.0
  %v822 = vsel %vm814, %v819, 0.0
  %v823 = vsel %vm815, %v819, 0.0
  %v824 = vadd.f32 %v808, %v820
  %v825 = vadd.f32 %v809, %v821
  %v826 = vadd.f32 %v810, %v822
  %v827 = vadd.f32 %v811, %v823
  %vm828 = vcmp.eq.s32.totalorder %v62, %v737
  %vm829 = vcmp.eq.s32.totalorder %v63, %v737
  %vm830 = vcmp.eq.s32.totalorder %v64, %v737
  %vm831 = vcmp.eq.s32.totalorder %v65, %v737
  %v832 = vsel %vm828, 1, 0
  %v833 = vsel %vm829, 1, 0
  %v834 = vsel %vm830, 1, 0
  %v835 = vsel %vm831, 1, 0
  %v836 = vcvt.s32.f32 %v832
  %v837 = vcvt.s32.f32 %v833
  %v838 = vcvt.s32.f32 %v834
  %v839 = vcvt.s32.f32 %v835
  %v840 = vmul.f32 %v824, %v836
  %v841 = vmul.f32 %v825, %v837
  %v842 = vmul.f32 %v826, %v838
  %v843 = vmul.f32 %v827, %v839
  %v844 = vlaneseq
  %v845 = vshrl.u32 %v844, 7
  %v846 = vsub.s32 0, %v845
  %v847 = vrot.slane %v799, %v846
  %v848 = vsel %vm800, %v847, 0.0
  %v849 = vsel %vm801, %v847, 0.0
  %v850 = vsel %vm802, %v847, 0.0
  %v851 = vsel %vm803, %v847, 0.0
  %v852 = vlaneseq
  %v853 = vshrl.u32 %v852, 7
  %v854 = vsub.s32 1, %v853
  %v855 = vrot.slane %v799, %v854
  %v856 = vsel %vm812, %v855, 0.0
  %v857 = vsel %vm813, %v855, 0.0
  %v858 = vsel %vm814, %v855, 0.0
  %v859 = vsel %vm815, %v855, 0.0
  %v860 = vadd.f32 %v848, %v856
  %v861 = vadd.f32 %v849, %v857
  %v862 = vadd.f32 %v850, %v858
  %v863 = vadd.f32 %v851, %v859
  %vm864 = vcmp.eq.s32.totalorder %v62, %v783
  %vm865 = vcmp.eq.s32.totalorder %v63, %v783
  %vm866 = vcmp.eq.s32.totalorder %v64, %v783
  %vm867 = vcmp.eq.s32.totalorder %v65, %v783
  %v868 = vsel %vm864, 1, 0
  %v869 = vsel %vm865, 1, 0
  %v870 = vsel %vm866, 1, 0
  %v871 = vsel %vm867, 1, 0
  %v872 = vcvt.s32.f32 %v868
  %v873 = vcvt.s32.f32 %v869
  %v874 = vcvt.s32.f32 %v870
  %v875 = vcvt.s32.f32 %v871
  %v876 = vmul.f32 %v860, %v872
  %v877 = vmul.f32 %v861, %v873
  %v878 = vmul.f32 %v862, %v874
  %v879 = vmul.f32 %v863, %v875
  %v880 = vadd.f32 %v840, %v876
  %v881 = vadd.f32 %v841, %v877
  %v882 = vadd.f32 %v842, %v878
  %v883 = vadd.f32 %v843, %v879
  %v884 = vmul.f32 %v880, %v42
  %v885 = vmul.f32 %v881, %v43
  %v886 = vmul.f32 %v882, %v44
  %v887 = vmul.f32 %v883, %v45
  %888 = vrot.lane.b32.xlu0 %v471, 64
  %v889 = vpop.permute.xlu0 %888
  %890 = vrot.lane.b32.xlu0 %v476, 64
  %v891 = vpop.permute.xlu0 %890
  %892 = vrot.lane.b32.xlu0 %v481, 64
  %v893 = vpop.permute.xlu0 %892
  %894 = vrot.lane.b32.xlu0 %v486, 64
  %v895 = vpop.permute.xlu0 %894
  %v901 = vsel %vm391, %v884, 0
  %v904 = vsel %vm391, %v885, 0
  %v907 = vsel %vm391, %v886, 0
  %v910 = vsel %vm391, %v887, 0
  %912 = vmatprep.subr.mxu0 0.0
  %913 = vmatpush1.msra.mxu0 %v889
  %914 = vmatprep.subr.mxu0 0.0
  %915 = vmatpush1.msra.mxu0 %v891
  %916 = vmatprep.subr.mxu0 0.0
  %917 = vmatpush1.msra.mxu0 %v893
  %918 = vmatprep.subr.mxu0 0.0
  %919 = vmatpush1.msra.mxu0 %v895
  %920 = vmatprep.subr.mxu0 0.0
  %921 = vmatpush1.msra.mxu0 0.0
  %922 = vmatprep.subr.mxu0 0.0
  %923 = vmatpush1.msra.mxu0 0.0
  %924 = vmatprep.subr.mxu0 0.0
  %925 = vmatpush1.msra.mxu0 0.0
  %926 = vmatprep.subr.mxu0 0.0
  %927 = vmatpush1.msra.mxu0 0.0
  %928 = vmatprep.subr.mxu0 0.0
  %929 = vmatpush1.msra.mxu0 0.0
  %930 = vmatprep.subr.mxu0 0.0
  %931 = vmatpush1.msra.mxu0 0.0
  %932 = vmatprep.subr.mxu0 0.0
  %933 = vmatpush1.msra.mxu0 0.0
  %934 = vmatprep.subr.mxu0 0.0
  %935 = vmatpush1.msra.mxu0 0.0
  %936 = vmatprep.subr.mxu0 0.0
  %937 = vmatpush1.msra.mxu0 0.0
  %938 = vmatprep.subr.mxu0 0.0
  %939 = vmatpush1.msra.mxu0 0.0
  %940 = vmatprep.subr.mxu0 0.0
  %941 = vmatpush1.msra.mxu0 0.0
  %942 = vmatprep.subr.mxu0 0.0
  %943 = vmatpush1.msra.mxu0 0.0
  %944 = vmatprep.subr.mxu0 0.0
  %945 = vmatpush1.msra.mxu0 0.0
  %946 = vmatprep.subr.mxu0 0.0
  %947 = vmatpush1.msra.mxu0 0.0
  %948 = vmatprep.subr.mxu0 0.0
  %949 = vmatpush1.msra.mxu0 0.0
  %950 = vmatprep.subr.mxu0 0.0
  %951 = vmatpush1.msra.mxu0 0.0
  %952 = vmatprep.subr.mxu0 0.0
  %953 = vmatpush1.msra.mxu0 0.0
  %954 = vmatprep.subr.mxu0 0.0
  %955 = vmatpush1.msra.mxu0 0.0
  %956 = vmatprep.subr.mxu0 0.0
  %957 = vmatpush1.msra.mxu0 0.0
  %958 = vmatprep.subr.mxu0 0.0
  %959 = vmatpush1.msra.mxu0 0.0
  %960 = vmatprep.subr.mxu0 0.0
  %961 = vmatpush1.msra.mxu0 0.0
  %962 = vmatprep.subr.mxu0 0.0
  %963 = vmatpush1.msra.mxu0 0.0
  %964 = vmatprep.subr.mxu0 0.0
  %965 = vmatpush1.msra.mxu0 0.0
  %966 = vmatprep.subr.mxu0 0.0
  %967 = vmatpush1.msra.mxu0 0.0
  %968 = vmatprep.subr.mxu0 0.0
  %969 = vmatpush1.msra.mxu0 0.0
  %970 = vmatprep.subr.mxu0 0.0
  %971 = vmatpush1.msra.mxu0 0.0
  %972 = vmatprep.subr.mxu0 0.0
  %973 = vmatpush1.msra.mxu0 0.0
  %974 = vmatprep.subr.mxu0 0.0
  %975 = vmatpush1.msra.mxu0 0.0
  %976 = vmatprep.mubr.f32.mxu0 0.0
  %977 = vmatmul.mubr.f32.gmra.mrb[0].mxu0 %v901
  %v978 = vpop.f32.mrb[0].mxu0
  %v979 = vadd.f32 0.0, %v978
  %v980 = vpop.f32.mrb[0].mxu0
  %981 = vmatprep.mubr.f32.mxu0 0.0
  %982 = vmatmul.mubr.f32.gmra.mrb[0].mxu0 %v904
  %v983 = vpop.f32.mrb[0].mxu0
  %v984 = vadd.f32 0.0, %v983
  %v985 = vpop.f32.mrb[0].mxu0
  %986 = vmatprep.mubr.f32.mxu0 0.0
  %987 = vmatmul.mubr.f32.gmra.mrb[0].mxu0 %v907
  %v988 = vpop.f32.mrb[0].mxu0
  %v989 = vadd.f32 0.0, %v988
  %v990 = vpop.f32.mrb[0].mxu0
  %991 = vmatprep.mubr.f32.mxu0 0.0
  %992 = vmatmul.mubr.f32.gmra.mrb[0].mxu0 %v910
  %v993 = vpop.f32.mrb[0].mxu0
  %v994 = vadd.f32 0.0, %v993
  %v995 = vpop.f32.mrb[0].mxu0
  %996 = vdwg.mxu0
  %1001 = vrot.lane.b32.xlu0 %v370, 32
  %v1002 = vpop.permute.xlu0 %1001
  %1003 = vrot.lane.b32.xlu0 %v372, 32
  %v1004 = vpop.permute.xlu0 %1003
  %1005 = vrot.lane.b32.xlu0 %v374, 32
  %v1006 = vpop.permute.xlu0 %1005
  %1007 = vrot.lane.b32.xlu0 %v376, 32
  %v1008 = vpop.permute.xlu0 %1007
  %v1014 = vsel %vm391, %v979, 0
  %v1017 = vsel %vm391, %v984, 0
  %v1020 = vsel %vm391, %v989, 0
  %v1023 = vsel %vm391, %v994, 0
  %1025 = vmatprep.subr.mxu0 0.0
  %1026 = vmatpush1.msra.mxu0 %v1002
  %1027 = vmatprep.subr.mxu0 0.0
  %1028 = vmatpush1.msra.mxu0 %v1004
  %1029 = vmatprep.subr.mxu0 0.0
  %1030 = vmatpush1.msra.mxu0 %v1006
  %1031 = vmatprep.subr.mxu0 0.0
  %1032 = vmatpush1.msra.mxu0 %v1008
  %1033 = vmatprep.subr.mxu0 0.0
  %1034 = vmatpush1.msra.mxu0 0.0
  %1035 = vmatprep.subr.mxu0 0.0
  %1036 = vmatpush1.msra.mxu0 0.0
  %1037 = vmatprep.subr.mxu0 0.0
  %1038 = vmatpush1.msra.mxu0 0.0
  %1039 = vmatprep.subr.mxu0 0.0
  %1040 = vmatpush1.msra.mxu0 0.0
  %1041 = vmatprep.subr.mxu0 0.0
  %1042 = vmatpush1.msra.mxu0 0.0
  %1043 = vmatprep.subr.mxu0 0.0
  %1044 = vmatpush1.msra.mxu0 0.0
  %1045 = vmatprep.subr.mxu0 0.0
  %1046 = vmatpush1.msra.mxu0 0.0
  %1047 = vmatprep.subr.mxu0 0.0
  %1048 = vmatpush1.msra.mxu0 0.0
  %1049 = vmatprep.subr.mxu0 0.0
  %1050 = vmatpush1.msra.mxu0 0.0
  %1051 = vmatprep.subr.mxu0 0.0
  %1052 = vmatpush1.msra.mxu0 0.0
  %1053 = vmatprep.subr.mxu0 0.0
  %1054 = vmatpush1.msra.mxu0 0.0
  %1055 = vmatprep.subr.mxu0 0.0
  %1056 = vmatpush1.msra.mxu0 0.0
  %1057 = vmatprep.subr.mxu0 0.0
  %1058 = vmatpush1.msra.mxu0 0.0
  %1059 = vmatprep.subr.mxu0 0.0
  %1060 = vmatpush1.msra.mxu0 0.0
  %1061 = vmatprep.subr.mxu0 0.0
  %1062 = vmatpush1.msra.mxu0 0.0
  %1063 = vmatprep.subr.mxu0 0.0
  %1064 = vmatpush1.msra.mxu0 0.0
  %1065 = vmatprep.subr.mxu0 0.0
  %1066 = vmatpush1.msra.mxu0 0.0
  %1067 = vmatprep.subr.mxu0 0.0
  %1068 = vmatpush1.msra.mxu0 0.0
  %1069 = vmatprep.subr.mxu0 0.0
  %1070 = vmatpush1.msra.mxu0 0.0
  %1071 = vmatprep.subr.mxu0 0.0
  %1072 = vmatpush1.msra.mxu0 0.0
  %1073 = vmatprep.subr.mxu0 0.0
  %1074 = vmatpush1.msra.mxu0 0.0
  %1075 = vmatprep.subr.mxu0 0.0
  %1076 = vmatpush1.msra.mxu0 0.0
  %1077 = vmatprep.subr.mxu0 0.0
  %1078 = vmatpush1.msra.mxu0 0.0
  %1079 = vmatprep.subr.mxu0 0.0
  %1080 = vmatpush1.msra.mxu0 0.0
  %1081 = vmatprep.subr.mxu0 0.0
  %1082 = vmatpush1.msra.mxu0 0.0
  %1083 = vmatprep.subr.mxu0 0.0
  %1084 = vmatpush1.msra.mxu0 0.0
  %1085 = vmatprep.subr.mxu0 0.0
  %1086 = vmatpush1.msra.mxu0 0.0
  %1087 = vmatprep.subr.mxu0 0.0
  %1088 = vmatpush1.msra.mxu0 0.0
  %1089 = vmatprep.mubr.f32.mxu0 0.0
  %1090 = vmatmul.mubr.f32.gmra.mrb[0].mxu0 %v1014
  %v1091 = vpop.f32.mrb[0].mxu0
  %v1092 = vadd.f32 0.0, %v1091
  %v1093 = vpop.f32.mrb[0].mxu0
  %1094 = vmatprep.mubr.f32.mxu0 0.0
  %1095 = vmatmul.mubr.f32.gmra.mrb[0].mxu0 %v1017
  %v1096 = vpop.f32.mrb[0].mxu0
  %v1097 = vadd.f32 0.0, %v1096
  %v1098 = vpop.f32.mrb[0].mxu0
  %1099 = vmatprep.mubr.f32.mxu0 0.0
  %1100 = vmatmul.mubr.f32.gmra.mrb[0].mxu0 %v1020
  %v1101 = vpop.f32.mrb[0].mxu0
  %v1102 = vadd.f32 0.0, %v1101
  %v1103 = vpop.f32.mrb[0].mxu0
  %1104 = vmatprep.mubr.f32.mxu0 0.0
  %1105 = vmatmul.mubr.f32.gmra.mrb[0].mxu0 %v1023
  %v1106 = vpop.f32.mrb[0].mxu0
  %v1107 = vadd.f32 0.0, %v1106
  %v1108 = vpop.f32.mrb[0].mxu0
  %1109 = vdwg.mxu0
  %v1110 = vadd.f32 %v352, %v1092
  %v1111 = vadd.f32 %v357, %v1097
  %v1112 = vadd.f32 %v362, %v1102
  %v1113 = vadd.f32 %v367, %v1107
  %1115 = vrot.lane.b32.xlu0 %v390, 32
  %v1116 = vpop.permute.xlu0 %1115
  %v1118 = vadd.f32 %v1110, %v1116
  %v1119 = vadd.f32 %v1111, %v1116
  %v1120 = vadd.f32 %v1112, %v1116
  %v1121 = vadd.f32 %v1113, %v1116
  %v1123 = vsel %vm391, %v243, 0
  %v1126 = vsel %vm391, %v244, 0
  %v1129 = vsel %vm391, %v245, 0
  %v1132 = vsel %vm391, %v246, 0
  %1134 = vmatprep.subr.mxu0 0.0
  %1135 = vmatpush1.msra.mxu0 %v1118
  %1136 = vmatprep.subr.mxu0 0.0
  %1137 = vmatpush1.msra.mxu0 %v1119
  %1138 = vmatprep.subr.mxu0 0.0
  %1139 = vmatpush1.msra.mxu0 %v1120
  %1140 = vmatprep.subr.mxu0 0.0
  %1141 = vmatpush1.msra.mxu0 %v1121
  %1142 = vmatprep.subr.mxu0 0.0
  %1143 = vmatpush1.msra.mxu0 0.0
  %1144 = vmatprep.subr.mxu0 0.0
  %1145 = vmatpush1.msra.mxu0 0.0
  %1146 = vmatprep.subr.mxu0 0.0
  %1147 = vmatpush1.msra.mxu0 0.0
  %1148 = vmatprep.subr.mxu0 0.0
  %1149 = vmatpush1.msra.mxu0 0.0
  %1150 = vmatprep.subr.mxu0 0.0
  %1151 = vmatpush1.msra.mxu0 0.0
  %1152 = vmatprep.subr.mxu0 0.0
  %1153 = vmatpush1.msra.mxu0 0.0
  %1154 = vmatprep.subr.mxu0 0.0
  %1155 = vmatpush1.msra.mxu0 0.0
  %1156 = vmatprep.subr.mxu0 0.0
  %1157 = vmatpush1.msra.mxu0 0.0
  %1158 = vmatprep.subr.mxu0 0.0
  %1159 = vmatpush1.msra.mxu0 0.0
  %1160 = vmatprep.subr.mxu0 0.0
  %1161 = vmatpush1.msra.mxu0 0.0
  %1162 = vmatprep.subr.mxu0 0.0
  %1163 = vmatpush1.msra.mxu0 0.0
  %1164 = vmatprep.subr.mxu0 0.0
  %1165 = vmatpush1.msra.mxu0 0.0
  %1166 = vmatprep.subr.mxu0 0.0
  %1167 = vmatpush1.msra.mxu0 0.0
  %1168 = vmatprep.subr.mxu0 0.0
  %1169 = vmatpush1.msra.mxu0 0.0
  %1170 = vmatprep.subr.mxu0 0.0
  %1171 = vmatpush1.msra.mxu0 0.0
  %1172 = vmatprep.subr.mxu0 0.0
  %1173 = vmatpush1.msra.mxu0 0.0
  %1174 = vmatprep.subr.mxu0 0.0
  %1175 = vmatpush1.msra.mxu0 0.0
  %1176 = vmatprep.subr.mxu0 0.0
  %1177 = vmatpush1.msra.mxu0 0.0
  %1178 = vmatprep.subr.mxu0 0.0
  %1179 = vmatpush1.msra.mxu0 0.0
  %1180 = vmatprep.subr.mxu0 0.0
  %1181 = vmatpush1.msra.mxu0 0.0
  %1182 = vmatprep.subr.mxu0 0.0
  %1183 = vmatpush1.msra.mxu0 0.0
  %1184 = vmatprep.subr.mxu0 0.0
  %1185 = vmatpush1.msra.mxu0 0.0
  %1186 = vmatprep.subr.mxu0 0.0
  %1187 = vmatpush1.msra.mxu0 0.0
  %1188 = vmatprep.subr.mxu0 0.0
  %1189 = vmatpush1.msra.mxu0 0.0
  %1190 = vmatprep.subr.mxu0 0.0
  %1191 = vmatpush1.msra.mxu0 0.0
  %1192 = vmatprep.subr.mxu0 0.0
  %1193 = vmatpush1.msra.mxu0 0.0
  %1194 = vmatprep.subr.mxu0 0.0
  %1195 = vmatpush1.msra.mxu0 0.0
  %1196 = vmatprep.subr.mxu0 0.0
  %1197 = vmatpush1.msra.mxu0 0.0
  %1198 = vmatprep.mubr.f32.mxu0 0.0
  %1199 = vmatmul.mubr.f32.gmra.mrb[0].mxu0 %v1123
  %v1200 = vpop.f32.mrb[0].mxu0
  %v1201 = vadd.f32 0.0, %v1200
  %v1202 = vpop.f32.mrb[0].mxu0
  %1203 = vmatprep.mubr.f32.mxu0 0.0
  %1204 = vmatmul.mubr.f32.gmra.mrb[0].mxu0 %v1126
  %v1205 = vpop.f32.mrb[0].mxu0
  %v1206 = vadd.f32 0.0, %v1205
  %v1207 = vpop.f32.mrb[0].mxu0
  %1208 = vmatprep.mubr.f32.mxu0 0.0
  %1209 = vmatmul.mubr.f32.gmra.mrb[0].mxu0 %v1129
  %v1210 = vpop.f32.mrb[0].mxu0
  %v1211 = vadd.f32 0.0, %v1210
  %v1212 = vpop.f32.mrb[0].mxu0
  %1213 = vmatprep.mubr.f32.mxu0 0.0
  %1214 = vmatmul.mubr.f32.gmra.mrb[0].mxu0 %v1132
  %v1215 = vpop.f32.mrb[0].mxu0
  %v1216 = vadd.f32 0.0, %v1215
  %v1217 = vpop.f32.mrb[0].mxu0
  %1218 = vdwg.mxu0
  %v1220 = vsel %vm391, %v1201, 0
  %v1223 = vsel %vm391, %v1206, 0
  %v1226 = vsel %vm391, %v1211, 0
  %v1229 = vsel %vm391, %v1216, 0
  %1231 = vmatprep.subr.mxu0 0.0
  %1232 = vmatpush1.msra.mxu0 %v371
  %1233 = vmatprep.subr.mxu0 0.0
  %1234 = vmatpush1.msra.mxu0 %v373
  %1235 = vmatprep.subr.mxu0 0.0
  %1236 = vmatpush1.msra.mxu0 %v375
  %1237 = vmatprep.subr.mxu0 0.0
  %1238 = vmatpush1.msra.mxu0 %v377
  %1239 = vmatprep.subr.mxu0 0.0
  %1240 = vmatpush1.msra.mxu0 0.0
  %1241 = vmatprep.subr.mxu0 0.0
  %1242 = vmatpush1.msra.mxu0 0.0
  %1243 = vmatprep.subr.mxu0 0.0
  %1244 = vmatpush1.msra.mxu0 0.0
  %1245 = vmatprep.subr.mxu0 0.0
  %1246 = vmatpush1.msra.mxu0 0.0
  %1247 = vmatprep.subr.mxu0 0.0
  %1248 = vmatpush1.msra.mxu0 0.0
  %1249 = vmatprep.subr.mxu0 0.0
  %1250 = vmatpush1.msra.mxu0 0.0
  %1251 = vmatprep.subr.mxu0 0.0
  %1252 = vmatpush1.msra.mxu0 0.0
  %1253 = vmatprep.subr.mxu0 0.0
  %1254 = vmatpush1.msra.mxu0 0.0
  %1255 = vmatprep.subr.mxu0 0.0
  %1256 = vmatpush1.msra.mxu0 0.0
  %1257 = vmatprep.subr.mxu0 0.0
  %1258 = vmatpush1.msra.mxu0 0.0
  %1259 = vmatprep.subr.mxu0 0.0
  %1260 = vmatpush1.msra.mxu0 0.0
  %1261 = vmatprep.subr.mxu0 0.0
  %1262 = vmatpush1.msra.mxu0 0.0
  %1263 = vmatprep.subr.mxu0 0.0
  %1264 = vmatpush1.msra.mxu0 0.0
  %1265 = vmatprep.subr.mxu0 0.0
  %1266 = vmatpush1.msra.mxu0 0.0
  %1267 = vmatprep.subr.mxu0 0.0
  %1268 = vmatpush1.msra.mxu0 0.0
  %1269 = vmatprep.subr.mxu0 0.0
  %1270 = vmatpush1.msra.mxu0 0.0
  %1271 = vmatprep.subr.mxu0 0.0
  %1272 = vmatpush1.msra.mxu0 0.0
  %1273 = vmatprep.subr.mxu0 0.0
  %1274 = vmatpush1.msra.mxu0 0.0
  %1275 = vmatprep.subr.mxu0 0.0
  %1276 = vmatpush1.msra.mxu0 0.0
  %1277 = vmatprep.subr.mxu0 0.0
  %1278 = vmatpush1.msra.mxu0 0.0
  %1279 = vmatprep.subr.mxu0 0.0
  %1280 = vmatpush1.msra.mxu0 0.0
  %1281 = vmatprep.subr.mxu0 0.0
  %1282 = vmatpush1.msra.mxu0 0.0
  %1283 = vmatprep.subr.mxu0 0.0
  %1284 = vmatpush1.msra.mxu0 0.0
  %1285 = vmatprep.subr.mxu0 0.0
  %1286 = vmatpush1.msra.mxu0 0.0
  %1287 = vmatprep.subr.mxu0 0.0
  %1288 = vmatpush1.msra.mxu0 0.0
  %1289 = vmatprep.subr.mxu0 0.0
  %1290 = vmatpush1.msra.mxu0 0.0
  %1291 = vmatprep.subr.mxu0 0.0
  %1292 = vmatpush1.msra.mxu0 0.0
  %1293 = vmatprep.subr.mxu0 0.0
  %1294 = vmatpush1.msra.mxu0 0.0
  %1295 = vmatprep.mubr.f32.mxu0 0.0
  %1296 = vmatmul.mubr.f32.gmra.mrb[0].mxu0 %v1220
  %v1297 = vpop.f32.mrb[0].mxu0
  %v1298 = vadd.f32 0.0, %v1297
  %v1299 = vpop.f32.mrb[0].mxu0
  %1300 = vmatprep.mubr.f32.mxu0 0.0
  %1301 = vmatmul.mubr.f32.gmra.mrb[0].mxu0 %v1223
  %v1302 = vpop.f32.mrb[0].mxu0
  %v1303 = vadd.f32 0.0, %v1302
  %v1304 = vpop.f32.mrb[0].mxu0
  %1305 = vmatprep.mubr.f32.mxu0 0.0
  %1306 = vmatmul.mubr.f32.gmra.mrb[0].mxu0 %v1226
  %v1307 = vpop.f32.mrb[0].mxu0
  %v1308 = vadd.f32 0.0, %v1307
  %v1309 = vpop.f32.mrb[0].mxu0
  %1310 = vmatprep.mubr.f32.mxu0 0.0
  %1311 = vmatmul.mubr.f32.gmra.mrb[0].mxu0 %v1229
  %v1312 = vpop.f32.mrb[0].mxu0
  %v1313 = vadd.f32 0.0, %v1312
  %v1314 = vpop.f32.mrb[0].mxu0
  %1315 = vdwg.mxu0
  %v1316 = vmax.f32 %v1298, 0.0
  %v1317 = vmax.f32 %v1303, 0.0
  %v1318 = vmax.f32 %v1308, 0.0
  %v1319 = vmax.f32 %v1313, 0.0
  %vm1320 = vcmask 523264
  %v1322 = vsel %vm1320, %v1316, 0
  %v1325 = vsel %vm1320, %v1317, 0
  %v1328 = vsel %vm1320, %v1318, 0
  %v1331 = vsel %vm1320, %v1319, 0
  %1333 = vmatprep.subr.mxu0 0.0
  %1334 = vmatpush1.msra.mxu0 %v378
  %1335 = vmatprep.subr.mxu0 0.0
  %1336 = vmatpush1.msra.mxu0 %v379
  %1337 = vmatprep.subr.mxu0 0.0
  %1338 = vmatpush1.msra.mxu0 %v380
  %1339 = vmatprep.subr.mxu0 0.0
  %1340 = vmatpush1.msra.mxu0 %v381
  %1341 = vmatprep.subr.mxu0 0.0
  %1342 = vmatpush1.msra.mxu0 %v382
  %1343 = vmatprep.subr.mxu0 0.0
  %1344 = vmatpush1.msra.mxu0 %v383
  %1345 = vmatprep.subr.mxu0 0.0
  %1346 = vmatpush1.msra.mxu0 %v384
  %1347 = vmatprep.subr.mxu0 0.0
  %1348 = vmatpush1.msra.mxu0 %v385
  %1349 = vmatprep.subr.mxu0 0.0
  %1350 = vmatpush1.msra.mxu0 0.0
  %1351 = vmatprep.subr.mxu0 0.0
  %1352 = vmatpush1.msra.mxu0 0.0
  %1353 = vmatprep.subr.mxu0 0.0
  %1354 = vmatpush1.msra.mxu0 0.0
  %1355 = vmatprep.subr.mxu0 0.0
  %1356 = vmatpush1.msra.mxu0 0.0
  %1357 = vmatprep.subr.mxu0 0.0
  %1358 = vmatpush1.msra.mxu0 0.0
  %1359 = vmatprep.subr.mxu0 0.0
  %1360 = vmatpush1.msra.mxu0 0.0
  %1361 = vmatprep.subr.mxu0 0.0
  %1362 = vmatpush1.msra.mxu0 0.0
  %1363 = vmatprep.subr.mxu0 0.0
  %1364 = vmatpush1.msra.mxu0 0.0
  %1365 = vmatprep.subr.mxu0 0.0
  %1366 = vmatpush1.msra.mxu0 0.0
  %1367 = vmatprep.subr.mxu0 0.0
  %1368 = vmatpush1.msra.mxu0 0.0
  %1369 = vmatprep.subr.mxu0 0.0
  %1370 = vmatpush1.msra.mxu0 0.0
  %1371 = vmatprep.subr.mxu0 0.0
  %1372 = vmatpush1.msra.mxu0 0.0
  %1373 = vmatprep.subr.mxu0 0.0
  %1374 = vmatpush1.msra.mxu0 0.0
  %1375 = vmatprep.subr.mxu0 0.0
  %1376 = vmatpush1.msra.mxu0 0.0
  %1377 = vmatprep.subr.mxu0 0.0
  %1378 = vmatpush1.msra.mxu0 0.0
  %1379 = vmatprep.subr.mxu0 0.0
  %1380 = vmatpush1.msra.mxu0 0.0
  %1381 = vmatprep.subr.mxu0 0.0
  %1382 = vmatpush1.msra.mxu0 0.0
  %1383 = vmatprep.subr.mxu0 0.0
  %1384 = vmatpush1.msra.mxu0 0.0
  %1385 = vmatprep.subr.mxu0 0.0
  %1386 = vmatpush1.msra.mxu0 0.0
  %1387 = vmatprep.subr.mxu0 0.0
  %1388 = vmatpush1.msra.mxu0 0.0
  %1389 = vmatprep.subr.mxu0 0.0
  %1390 = vmatpush1.msra.mxu0 0.0
  %1391 = vmatprep.subr.mxu0 0.0
  %1392 = vmatpush1.msra.mxu0 0.0
  %1393 = vmatprep.subr.mxu0 0.0
  %1394 = vmatpush1.msra.mxu0 0.0
  %1395 = vmatprep.subr.mxu0 0.0
  %1396 = vmatpush1.msra.mxu0 0.0
  %1397 = vmatprep.mubr.f32.mxu0 0.0
  %1398 = vmatmul.mubr.f32.gmra.mrb[0].mxu0 %v1322
  %v1399 = vpop.f32.mrb[0].mxu0
  %v1400 = vadd.f32 0.0, %v1399
  %v1401 = vpop.f32.mrb[0].mxu0
  %1402 = vmatprep.mubr.f32.mxu0 0.0
  %1403 = vmatmul.mubr.f32.gmra.mrb[0].mxu0 %v1325
  %v1404 = vpop.f32.mrb[0].mxu0
  %v1405 = vadd.f32 0.0, %v1404
  %v1406 = vpop.f32.mrb[0].mxu0
  %1407 = vmatprep.mubr.f32.mxu0 0.0
  %1408 = vmatmul.mubr.f32.gmra.mrb[0].mxu0 %v1328
  %v1409 = vpop.f32.mrb[0].mxu0
  %v1410 = vadd.f32 0.0, %v1409
  %v1411 = vpop.f32.mrb[0].mxu0
  %1412 = vmatprep.mubr.f32.mxu0 0.0
  %1413 = vmatmul.mubr.f32.gmra.mrb[0].mxu0 %v1331
  %v1414 = vpop.f32.mrb[0].mxu0
  %v1415 = vadd.f32 0.0, %v1414
  %v1416 = vpop.f32.mrb[0].mxu0
  %1417 = vdwg.mxu0
  %v1418 = vadd.f32 %v1201, %v1400
  %v1419 = vadd.f32 %v1206, %v1405
  %v1420 = vadd.f32 %v1211, %v1410
  %v1421 = vadd.f32 %v1216, %v1415
  %1422 = vmatprep.subr.mxu0 0.0
  %1423 = vmatpush1.msra.mxu0 %v1418
  %1424 = vmatprep.subr.mxu0 0.0
  %1425 = vmatpush1.msra.mxu0 %v1419
  %1426 = vmatprep.subr.mxu0 0.0
  %1427 = vmatpush1.msra.mxu0 %v1420
  %1428 = vmatprep.subr.mxu0 0.0
  %1429 = vmatpush1.msra.mxu0 %v1421
  %1430 = vmatprep.subr.mxu0 0.0
  %1431 = vmatpush1.msra.mxu0 0.0
  %1432 = vmatprep.subr.mxu0 0.0
  %1433 = vmatpush1.msra.mxu0 0.0
  %1434 = vmatprep.subr.mxu0 0.0
  %1435 = vmatpush1.msra.mxu0 0.0
  %1436 = vmatprep.subr.mxu0 0.0
  %1437 = vmatpush1.msra.mxu0 0.0
  %1438 = vmatprep.subr.mxu0 0.0
  %1439 = vmatpush1.msra.mxu0 0.0
  %1440 = vmatprep.subr.mxu0 0.0
  %1441 = vmatpush1.msra.mxu0 0.0
  %1442 = vmatprep.subr.mxu0 0.0
  %1443 = vmatpush1.msra.mxu0 0.0
  %1444 = vmatprep.subr.mxu0 0.0
  %1445 = vmatpush1.msra.mxu0 0.0
  %1446 = vmatprep.subr.mxu0 0.0
  %1447 = vmatpush1.msra.mxu0 0.0
  %1448 = vmatprep.subr.mxu0 0.0
  %1449 = vmatpush1.msra.mxu0 0.0
  %1450 = vmatprep.subr.mxu0 0.0
  %1451 = vmatpush1.msra.mxu0 0.0
  %1452 = vmatprep.subr.mxu0 0.0
  %1453 = vmatpush1.msra.mxu0 0.0
  %1454 = vmatprep.subr.mxu0 0.0
  %1455 = vmatpush1.msra.mxu0 0.0
  %1456 = vmatprep.subr.mxu0 0.0
  %1457 = vmatpush1.msra.mxu0 0.0
  %1458 = vmatprep.subr.mxu0 0.0
  %1459 = vmatpush1.msra.mxu0 0.0
  %1460 = vmatprep.subr.mxu0 0.0
  %1461 = vmatpush1.msra.mxu0 0.0
  %1462 = vmatprep.subr.mxu0 0.0
  %1463 = vmatpush1.msra.mxu0 0.0
  %1464 = vmatprep.subr.mxu0 0.0
  %1465 = vmatpush1.msra.mxu0 0.0
  %1466 = vmatprep.subr.mxu0 0.0
  %1467 = vmatpush1.msra.mxu0 0.0
  %1468 = vmatprep.subr.mxu0 0.0
  %1469 = vmatpush1.msra.mxu0 0.0
  %1470 = vmatprep.subr.mxu0 0.0
  %1471 = vmatpush1.msra.mxu0 0.0
  %1472 = vmatprep.subr.mxu0 0.0
  %1473 = vmatpush1.msra.mxu0 0.0
  %1474 = vmatprep.subr.mxu0 0.0
  %1475 = vmatpush1.msra.mxu0 0.0
  %1476 = vmatprep.subr.mxu0 0.0
  %1477 = vmatpush1.msra.mxu0 0.0
  %1478 = vmatprep.subr.mxu0 0.0
  %1479 = vmatpush1.msra.mxu0 0.0
  %1480 = vmatprep.subr.mxu0 0.0
  %1481 = vmatpush1.msra.mxu0 0.0
  %1482 = vmatprep.subr.mxu0 0.0
  %1483 = vmatpush1.msra.mxu0 0.0
  %1484 = vmatprep.subr.mxu0 0.0
  %1485 = vmatpush1.msra.mxu0 0.0
  %1486 = vmatprep.mubr.f32.mxu0 0.0
  %1487 = vmatmul.mubr.f32.gmra.mrb[0].mxu0 %v1123
  %v1488 = vpop.f32.mrb[0].mxu0
  %v1489 = vadd.f32 0.0, %v1488
  %v1490 = vpop.f32.mrb[0].mxu0
  %1491 = vmatprep.mubr.f32.mxu0 0.0
  %1492 = vmatmul.mubr.f32.gmra.mrb[0].mxu0 %v1126
  %v1493 = vpop.f32.mrb[0].mxu0
  %v1494 = vadd.f32 0.0, %v1493
  %v1495 = vpop.f32.mrb[0].mxu0
  %1496 = vmatprep.mubr.f32.mxu0 0.0
  %1497 = vmatmul.mubr.f32.gmra.mrb[0].mxu0 %v1129
  %v1498 = vpop.f32.mrb[0].mxu0
  %v1499 = vadd.f32 0.0, %v1498
  %v1500 = vpop.f32.mrb[0].mxu0
  %1501 = vmatprep.mubr.f32.mxu0 0.0
  %1502 = vmatmul.mubr.f32.gmra.mrb[0].mxu0 %v1132
  %v1503 = vpop.f32.mrb[0].mxu0
  %v1504 = vadd.f32 0.0, %v1503
  %v1505 = vpop.f32.mrb[0].mxu0
  %1506 = vdwg.mxu0
  %s1507 = scalar_lea.vmem %s2, 64
  %v1508 = vld [vmem:[%s1507] sm:$0xff]
  %v1509 = vld [vmem:[%s1507 + $0x8] sm:$0xff]
  %v1510 = vld [vmem:[%s1507 + $0x10] sm:$0xff]
  %v1511 = vld [vmem:[%s1507 + $0x18] sm:$0xff]
  %v1512 = vld [vmem:[%s1507 + $0x20] sm:$0xff]
  %v1513 = vld [vmem:[%s1507 + $0x28] sm:$0xff]
  %v1514 = vld [vmem:[%s1507 + $0x30] sm:$0xff]
  %v1515 = vld [vmem:[%s1507 + $0x38] sm:$0xff]
  %s1516 = scalar_lea.vmem %s3, 64
  %v1517 = vld [vmem:[%s1516] sm:$0xff]
  %v1518 = vld [vmem:[%s1516 + $0x8] sm:$0xff]
  %v1519 = vld [vmem:[%s1516 + $0x10] sm:$0xff]
  %v1520 = vld [vmem:[%s1516 + $0x18] sm:$0xff]
  %v1521 = vld [vmem:[%s1516 + $0x20] sm:$0xff]
  %v1522 = vld [vmem:[%s1516 + $0x28] sm:$0xff]
  %v1523 = vld [vmem:[%s1516 + $0x30] sm:$0xff]
  %v1524 = vld [vmem:[%s1516 + $0x38] sm:$0xff]
  %v1525 = vld [vmem:[%s4 + $0x1] sm:$0x1]
  %v1526 = vlaneseq
  %v1527 = vshrl.u32 %v1526, 7
  %v1528 = vsub.s32 0, %v1527
  %v1529 = vrot.slane %v1525, %v1528
  %v1531 = vsel %vm391, %v1489, 0
  %v1534 = vsel %vm391, %v1494, 0
  %v1537 = vsel %vm391, %v1499, 0
  %v1540 = vsel %vm391, %v1504, 0
  %1542 = vmatprep.subr.mxu0 0.0
  %1543 = vmatpush1.msra.mxu0 %v1508
  %1544 = vmatprep.subr.mxu0 0.0
  %1545 = vmatpush1.msra.mxu0 %v1510
  %1546 = vmatprep.subr.mxu0 0.0
  %1547 = vmatpush1.msra.mxu0 %v1512
  %1548 = vmatprep.subr.mxu0 0.0
  %1549 = vmatpush1.msra.mxu0 %v1514
  %1550 = vmatprep.subr.mxu0 0.0
  %1551 = vmatpush1.msra.mxu0 0.0
  %1552 = vmatprep.subr.mxu0 0.0
  %1553 = vmatpush1.msra.mxu0 0.0
  %1554 = vmatprep.subr.mxu0 0.0
  %1555 = vmatpush1.msra.mxu0 0.0
  %1556 = vmatprep.subr.mxu0 0.0
  %1557 = vmatpush1.msra.mxu0 0.0
  %1558 = vmatprep.subr.mxu0 0.0
  %1559 = vmatpush1.msra.mxu0 0.0
  %1560 = vmatprep.subr.mxu0 0.0
  %1561 = vmatpush1.msra.mxu0 0.0
  %1562 = vmatprep.subr.mxu0 0.0
  %1563 = vmatpush1.msra.mxu0 0.0
  %1564 = vmatprep.subr.mxu0 0.0
  %1565 = vmatpush1.msra.mxu0 0.0
  %1566 = vmatprep.subr.mxu0 0.0
  %1567 = vmatpush1.msra.mxu0 0.0
  %1568 = vmatprep.subr.mxu0 0.0
  %1569 = vmatpush1.msra.mxu0 0.0
  %1570 = vmatprep.subr.mxu0 0.0
  %1571 = vmatpush1.msra.mxu0 0.0
  %1572 = vmatprep.subr.mxu0 0.0
  %1573 = vmatpush1.msra.mxu0 0.0
  %1574 = vmatprep.subr.mxu0 0.0
  %1575 = vmatpush1.msra.mxu0 0.0
  %1576 = vmatprep.subr.mxu0 0.0
  %1577 = vmatpush1.msra.mxu0 0.0
  %1578 = vmatprep.subr.mxu0 0.0
  %1579 = vmatpush1.msra.mxu0 0.0
  %1580 = vmatprep.subr.mxu0 0.0
  %1581 = vmatpush1.msra.mxu0 0.0
  %1582 = vmatprep.subr.mxu0 0.0
  %1583 = vmatpush1.msra.mxu0 0.0
  %1584 = vmatprep.subr.mxu0 0.0
  %1585 = vmatpush1.msra.mxu0 0.0
  %1586 = vmatprep.subr.mxu0 0.0
  %1587 = vmatpush1.msra.mxu0 0.0
  %1588 = vmatprep.subr.mxu0 0.0
  %1589 = vmatpush1.msra.mxu0 0.0
  %1590 = vmatprep.subr.mxu0 0.0
  %1591 = vmatpush1.msra.mxu0 0.0
  %1592 = vmatprep.subr.mxu0 0.0
  %1593 = vmatpush1.msra.mxu0 0.0
  %1594 = vmatprep.subr.mxu0 0.0
  %1595 = vmatpush1.msra.mxu0 0.0
  %1596 = vmatprep.subr.mxu0 0.0
  %1597 = vmatpush1.msra.mxu0 0.0
  %1598 = vmatprep.subr.mxu0 0.0
  %1599 = vmatpush1.msra.mxu0 0.0
  %1600 = vmatprep.subr.mxu0 0.0
  %1601 = vmatpush1.msra.mxu0 0.0
  %1602 = vmatprep.subr.mxu0 0.0
  %1603 = vmatpush1.msra.mxu0 0.0
  %1604 = vmatprep.subr.mxu0 0.0
  %1605 = vmatpush1.msra.mxu0 0.0
  %1606 = vmatprep.mubr.f32.mxu0 0.0
  %1607 = vmatmul.mubr.f32.gmra.mrb[0].mxu0 %v1531
  %v1608 = vpop.f32.mrb[0].mxu0
  %v1609 = vadd.f32 %v1529, %v1608
  %v1610 = vpop.f32.mrb[0].mxu0
  %1611 = vmatprep.mubr.f32.mxu0 0.0
  %1612 = vmatmul.mubr.f32.gmra.mrb[0].mxu0 %v1534
  %v1613 = vpop.f32.mrb[0].mxu0
  %v1614 = vadd.f32 %v1529, %v1613
  %v1615 = vpop.f32.mrb[0].mxu0
  %1616 = vmatprep.mubr.f32.mxu0 0.0
  %1617 = vmatmul.mubr.f32.gmra.mrb[0].mxu0 %v1537
  %v1618 = vpop.f32.mrb[0].mxu0
  %v1619 = vadd.f32 %v1529, %v1618
  %v1620 = vpop.f32.mrb[0].mxu0
  %1621 = vmatprep.mubr.f32.mxu0 0.0
  %1622 = vmatmul.mubr.f32.gmra.mrb[0].mxu0 %v1540
  %v1623 = vpop.f32.mrb[0].mxu0
  %v1624 = vadd.f32 %v1529, %v1623
  %v1625 = vpop.f32.mrb[0].mxu0
  %1626 = vdwg.mxu0
  %1631 = vrot.lane.b32.xlu0 %v1609, 96
  %v1632 = vpop.permute.xlu0 %1631
  %1633 = vrot.lane.b32.xlu0 %v1614, 96
  %v1634 = vpop.permute.xlu0 %1633
  %1635 = vrot.lane.b32.xlu0 %v1619, 96
  %v1636 = vpop.permute.xlu0 %1635
  %1637 = vrot.lane.b32.xlu0 %v1624, 96
  %v1638 = vpop.permute.xlu0 %1637
  %v1639 = vsel %vm391, %v1632, 0
  %v1641 = vsel %vm391, %v1634, 0
  %v1643 = vsel %vm391, %v1636, 0
  %v1645 = vsel %vm391, %v1638, 0
  %v1647 = vsel %vm391, %v1609, 0
  %v1649 = vsel %vm391, %v1614, 0
  %v1651 = vsel %vm391, %v1619, 0
  %v1653 = vsel %vm391, %v1624, 0
  %1655 = vmatprep.subr.mxu0 0.0
  %1656 = vmatpush1.xpose.msra.mxu0 %v1647
  %1657 = vmatprep.subr.mxu0 0.0
  %1658 = vmatpush1.xpose.msra.mxu0 %v1649
  %1659 = vmatprep.subr.mxu0 0.0
  %1660 = vmatpush1.xpose.msra.mxu0 %v1647
  %1661 = vmatprep.subr.mxu0 0.0
  %1662 = vmatpush1.xpose.msra.mxu0 %v1649
  %1663 = vmatprep.subr.mxu0 0.0
  %1664 = vmatpush1.xpose.msra.mxu0 %v1651
  %1665 = vmatprep.subr.mxu0 0.0
  %1666 = vmatpush1.xpose.msra.mxu0 %v1653
  %1667 = vmatprep.subr.mxu0 0.0
  %1668 = vmatpush1.xpose.msra.mxu0 %v1651
  %1669 = vmatprep.subr.mxu0 0.0
  %1670 = vmatpush1.xpose.msra.mxu0 %v1653
  %1671 = vmatprep.subr.mxu0 0.0
  %1672 = vmatpush1.xpose.msra.mxu0 0.0
  %1673 = vmatprep.subr.mxu0 0.0
  %1674 = vmatpush1.xpose.msra.mxu0 0.0
  %1675 = vmatprep.subr.mxu0 0.0
  %1676 = vmatpush1.xpose.msra.mxu0 0.0
  %1677 = vmatprep.subr.mxu0 0.0
  %1678 = vmatpush1.xpose.msra.mxu0 0.0
  %1679 = vmatprep.subr.mxu0 0.0
  %1680 = vmatpush1.xpose.msra.mxu0 0.0
  %1681 = vmatprep.subr.mxu0 0.0
  %1682 = vmatpush1.xpose.msra.mxu0 0.0
  %1683 = vmatprep.subr.mxu0 0.0
  %1684 = vmatpush1.xpose.msra.mxu0 0.0
  %1685 = vmatprep.subr.mxu0 0.0
  %1686 = vmatpush1.xpose.msra.mxu0 0.0
  %1687 = vmatprep.subr.mxu0 0.0
  %1688 = vmatpush1.xpose.msra.mxu0 0.0
  %1689 = vmatprep.subr.mxu0 0.0
  %1690 = vmatpush1.xpose.msra.mxu0 0.0
  %1691 = vmatprep.subr.mxu0 0.0
  %1692 = vmatpush1.xpose.msra.mxu0 0.0
  %1693 = vmatprep.subr.mxu0 0.0
  %1694 = vmatpush1.xpose.msra.mxu0 0.0
  %1695 = vmatprep.subr.mxu0 0.0
  %1696 = vmatpush1.xpose.msra.mxu0 0.0
  %1697 = vmatprep.subr.mxu0 0.0
  %1698 = vmatpush1.xpose.msra.mxu0 0.0
  %1699 = vmatprep.subr.mxu0 0.0
  %1700 = vmatpush1.xpose.msra.mxu0 0.0
  %1701 = vmatprep.subr.mxu0 0.0
  %1702 = vmatpush1.xpose.msra.mxu0 0.0
  %1703 = vmatprep.subr.mxu0 0.0
  %1704 = vmatpush1.xpose.msra.mxu0 0.0
  %1705 = vmatprep.subr.mxu0 0.0
  %1706 = vmatpush1.xpose.msra.mxu0 0.0
  %1707 = vmatprep.subr.mxu0 0.0
  %1708 = vmatpush1.xpose.msra.mxu0 0.0
  %1709 = vmatprep.subr.mxu0 0.0
  %1710 = vmatpush1.xpose.msra.mxu0 0.0
  %1711 = vmatprep.subr.mxu0 0.0
  %1712 = vmatpush1.xpose.msra.mxu0 0.0
  %1713 = vmatprep.subr.mxu0 0.0
  %1714 = vmatpush1.xpose.msra.mxu0 0.0
  %1715 = vmatprep.subr.mxu0 0.0
  %1716 = vmatpush1.xpose.msra.mxu0 0.0
  %1717 = vmatprep.subr.mxu0 0.0
  %1718 = vmatpush1.xpose.msra.mxu0 0.0
  %1719 = vmatprep.mubr.f32.mxu0 0.0
  %1720 = vmatmul.mubr.f32.gmra.mrb[0].mxu0 %v1639
  %v1721 = vpop.f32.mrb[0].mxu0
  %v1722 = vadd.f32 0.0, %v1721
  %v1723 = vpop.f32.mrb[0].mxu0
  %1724 = vmatprep.mubr.f32.mxu0 0.0
  %1725 = vmatmul.mubr.f32.gmra.mrb[0].mxu0 %v1641
  %v1726 = vpop.f32.mrb[0].mxu0
  %v1727 = vadd.f32 0.0, %v1726
  %v1728 = vpop.f32.mrb[0].mxu0
  %1729 = vmatprep.mubr.f32.mxu0 0.0
  %1730 = vmatmul.mubr.f32.gmra.mrb[0].mxu0 %v1643
  %v1731 = vpop.f32.mrb[0].mxu0
  %v1732 = vadd.f32 0.0, %v1731
  %v1733 = vpop.f32.mrb[0].mxu0
  %1734 = vmatprep.mubr.f32.mxu0 0.0
  %1735 = vmatmul.mubr.f32.gmra.mrb[0].mxu0 %v1645
  %v1736 = vpop.f32.mrb[0].mxu0
  %v1737 = vadd.f32 0.0, %v1736
  %v1738 = vpop.f32.mrb[0].mxu0
  %1739 = vdwg.mxu0
  %v1741 = vrot.slane %v1722, 1
  %1742 = vrot.lane.b32.xlu0 %v1741, 127
  %v1743 = vpop.permute.xlu0 %1742
  %v1745 = vadd.f32 %v1722, %v1743
  %v1747 = vrot.slane %v1727, 1
  %1748 = vrot.lane.b32.xlu0 %v1747, 127
  %v1749 = vpop.permute.xlu0 %1748
  %v1751 = vadd.f32 %v1727, %v1749
  %v1753 = vrot.slane %v1745, 2
  %1754 = vrot.lane.b32.xlu0 %v1753, 126
  %v1755 = vpop.permute.xlu0 %1754
  %v1757 = vadd.f32 %v1745, %v1755
  %v1759 = vrot.slane %v1751, 2
  %1760 = vrot.lane.b32.xlu0 %v1759, 126
  %v1761 = vpop.permute.xlu0 %1760
  %v1763 = vadd.f32 %v1751, %v1761
  %v1765 = vrot.slane %v1757, 4
  %1766 = vrot.lane.b32.xlu0 %v1765, 124
  %v1767 = vpop.permute.xlu0 %1766
  %v1769 = vadd.f32 %v1757, %v1767
  %v1771 = vrot.slane %v1763, 4
  %1772 = vrot.lane.b32.xlu0 %v1771, 124
  %v1773 = vpop.permute.xlu0 %1772
  %v1775 = vadd.f32 %v1763, %v1773
  %1777 = vrot.lane.b32.xlu0 %v1775, 120
  %v1778 = vpop.permute.xlu0 %1777
  %v1780 = vadd.f32 %v1769, %v1778
  %v1781 = vmul.f32 %v1780, 0.03125
  %v1783 = vrot.slane %v1732, 1
  %1784 = vrot.lane.b32.xlu0 %v1783, 127
  %v1785 = vpop.permute.xlu0 %1784
  %v1787 = vadd.f32 %v1732, %v1785
  %v1789 = vrot.slane %v1737, 1
  %1790 = vrot.lane.b32.xlu0 %v1789, 127
  %v1791 = vpop.permute.xlu0 %1790
  %v1793 = vadd.f32 %v1737, %v1791
  %v1795 = vrot.slane %v1787, 2
  %1796 = vrot.lane.b32.xlu0 %v1795, 126
  %v1797 = vpop.permute.xlu0 %1796
  %v1799 = vadd.f32 %v1787, %v1797
  %v1801 = vrot.slane %v1793, 2
  %1802 = vrot.lane.b32.xlu0 %v1801, 126
  %v1803 = vpop.permute.xlu0 %1802
  %v1805 = vadd.f32 %v1793, %v1803
  %v1807 = vrot.slane %v1799, 4
  %1808 = vrot.lane.b32.xlu0 %v1807, 124
  %v1809 = vpop.permute.xlu0 %1808
  %v1811 = vadd.f32 %v1799, %v1809
  %v1813 = vrot.slane %v1805, 4
  %1814 = vrot.lane.b32.xlu0 %v1813, 124
  %v1815 = vpop.permute.xlu0 %1814
  %v1817 = vadd.f32 %v1805, %v1815
  %1819 = vrot.lane.b32.xlu0 %v1817, 120
  %v1820 = vpop.permute.xlu0 %1819
  %v1822 = vadd.f32 %v1811, %v1820
  %v1823 = vmul.f32 %v1822, 0.03125
  %v1825 = vrot.slane %v1823, 7
  %1826 = vrot.lane.b32.xlu0 %v1825, 96
  %v1827 = vpop.permute.xlu0 %1826
  %v1829 = vsel %vm691, %v1781, %v1827
  %1830 = vrot.lane.b32.xlu0 %v1823, 96
  %v1831 = vpop.permute.xlu0 %1830
  %v1833 = vadd.f32 %v1781, %v1831
  %v1834 = vmul.f32 %v1833, 0.5
  %v1835 = vsel %vm698, %v1834, -inf
  %1836 = vmax.xlane.f32.xlu0 %v1835
  %v1837 = vpop.xlane.xlu0 %1836
  %v1838 = vrot.slane %v1837, 4
  %v1839 = vmax.f32 %v1837, %v1838
  %v1840 = vrot.slane %v1839, 2
  %v1841 = vmax.f32 %v1839, %v1840
  %v1842 = vrot.slane %v1841, 1
  %v1843 = vmax.f32 %v1841, %v1842
  %s1844 = vtos %v1843
  %v1845 = vstv %s1844
  %vm1846 = vcmp.eq.f32.partialorder %v1834, %v1845
  %v1847 = vsel %vm1846, %v28, 16
  %v1848 = vsel %vm698, %v1847, 2147483647
  %v1849 = vand.u32 %v1848, 65535
  %v1850 = vshra.s32 %v1848, 16
  %v1851 = vcvt.s32.f32 %v1849
  %v1852 = vcvt.s32.f32 %v1850
  %1853 = vmin.xlane.f32.xlu0 %v1852
  %v1854 = vpop.xlane.xlu0 %1853
  %vm1855 = vcmp.eq.f32.partialorder %v1852, %v1854
  %v1856 = vsel %vm1855, %v1851, inf
  %1857 = vmin.xlane.f32.xlu0 %v1856
  %v1858 = vpop.xlane.xlu0 %1857
  %v1859 = vcvt.f32.s32 %v1858
  %v1860 = vcvt.f32.s32 %v1854
  %v1861 = vshll.u32 %v1860, 16
  %v1862 = vadd.s32 %v1861, %v1859
  %v1863 = vrot.slane %v1862, 4
  %vm1864 = vcmp.lt.s32.totalorder %v1862, %v1863
  %v1865 = vsel %vm1864, %v1862, %v1863
  %v1866 = vrot.slane %v1865, 2
  %vm1867 = vcmp.lt.s32.totalorder %v1865, %v1866
  %v1868 = vsel %vm1867, %v1865, %v1866
  %v1869 = vrot.slane %v1868, 1
  %vm1870 = vcmp.lt.s32.totalorder %v1868, %v1869
  %v1871 = vsel %vm1870, %v1868, %v1869
  %s1872 = vtos %v1871
  %v1873 = vstv %s1872
  %vm1874 = vcmp.eq.s32.totalorder %v28, %v1873
  %v1875 = vsel %vm1874, -inf, %v1834
  %v1876 = vsel %vm698, %v1875, -inf
  %1877 = vmax.xlane.f32.xlu0 %v1876
  %v1878 = vpop.xlane.xlu0 %1877
  %v1879 = vrot.slane %v1878, 4
  %v1880 = vmax.f32 %v1878, %v1879
  %v1881 = vrot.slane %v1880, 2
  %v1882 = vmax.f32 %v1880, %v1881
  %v1883 = vrot.slane %v1882, 1
  %v1884 = vmax.f32 %v1882, %v1883
  %s1885 = vtos %v1884
  %v1886 = vstv %s1885
  %vm1887 = vcmp.eq.f32.partialorder %v1875, %v1886
  %v1888 = vsel %vm1887, %v28, 16
  %v1889 = vsel %vm698, %v1888, 2147483647
  %v1890 = vand.u32 %v1889, 65535
  %v1891 = vshra.s32 %v1889, 16
  %v1892 = vcvt.s32.f32 %v1890
  %v1893 = vcvt.s32.f32 %v1891
  %1894 = vmin.xlane.f32.xlu0 %v1893
  %v1895 = vpop.xlane.xlu0 %1894
  %vm1896 = vcmp.eq.f32.partialorder %v1893, %v1895
  %v1897 = vsel %vm1896, %v1892, inf
  %1898 = vmin.xlane.f32.xlu0 %v1897
  %v1899 = vpop.xlane.xlu0 %1898
  %v1900 = vcvt.f32.s32 %v1899
  %v1901 = vcvt.f32.s32 %v1895
  %v1902 = vshll.u32 %v1901, 16
  %v1903 = vadd.s32 %v1902, %v1900
  %v1904 = vrot.slane %v1903, 4
  %vm1905 = vcmp.lt.s32.totalorder %v1903, %v1904
  %v1906 = vsel %vm1905, %v1903, %v1904
  %v1907 = vrot.slane %v1906, 2
  %vm1908 = vcmp.lt.s32.totalorder %v1906, %v1907
  %v1909 = vsel %vm1908, %v1906, %v1907
  %v1910 = vrot.slane %v1909, 1
  %vm1911 = vcmp.lt.s32.totalorder %v1909, %v1910
  %v1912 = vsel %vm1911, %v1909, %v1910
  %s1913 = vtos %v1912
  %v1914 = vsel %vm1874, %v1829, 0.0
  %v1915 = vsel %vm779, %v1914, 0.0
  %1916 = vadd.xlane.f32.xlu0 %v1915
  %v1917 = vpop.xlane.xlu0 %1916
  %v1918 = vstv %s1913
  %vm1919 = vcmp.eq.s32.totalorder %v28, %v1918
  %v1920 = vsel %vm1919, %v1829, 0.0
  %v1921 = vsel %vm779, %v1920, 0.0
  %1922 = vadd.xlane.f32.xlu0 %v1921
  %v1923 = vpop.xlane.xlu0 %1922
  %v1924 = vmax.f32 %v1917, %v1923
  %v1925 = vsub.f32 %v1917, %v1924
  %v1926 = vmul.f32 %v1925, 1.442695
  %v1927 = vpow.pop %v1926
  %v1928 = vsub.f32 %v1923, %v1924
  %v1929 = vmul.f32 %v1928, 1.442695
  %v1930 = vpow.pop %v1929
  %v1931 = vadd.f32 %v1927, %v1930
  %v1932 = vrcp.pop %v1931
  %v1933 = vmul.f32 %v1927, %v1932
  %v1934 = vmul.f32 %v1930, %v1932
  %v1935 = vlaneseq
  %v1936 = vshrl.u32 %v1935, 7
  %v1937 = vsub.s32 0, %v1936
  %v1938 = vrot.slane %v1933, %v1937
  %v1939 = vsel %vm800, %v1938, 0.0
  %v1940 = vsel %vm801, %v1938, 0.0
  %v1941 = vsel %vm802, %v1938, 0.0
  %v1942 = vsel %vm803, %v1938, 0.0
  %v1943 = vlaneseq
  %v1944 = vshrl.u32 %v1943, 7
  %v1945 = vsub.s32 1, %v1944
  %v1946 = vrot.slane %v1933, %v1945
  %v1947 = vsel %vm812, %v1946, 0.0
  %v1948 = vsel %vm813, %v1946, 0.0
  %v1949 = vsel %vm814, %v1946, 0.0
  %v1950 = vsel %vm815, %v1946, 0.0
  %v1951 = vadd.f32 %v1939, %v1947
  %v1952 = vadd.f32 %v1940, %v1948
  %v1953 = vadd.f32 %v1941, %v1949
  %v1954 = vadd.f32 %v1942, %v1950
  %vm1955 = vcmp.eq.s32.totalorder %v62, %v1873
  %vm1956 = vcmp.eq.s32.totalorder %v63, %v1873
  %vm1957 = vcmp.eq.s32.totalorder %v64, %v1873
  %vm1958 = vcmp.eq.s32.totalorder %v65, %v1873
  %v1959 = vsel %vm1955, 1, 0
  %v1960 = vsel %vm1956, 1, 0
  %v1961 = vsel %vm1957, 1, 0
  %v1962 = vsel %vm1958, 1, 0
  %v1963 = vcvt.s32.f32 %v1959
  %v1964 = vcvt.s32.f32 %v1960
  %v1965 = vcvt.s32.f32 %v1961
  %v1966 = vcvt.s32.f32 %v1962
  %v1967 = vmul.f32 %v1951, %v1963
  %v1968 = vmul.f32 %v1952, %v1964
  %v1969 = vmul.f32 %v1953, %v1965
  %v1970 = vmul.f32 %v1954, %v1966
  %v1971 = vlaneseq
  %v1972 = vshrl.u32 %v1971, 7
  %v1973 = vsub.s32 0, %v1972
  %v1974 = vrot.slane %v1934, %v1973
  %v1975 = vsel %vm800, %v1974, 0.0
  %v1976 = vsel %vm801, %v1974, 0.0
  %v1977 = vsel %vm802, %v1974, 0.0
  %v1978 = vsel %vm803, %v1974, 0.0
  %v1979 = vlaneseq
  %v1980 = vshrl.u32 %v1979, 7
  %v1981 = vsub.s32 1, %v1980
  %v1982 = vrot.slane %v1934, %v1981
  %v1983 = vsel %vm812, %v1982, 0.0
  %v1984 = vsel %vm813, %v1982, 0.0
  %v1985 = vsel %vm814, %v1982, 0.0
  %v1986 = vsel %vm815, %v1982, 0.0
  %v1987 = vadd.f32 %v1975, %v1983
  %v1988 = vadd.f32 %v1976, %v1984
  %v1989 = vadd.f32 %v1977, %v1985
  %v1990 = vadd.f32 %v1978, %v1986
  %vm1991 = vcmp.eq.s32.totalorder %v62, %v1918
  %vm1992 = vcmp.eq.s32.totalorder %v63, %v1918
  %vm1993 = vcmp.eq.s32.totalorder %v64, %v1918
  %vm1994 = vcmp.eq.s32.totalorder %v65, %v1918
  %v1995 = vsel %vm1991, 1, 0
  %v1996 = vsel %vm1992, 1, 0
  %v1997 = vsel %vm1993, 1, 0
  %v1998 = vsel %vm1994, 1, 0
  %v1999 = vcvt.s32.f32 %v1995
  %v2000 = vcvt.s32.f32 %v1996
  %v2001 = vcvt.s32.f32 %v1997
  %v2002 = vcvt.s32.f32 %v1998
  %v2003 = vmul.f32 %v1987, %v1999
  %v2004 = vmul.f32 %v1988, %v2000
  %v2005 = vmul.f32 %v1989, %v2001
  %v2006 = vmul.f32 %v1990, %v2002
  %v2007 = vadd.f32 %v1967, %v2003
  %v2008 = vadd.f32 %v1968, %v2004
  %v2009 = vadd.f32 %v1969, %v2005
  %v2010 = vadd.f32 %v1970, %v2006
  %v2011 = vmul.f32 %v2007, %v42
  %v2012 = vmul.f32 %v2008, %v43
  %v2013 = vmul.f32 %v2009, %v44
  %v2014 = vmul.f32 %v2010, %v45
  %2015 = vrot.lane.b32.xlu0 %v1609, 64
  %v2016 = vpop.permute.xlu0 %2015
  %2017 = vrot.lane.b32.xlu0 %v1614, 64
  %v2018 = vpop.permute.xlu0 %2017
  %2019 = vrot.lane.b32.xlu0 %v1619, 64
  %v2020 = vpop.permute.xlu0 %2019
  %2021 = vrot.lane.b32.xlu0 %v1624, 64
  %v2022 = vpop.permute.xlu0 %2021
  %v2028 = vsel %vm391, %v2011, 0
  %v2031 = vsel %vm391, %v2012, 0
  %v2034 = vsel %vm391, %v2013, 0
  %v2037 = vsel %vm391, %v2014, 0
  %2039 = vmatprep.subr.mxu0 0.0
  %2040 = vmatpush1.msra.mxu0 %v2016
  %2041 = vmatprep.subr.mxu0 0.0
  %2042 = vmatpush1.msra.mxu0 %v2018
  %2043 = vmatprep.subr.mxu0 0.0
  %2044 = vmatpush1.msra.mxu0 %v2020
  %2045 = vmatprep.subr.mxu0 0.0
  %2046 = vmatpush1.msra.mxu0 %v2022
  %2047 = vmatprep.subr.mxu0 0.0
  %2048 = vmatpush1.msra.mxu0 0.0
  %2049 = vmatprep.subr.mxu0 0.0
  %2050 = vmatpush1.msra.mxu0 0.0
  %2051 = vmatprep.subr.mxu0 0.0
  %2052 = vmatpush1.msra.mxu0 0.0
  %2053 = vmatprep.subr.mxu0 0.0
  %2054 = vmatpush1.msra.mxu0 0.0
  %2055 = vmatprep.subr.mxu0 0.0
  %2056 = vmatpush1.msra.mxu0 0.0
  %2057 = vmatprep.subr.mxu0 0.0
  %2058 = vmatpush1.msra.mxu0 0.0
  %2059 = vmatprep.subr.mxu0 0.0
  %2060 = vmatpush1.msra.mxu0 0.0
  %2061 = vmatprep.subr.mxu0 0.0
  %2062 = vmatpush1.msra.mxu0 0.0
  %2063 = vmatprep.subr.mxu0 0.0
  %2064 = vmatpush1.msra.mxu0 0.0
  %2065 = vmatprep.subr.mxu0 0.0
  %2066 = vmatpush1.msra.mxu0 0.0
  %2067 = vmatprep.subr.mxu0 0.0
  %2068 = vmatpush1.msra.mxu0 0.0
  %2069 = vmatprep.subr.mxu0 0.0
  %2070 = vmatpush1.msra.mxu0 0.0
  %2071 = vmatprep.subr.mxu0 0.0
  %2072 = vmatpush1.msra.mxu0 0.0
  %2073 = vmatprep.subr.mxu0 0.0
  %2074 = vmatpush1.msra.mxu0 0.0
  %2075 = vmatprep.subr.mxu0 0.0
  %2076 = vmatpush1.msra.mxu0 0.0
  %2077 = vmatprep.subr.mxu0 0.0
  %2078 = vmatpush1.msra.mxu0 0.0
  %2079 = vmatprep.subr.mxu0 0.0
  %2080 = vmatpush1.msra.mxu0 0.0
  %2081 = vmatprep.subr.mxu0 0.0
  %2082 = vmatpush1.msra.mxu0 0.0
  %2083 = vmatprep.subr.mxu0 0.0
  %2084 = vmatpush1.msra.mxu0 0.0
  %2085 = vmatprep.subr.mxu0 0.0
  %2086 = vmatpush1.msra.mxu0 0.0
  %2087 = vmatprep.subr.mxu0 0.0
  %2088 = vmatpush1.msra.mxu0 0.0
  %2089 = vmatprep.subr.mxu0 0.0
  %2090 = vmatpush1.msra.mxu0 0.0
  %2091 = vmatprep.subr.mxu0 0.0
  %2092 = vmatpush1.msra.mxu0 0.0
  %2093 = vmatprep.subr.mxu0 0.0
  %2094 = vmatpush1.msra.mxu0 0.0
  %2095 = vmatprep.subr.mxu0 0.0
  %2096 = vmatpush1.msra.mxu0 0.0
  %2097 = vmatprep.subr.mxu0 0.0
  %2098 = vmatpush1.msra.mxu0 0.0
  %2099 = vmatprep.subr.mxu0 0.0
  %2100 = vmatpush1.msra.mxu0 0.0
  %2101 = vmatprep.subr.mxu0 0.0
  %2102 = vmatpush1.msra.mxu0 0.0
  %2103 = vmatprep.mubr.f32.mxu0 0.0
  %2104 = vmatmul.mubr.f32.gmra.mrb[0].mxu0 %v2028
  %v2105 = vpop.f32.mrb[0].mxu0
  %v2106 = vadd.f32 0.0, %v2105
  %v2107 = vpop.f32.mrb[0].mxu0
  %2108 = vmatprep.mubr.f32.mxu0 0.0
  %2109 = vmatmul.mubr.f32.gmra.mrb[0].mxu0 %v2031
  %v2110 = vpop.f32.mrb[0].mxu0
  %v2111 = vadd.f32 0.0, %v2110
  %v2112 = vpop.f32.mrb[0].mxu0
  %2113 = vmatprep.mubr.f32.mxu0 0.0
  %2114 = vmatmul.mubr.f32.gmra.mrb[0].mxu0 %v2034
  %v2115 = vpop.f32.mrb[0].mxu0
  %v2116 = vadd.f32 0.0, %v2115
  %v2117 = vpop.f32.mrb[0].mxu0
  %2118 = vmatprep.mubr.f32.mxu0 0.0
  %2119 = vmatmul.mubr.f32.gmra.mrb[0].mxu0 %v2037
  %v2120 = vpop.f32.mrb[0].mxu0
  %v2121 = vadd.f32 0.0, %v2120
  %v2122 = vpop.f32.mrb[0].mxu0
  %2123 = vdwg.mxu0
  %2128 = vrot.lane.b32.xlu0 %v1508, 32
  %v2129 = vpop.permute.xlu0 %2128
  %2130 = vrot.lane.b32.xlu0 %v1510, 32
  %v2131 = vpop.permute.xlu0 %2130
  %2132 = vrot.lane.b32.xlu0 %v1512, 32
  %v2133 = vpop.permute.xlu0 %2132
  %2134 = vrot.lane.b32.xlu0 %v1514, 32
  %v2135 = vpop.permute.xlu0 %2134
  %v2141 = vsel %vm391, %v2106, 0
  %v2144 = vsel %vm391, %v2111, 0
  %v2147 = vsel %vm391, %v2116, 0
  %v2150 = vsel %vm391, %v2121, 0
  %2152 = vmatprep.subr.mxu0 0.0
  %2153 = vmatpush1.msra.mxu0 %v2129
  %2154 = vmatprep.subr.mxu0 0.0
  %2155 = vmatpush1.msra.mxu0 %v2131
  %2156 = vmatprep.subr.mxu0 0.0
  %2157 = vmatpush1.msra.mxu0 %v2133
  %2158 = vmatprep.subr.mxu0 0.0
  %2159 = vmatpush1.msra.mxu0 %v2135
  %2160 = vmatprep.subr.mxu0 0.0
  %2161 = vmatpush1.msra.mxu0 0.0
  %2162 = vmatprep.subr.mxu0 0.0
  %2163 = vmatpush1.msra.mxu0 0.0
  %2164 = vmatprep.subr.mxu0 0.0
  %2165 = vmatpush1.msra.mxu0 0.0
  %2166 = vmatprep.subr.mxu0 0.0
  %2167 = vmatpush1.msra.mxu0 0.0
  %2168 = vmatprep.subr.mxu0 0.0
  %2169 = vmatpush1.msra.mxu0 0.0
  %2170 = vmatprep.subr.mxu0 0.0
  %2171 = vmatpush1.msra.mxu0 0.0
  %2172 = vmatprep.subr.mxu0 0.0
  %2173 = vmatpush1.msra.mxu0 0.0
  %2174 = vmatprep.subr.mxu0 0.0
  %2175 = vmatpush1.msra.mxu0 0.0
  %2176 = vmatprep.subr.mxu0 0.0
  %2177 = vmatpush1.msra.mxu0 0.0
  %2178 = vmatprep.subr.mxu0 0.0
  %2179 = vmatpush1.msra.mxu0 0.0
  %2180 = vmatprep.subr.mxu0 0.0
  %2181 = vmatpush1.msra.mxu0 0.0
  %2182 = vmatprep.subr.mxu0 0.0
  %2183 = vmatpush1.msra.mxu0 0.0
  %2184 = vmatprep.subr.mxu0 0.0
  %2185 = vmatpush1.msra.mxu0 0.0
  %2186 = vmatprep.subr.mxu0 0.0
  %2187 = vmatpush1.msra.mxu0 0.0
  %2188 = vmatprep.subr.mxu0 0.0
  %2189 = vmatpush1.msra.mxu0 0.0
  %2190 = vmatprep.subr.mxu0 0.0
  %2191 = vmatpush1.msra.mxu0 0.0
  %2192 = vmatprep.subr.mxu0 0.0
  %2193 = vmatpush1.msra.mxu0 0.0
  %2194 = vmatprep.subr.mxu0 0.0
  %2195 = vmatpush1.msra.mxu0 0.0
  %2196 = vmatprep.subr.mxu0 0.0
  %2197 = vmatpush1.msra.mxu0 0.0
  %2198 = vmatprep.subr.mxu0 0.0
  %2199 = vmatpush1.msra.mxu0 0.0
  %2200 = vmatprep.subr.mxu0 0.0
  %2201 = vmatpush1.msra.mxu0 0.0
  %2202 = vmatprep.subr.mxu0 0.0
  %2203 = vmatpush1.msra.mxu0 0.0
  %2204 = vmatprep.subr.mxu0 0.0
  %2205 = vmatpush1.msra.mxu0 0.0
  %2206 = vmatprep.subr.mxu0 0.0
  %2207 = vmatpush1.msra.mxu0 0.0
  %2208 = vmatprep.subr.mxu0 0.0
  %2209 = vmatpush1.msra.mxu0 0.0
  %2210 = vmatprep.subr.mxu0 0.0
  %2211 = vmatpush1.msra.mxu0 0.0
  %2212 = vmatprep.subr.mxu0 0.0
  %2213 = vmatpush1.msra.mxu0 0.0
  %2214 = vmatprep.subr.mxu0 0.0
  %2215 = vmatpush1.msra.mxu0 0.0
  %2216 = vmatprep.mubr.f32.mxu0 0.0
  %2217 = vmatmul.mubr.f32.gmra.mrb[0].mxu0 %v2141
  %v2218 = vpop.f32.mrb[0].mxu0
  %v2219 = vadd.f32 0.0, %v2218
  %v2220 = vpop.f32.mrb[0].mxu0
  %2221 = vmatprep.mubr.f32.mxu0 0.0
  %2222 = vmatmul.mubr.f32.gmra.mrb[0].mxu0 %v2144
  %v2223 = vpop.f32.mrb[0].mxu0
  %v2224 = vadd.f32 0.0, %v2223
  %v2225 = vpop.f32.mrb[0].mxu0
  %2226 = vmatprep.mubr.f32.mxu0 0.0
  %2227 = vmatmul.mubr.f32.gmra.mrb[0].mxu0 %v2147
  %v2228 = vpop.f32.mrb[0].mxu0
  %v2229 = vadd.f32 0.0, %v2228
  %v2230 = vpop.f32.mrb[0].mxu0
  %2231 = vmatprep.mubr.f32.mxu0 0.0
  %2232 = vmatmul.mubr.f32.gmra.mrb[0].mxu0 %v2150
  %v2233 = vpop.f32.mrb[0].mxu0
  %v2234 = vadd.f32 0.0, %v2233
  %v2235 = vpop.f32.mrb[0].mxu0
  %2236 = vdwg.mxu0
  %v2237 = vadd.f32 %v1489, %v2219
  %v2238 = vadd.f32 %v1494, %v2224
  %v2239 = vadd.f32 %v1499, %v2229
  %v2240 = vadd.f32 %v1504, %v2234
  %2242 = vrot.lane.b32.xlu0 %v1529, 32
  %v2243 = vpop.permute.xlu0 %2242
  %v2245 = vadd.f32 %v2237, %v2243
  %v2246 = vadd.f32 %v2238, %v2243
  %v2247 = vadd.f32 %v2239, %v2243
  %v2248 = vadd.f32 %v2240, %v2243
  %2249 = vmatprep.subr.mxu0 0.0
  %2250 = vmatpush1.msra.mxu0 %v2245
  %2251 = vmatprep.subr.mxu0 0.0
  %2252 = vmatpush1.msra.mxu0 %v2246
  %2253 = vmatprep.subr.mxu0 0.0
  %2254 = vmatpush1.msra.mxu0 %v2247
  %2255 = vmatprep.subr.mxu0 0.0
  %2256 = vmatpush1.msra.mxu0 %v2248
  %2257 = vmatprep.subr.mxu0 0.0
  %2258 = vmatpush1.msra.mxu0 0.0
  %2259 = vmatprep.subr.mxu0 0.0
  %2260 = vmatpush1.msra.mxu0 0.0
  %2261 = vmatprep.subr.mxu0 0.0
  %2262 = vmatpush1.msra.mxu0 0.0
  %2263 = vmatprep.subr.mxu0 0.0
  %2264 = vmatpush1.msra.mxu0 0.0
  %2265 = vmatprep.subr.mxu0 0.0
  %2266 = vmatpush1.msra.mxu0 0.0
  %2267 = vmatprep.subr.mxu0 0.0
  %2268 = vmatpush1.msra.mxu0 0.0
  %2269 = vmatprep.subr.mxu0 0.0
  %2270 = vmatpush1.msra.mxu0 0.0
  %2271 = vmatprep.subr.mxu0 0.0
  %2272 = vmatpush1.msra.mxu0 0.0
  %2273 = vmatprep.subr.mxu0 0.0
  %2274 = vmatpush1.msra.mxu0 0.0
  %2275 = vmatprep.subr.mxu0 0.0
  %2276 = vmatpush1.msra.mxu0 0.0
  %2277 = vmatprep.subr.mxu0 0.0
  %2278 = vmatpush1.msra.mxu0 0.0
  %2279 = vmatprep.subr.mxu0 0.0
  %2280 = vmatpush1.msra.mxu0 0.0
  %2281 = vmatprep.subr.mxu0 0.0
  %2282 = vmatpush1.msra.mxu0 0.0
  %2283 = vmatprep.subr.mxu0 0.0
  %2284 = vmatpush1.msra.mxu0 0.0
  %2285 = vmatprep.subr.mxu0 0.0
  %2286 = vmatpush1.msra.mxu0 0.0
  %2287 = vmatprep.subr.mxu0 0.0
  %2288 = vmatpush1.msra.mxu0 0.0
  %2289 = vmatprep.subr.mxu0 0.0
  %2290 = vmatpush1.msra.mxu0 0.0
  %2291 = vmatprep.subr.mxu0 0.0
  %2292 = vmatpush1.msra.mxu0 0.0
  %2293 = vmatprep.subr.mxu0 0.0
  %2294 = vmatpush1.msra.mxu0 0.0
  %2295 = vmatprep.subr.mxu0 0.0
  %2296 = vmatpush1.msra.mxu0 0.0
  %2297 = vmatprep.subr.mxu0 0.0
  %2298 = vmatpush1.msra.mxu0 0.0
  %2299 = vmatprep.subr.mxu0 0.0
  %2300 = vmatpush1.msra.mxu0 0.0
  %2301 = vmatprep.subr.mxu0 0.0
  %2302 = vmatpush1.msra.mxu0 0.0
  %2303 = vmatprep.subr.mxu0 0.0
  %2304 = vmatpush1.msra.mxu0 0.0
  %2305 = vmatprep.subr.mxu0 0.0
  %2306 = vmatpush1.msra.mxu0 0.0
  %2307 = vmatprep.subr.mxu0 0.0
  %2308 = vmatpush1.msra.mxu0 0.0
  %2309 = vmatprep.subr.mxu0 0.0
  %2310 = vmatpush1.msra.mxu0 0.0
  %2311 = vmatprep.subr.mxu0 0.0
  %2312 = vmatpush1.msra.mxu0 0.0
  %2313 = vmatprep.mubr.f32.mxu0 0.0
  %2314 = vmatmul.mubr.f32.gmra.mrb[0].mxu0 %v1123
  %v2315 = vpop.f32.mrb[0].mxu0
  %v2316 = vadd.f32 0.0, %v2315
  %v2317 = vpop.f32.mrb[0].mxu0
  %2318 = vmatprep.mubr.f32.mxu0 0.0
  %2319 = vmatmul.mubr.f32.gmra.mrb[0].mxu0 %v1126
  %v2320 = vpop.f32.mrb[0].mxu0
  %v2321 = vadd.f32 0.0, %v2320
  %v2322 = vpop.f32.mrb[0].mxu0
  %2323 = vmatprep.mubr.f32.mxu0 0.0
  %2324 = vmatmul.mubr.f32.gmra.mrb[0].mxu0 %v1129
  %v2325 = vpop.f32.mrb[0].mxu0
  %v2326 = vadd.f32 0.0, %v2325
  %v2327 = vpop.f32.mrb[0].mxu0
  %2328 = vmatprep.mubr.f32.mxu0 0.0
  %2329 = vmatmul.mubr.f32.gmra.mrb[0].mxu0 %v1132
  %v2330 = vpop.f32.mrb[0].mxu0
  %v2331 = vadd.f32 0.0, %v2330
  %v2332 = vpop.f32.mrb[0].mxu0
  %2333 = vdwg.mxu0
  %v2335 = vsel %vm391, %v2316, 0
  %v2338 = vsel %vm391, %v2321, 0
  %v2341 = vsel %vm391, %v2326, 0
  %v2344 = vsel %vm391, %v2331, 0
  %2346 = vmatprep.subr.mxu0 0.0
  %2347 = vmatpush1.msra.mxu0 %v1509
  %2348 = vmatprep.subr.mxu0 0.0
  %2349 = vmatpush1.msra.mxu0 %v1511
  %2350 = vmatprep.subr.mxu0 0.0
  %2351 = vmatpush1.msra.mxu0 %v1513
  %2352 = vmatprep.subr.mxu0 0.0
  %2353 = vmatpush1.msra.mxu0 %v1515
  %2354 = vmatprep.subr.mxu0 0.0
  %2355 = vmatpush1.msra.mxu0 0.0
  %2356 = vmatprep.subr.mxu0 0.0
  %2357 = vmatpush1.msra.mxu0 0.0
  %2358 = vmatprep.subr.mxu0 0.0
  %2359 = vmatpush1.msra.mxu0 0.0
  %2360 = vmatprep.subr.mxu0 0.0
  %2361 = vmatpush1.msra.mxu0 0.0
  %2362 = vmatprep.subr.mxu0 0.0
  %2363 = vmatpush1.msra.mxu0 0.0
  %2364 = vmatprep.subr.mxu0 0.0
  %2365 = vmatpush1.msra.mxu0 0.0
  %2366 = vmatprep.subr.mxu0 0.0
  %2367 = vmatpush1.msra.mxu0 0.0
  %2368 = vmatprep.subr.mxu0 0.0
  %2369 = vmatpush1.msra.mxu0 0.0
  %2370 = vmatprep.subr.mxu0 0.0
  %2371 = vmatpush1.msra.mxu0 0.0
  %2372 = vmatprep.subr.mxu0 0.0
  %2373 = vmatpush1.msra.mxu0 0.0
  %2374 = vmatprep.subr.mxu0 0.0
  %2375 = vmatpush1.msra.mxu0 0.0
  %2376 = vmatprep.subr.mxu0 0.0
  %2377 = vmatpush1.msra.mxu0 0.0
  %2378 = vmatprep.subr.mxu0 0.0
  %2379 = vmatpush1.msra.mxu0 0.0
  %2380 = vmatprep.subr.mxu0 0.0
  %2381 = vmatpush1.msra.mxu0 0.0
  %2382 = vmatprep.subr.mxu0 0.0
  %2383 = vmatpush1.msra.mxu0 0.0
  %2384 = vmatprep.subr.mxu0 0.0
  %2385 = vmatpush1.msra.mxu0 0.0
  %2386 = vmatprep.subr.mxu0 0.0
  %2387 = vmatpush1.msra.mxu0 0.0
  %2388 = vmatprep.subr.mxu0 0.0
  %2389 = vmatpush1.msra.mxu0 0.0
  %2390 = vmatprep.subr.mxu0 0.0
  %2391 = vmatpush1.msra.mxu0 0.0
  %2392 = vmatprep.subr.mxu0 0.0
  %2393 = vmatpush1.msra.mxu0 0.0
  %2394 = vmatprep.subr.mxu0 0.0
  %2395 = vmatpush1.msra.mxu0 0.0
  %2396 = vmatprep.subr.mxu0 0.0
  %2397 = vmatpush1.msra.mxu0 0.0
  %2398 = vmatprep.subr.mxu0 0.0
  %2399 = vmatpush1.msra.mxu0 0.0
  %2400 = vmatprep.subr.mxu0 0.0
  %2401 = vmatpush1.msra.mxu0 0.0
  %2402 = vmatprep.subr.mxu0 0.0
  %2403 = vmatpush1.msra.mxu0 0.0
  %2404 = vmatprep.subr.mxu0 0.0
  %2405 = vmatpush1.msra.mxu0 0.0
  %2406 = vmatprep.subr.mxu0 0.0
  %2407 = vmatpush1.msra.mxu0 0.0
  %2408 = vmatprep.subr.mxu0 0.0
  %2409 = vmatpush1.msra.mxu0 0.0
  %2410 = vmatprep.mubr.f32.mxu0 0.0
  %2411 = vmatmul.mubr.f32.gmra.mrb[0].mxu0 %v2335
  %v2412 = vpop.f32.mrb[0].mxu0
  %v2413 = vadd.f32 0.0, %v2412
  %v2414 = vpop.f32.mrb[0].mxu0
  %2415 = vmatprep.mubr.f32.mxu0 0.0
  %2416 = vmatmul.mubr.f32.gmra.mrb[0].mxu0 %v2338
  %v2417 = vpop.f32.mrb[0].mxu0
  %v2418 = vadd.f32 0.0, %v2417
  %v2419 = vpop.f32.mrb[0].mxu0
  %2420 = vmatprep.mubr.f32.mxu0 0.0
  %2421 = vmatmul.mubr.f32.gmra.mrb[0].mxu0 %v2341
  %v2422 = vpop.f32.mrb[0].mxu0
  %v2423 = vadd.f32 0.0, %v2422
  %v2424 = vpop.f32.mrb[0].mxu0
  %2425 = vmatprep.mubr.f32.mxu0 0.0
  %2426 = vmatmul.mubr.f32.gmra.mrb[0].mxu0 %v2344
  %v2427 = vpop.f32.mrb[0].mxu0
  %v2428 = vadd.f32 0.0, %v2427
  %v2429 = vpop.f32.mrb[0].mxu0
  %2430 = vdwg.mxu0
  %v2431 = vmax.f32 %v2413, 0.0
  %v2432 = vmax.f32 %v2418, 0.0
  %v2433 = vmax.f32 %v2423, 0.0
  %v2434 = vmax.f32 %v2428, 0.0
  %v2436 = vsel %vm1320, %v2431, 0
  %v2439 = vsel %vm1320, %v2432, 0
  %v2442 = vsel %vm1320, %v2433, 0
  %v2445 = vsel %vm1320, %v2434, 0
  %2447 = vmatprep.subr.mxu0 0.0
  %2448 = vmatpush1.msra.mxu0 %v1517
  %2449 = vmatprep.subr.mxu0 0.0
  %2450 = vmatpush1.msra.mxu0 %v1518
  %2451 = vmatprep.subr.mxu0 0.0
  %2452 = vmatpush1.msra.mxu0 %v1519
  %2453 = vmatprep.subr.mxu0 0.0
  %2454 = vmatpush1.msra.mxu0 %v1520
  %2455 = vmatprep.subr.mxu0 0.0
  %2456 = vmatpush1.msra.mxu0 %v1521
  %2457 = vmatprep.subr.mxu0 0.0
  %2458 = vmatpush1.msra.mxu0 %v1522
  %2459 = vmatprep.subr.mxu0 0.0
  %2460 = vmatpush1.msra.mxu0 %v1523
  %2461 = vmatprep.subr.mxu0 0.0
  %2462 = vmatpush1.msra.mxu0 %v1524
  %2463 = vmatprep.subr.mxu0 0.0
  %2464 = vmatpush1.msra.mxu0 0.0
  %2465 = vmatprep.subr.mxu0 0.0
  %2466 = vmatpush1.msra.mxu0 0.0
  %2467 = vmatprep.subr.mxu0 0.0
  %2468 = vmatpush1.msra.mxu0 0.0
  %2469 = vmatprep.subr.mxu0 0.0
  %2470 = vmatpush1.msra.mxu0 0.0
  %2471 = vmatprep.subr.mxu0 0.0
  %2472 = vmatpush1.msra.mxu0 0.0
  %2473 = vmatprep.subr.mxu0 0.0
  %2474 = vmatpush1.msra.mxu0 0.0
  %2475 = vmatprep.subr.mxu0 0.0
  %2476 = vmatpush1.msra.mxu0 0.0
  %2477 = vmatprep.subr.mxu0 0.0
  %2478 = vmatpush1.msra.mxu0 0.0
  %2479 = vmatprep.subr.mxu0 0.0
  %2480 = vmatpush1.msra.mxu0 0.0
  %2481 = vmatprep.subr.mxu0 0.0
  %2482 = vmatpush1.msra.mxu0 0.0
  %2483 = vmatprep.subr.mxu0 0.0
  %2484 = vmatpush1.msra.mxu0 0.0
  %2485 = vmatprep.subr.mxu0 0.0
  %2486 = vmatpush1.msra.mxu0 0.0
  %2487 = vmatprep.subr.mxu0 0.0
  %2488 = vmatpush1.msra.mxu0 0.0
  %2489 = vmatprep.subr.mxu0 0.0
  %2490 = vmatpush1.msra.mxu0 0.0
  %2491 = vmatprep.subr.mxu0 0.0
  %2492 = vmatpush1.msra.mxu0 0.0
  %2493 = vmatprep.subr.mxu0 0.0
  %2494 = vmatpush1.msra.mxu0 0.0
  %2495 = vmatprep.subr.mxu0 0.0
  %2496 = vmatpush1.msra.mxu0 0.0
  %2497 = vmatprep.subr.mxu0 0.0
  %2498 = vmatpush1.msra.mxu0 0.0
  %2499 = vmatprep.subr.mxu0 0.0
  %2500 = vmatpush1.msra.mxu0 0.0
  %2501 = vmatprep.subr.mxu0 0.0
  %2502 = vmatpush1.msra.mxu0 0.0
  %2503 = vmatprep.subr.mxu0 0.0
  %2504 = vmatpush1.msra.mxu0 0.0
  %2505 = vmatprep.subr.mxu0 0.0
  %2506 = vmatpush1.msra.mxu0 0.0
  %2507 = vmatprep.subr.mxu0 0.0
  %2508 = vmatpush1.msra.mxu0 0.0
  %2509 = vmatprep.subr.mxu0 0.0
  %2510 = vmatpush1.msra.mxu0 0.0
  %2511 = vmatprep.mubr.f32.mxu0 0.0
  %2512 = vmatmul.mubr.f32.gmra.mrb[0].mxu0 %v2436
  %v2513 = vpop.f32.mrb[0].mxu0
  %v2514 = vadd.f32 0.0, %v2513
  %v2515 = vpop.f32.mrb[0].mxu0
  %2516 = vmatprep.mubr.f32.mxu0 0.0
  %2517 = vmatmul.mubr.f32.gmra.mrb[0].mxu0 %v2439
  %v2518 = vpop.f32.mrb[0].mxu0
  %v2519 = vadd.f32 0.0, %v2518
  %v2520 = vpop.f32.mrb[0].mxu0
  %2521 = vmatprep.mubr.f32.mxu0 0.0
  %2522 = vmatmul.mubr.f32.gmra.mrb[0].mxu0 %v2442
  %v2523 = vpop.f32.mrb[0].mxu0
  %v2524 = vadd.f32 0.0, %v2523
  %v2525 = vpop.f32.mrb[0].mxu0
  %2526 = vmatprep.mubr.f32.mxu0 0.0
  %2527 = vmatmul.mubr.f32.gmra.mrb[0].mxu0 %v2445
  %v2528 = vpop.f32.mrb[0].mxu0
  %v2529 = vadd.f32 0.0, %v2528
  %v2530 = vpop.f32.mrb[0].mxu0
  %2531 = vdwg.mxu0
  %v2532 = vadd.f32 %v2316, %v2514
  %v2533 = vadd.f32 %v2321, %v2519
  %v2534 = vadd.f32 %v2326, %v2524
  %v2535 = vadd.f32 %v2331, %v2529
  %2536 = vmatprep.subr.mxu0 0.0
  %2537 = vmatpush1.msra.mxu0 %v2532
  %2538 = vmatprep.subr.mxu0 0.0
  %2539 = vmatpush1.msra.mxu0 %v2533
  %2540 = vmatprep.subr.mxu0 0.0
  %2541 = vmatpush1.msra.mxu0 %v2534
  %2542 = vmatprep.subr.mxu0 0.0
  %2543 = vmatpush1.msra.mxu0 %v2535
  %2544 = vmatprep.subr.mxu0 0.0
  %2545 = vmatpush1.msra.mxu0 0.0
  %2546 = vmatprep.subr.mxu0 0.0
  %2547 = vmatpush1.msra.mxu0 0.0
  %2548 = vmatprep.subr.mxu0 0.0
  %2549 = vmatpush1.msra.mxu0 0.0
  %2550 = vmatprep.subr.mxu0 0.0
  %2551 = vmatpush1.msra.mxu0 0.0
  %2552 = vmatprep.subr.mxu0 0.0
  %2553 = vmatpush1.msra.mxu0 0.0
  %2554 = vmatprep.subr.mxu0 0.0
  %2555 = vmatpush1.msra.mxu0 0.0
  %2556 = vmatprep.subr.mxu0 0.0
  %2557 = vmatpush1.msra.mxu0 0.0
  %2558 = vmatprep.subr.mxu0 0.0
  %2559 = vmatpush1.msra.mxu0 0.0
  %2560 = vmatprep.subr.mxu0 0.0
  %2561 = vmatpush1.msra.mxu0 0.0
  %2562 = vmatprep.subr.mxu0 0.0
  %2563 = vmatpush1.msra.mxu0 0.0
  %2564 = vmatprep.subr.mxu0 0.0
  %2565 = vmatpush1.msra.mxu0 0.0
  %2566 = vmatprep.subr.mxu0 0.0
  %2567 = vmatpush1.msra.mxu0 0.0
  %2568 = vmatprep.subr.mxu0 0.0
  %2569 = vmatpush1.msra.mxu0 0.0
  %2570 = vmatprep.subr.mxu0 0.0
  %2571 = vmatpush1.msra.mxu0 0.0
  %2572 = vmatprep.subr.mxu0 0.0
  %2573 = vmatpush1.msra.mxu0 0.0
  %2574 = vmatprep.subr.mxu0 0.0
  %2575 = vmatpush1.msra.mxu0 0.0
  %2576 = vmatprep.subr.mxu0 0.0
  %2577 = vmatpush1.msra.mxu0 0.0
  %2578 = vmatprep.subr.mxu0 0.0
  %2579 = vmatpush1.msra.mxu0 0.0
  %2580 = vmatprep.subr.mxu0 0.0
  %2581 = vmatpush1.msra.mxu0 0.0
  %2582 = vmatprep.subr.mxu0 0.0
  %2583 = vmatpush1.msra.mxu0 0.0
  %2584 = vmatprep.subr.mxu0 0.0
  %2585 = vmatpush1.msra.mxu0 0.0
  %2586 = vmatprep.subr.mxu0 0.0
  %2587 = vmatpush1.msra.mxu0 0.0
  %2588 = vmatprep.subr.mxu0 0.0
  %2589 = vmatpush1.msra.mxu0 0.0
  %2590 = vmatprep.subr.mxu0 0.0
  %2591 = vmatpush1.msra.mxu0 0.0
  %2592 = vmatprep.subr.mxu0 0.0
  %2593 = vmatpush1.msra.mxu0 0.0
  %2594 = vmatprep.subr.mxu0 0.0
  %2595 = vmatpush1.msra.mxu0 0.0
  %2596 = vmatprep.subr.mxu0 0.0
  %2597 = vmatpush1.msra.mxu0 0.0
  %2598 = vmatprep.subr.mxu0 0.0
  %2599 = vmatpush1.msra.mxu0 0.0
  %2600 = vmatprep.mubr.f32.mxu0 0.0
  %2601 = vmatmul.mubr.f32.gmra.mrb[0].mxu0 %v1123
  %v2602 = vpop.f32.mrb[0].mxu0
  %v2603 = vadd.f32 0.0, %v2602
  %v2604 = vpop.f32.mrb[0].mxu0
  %2605 = vmatprep.mubr.f32.mxu0 0.0
  %2606 = vmatmul.mubr.f32.gmra.mrb[0].mxu0 %v1126
  %v2607 = vpop.f32.mrb[0].mxu0
  %v2608 = vadd.f32 0.0, %v2607
  %v2609 = vpop.f32.mrb[0].mxu0
  %2610 = vmatprep.mubr.f32.mxu0 0.0
  %2611 = vmatmul.mubr.f32.gmra.mrb[0].mxu0 %v1129
  %v2612 = vpop.f32.mrb[0].mxu0
  %v2613 = vadd.f32 0.0, %v2612
  %v2614 = vpop.f32.mrb[0].mxu0
  %2615 = vmatprep.mubr.f32.mxu0 0.0
  %2616 = vmatmul.mubr.f32.gmra.mrb[0].mxu0 %v1132
  %v2617 = vpop.f32.mrb[0].mxu0
  %v2618 = vadd.f32 0.0, %v2617
  %v2619 = vpop.f32.mrb[0].mxu0
  %2620 = vdwg.mxu0
  %v2621 = vsel %vm391, %v2603, 0.0
  %2622 = vadd.xlane.f32.xlu0 %v2621
  %v2623 = vpop.xlane.xlu0 %2622
  %v2624 = vsel %vm391, %v2608, 0.0
  %2625 = vadd.xlane.f32.xlu0 %v2624
  %v2626 = vpop.xlane.xlu0 %2625
  %v2627 = vsel %vm391, %v2613, 0.0
  %2628 = vadd.xlane.f32.xlu0 %v2627
  %v2629 = vpop.xlane.xlu0 %2628
  %v2630 = vsel %vm391, %v2618, 0.0
  %2631 = vadd.xlane.f32.xlu0 %v2630
  %v2632 = vpop.xlane.xlu0 %2631
  %v2633 = vrcp.pop 32.0
  %v2634 = vmul.f32 %v2623, %v2633
  %v2635 = vmul.f32 %v2626, %v2633
  %v2636 = vmul.f32 %v2629, %v2633
  %v2637 = vmul.f32 %v2632, %v2633
  %v2638 = vsub.f32 %v2603, %v2634
  %v2639 = vsub.f32 %v2608, %v2635
  %v2640 = vsub.f32 %v2613, %v2636
  %v2641 = vsub.f32 %v2618, %v2637
  %v2642 = vmul.f32 %v2638, %v2638
  %v2643 = vmul.f32 %v2639, %v2639
  %v2644 = vmul.f32 %v2640, %v2640
  %v2645 = vmul.f32 %v2641, %v2641
  %v2646 = vsel %vm391, %v2642, 0.0
  %2647 = vadd.xlane.f32.xlu0 %v2646
  %v2648 = vpop.xlane.xlu0 %2647
  %v2649 = vsel %vm391, %v2643, 0.0
  %2650 = vadd.xlane.f32.xlu0 %v2649
  %v2651 = vpop.xlane.xlu0 %2650
  %v2652 = vsel %vm391, %v2644, 0.0
  %2653 = vadd.xlane.f32.xlu0 %v2652
  %v2654 = vpop.xlane.xlu0 %2653
  %v2655 = vsel %vm391, %v2645, 0.0
  %2656 = vadd.xlane.f32.xlu0 %v2655
  %v2657 = vpop.xlane.xlu0 %2656
  %v2658 = vmul.f32 %v2648, %v2633
  %v2659 = vmul.f32 %v2651, %v2633
  %v2660 = vmul.f32 %v2654, %v2633
  %v2661 = vmul.f32 %v2657, %v2633
  %v2662 = vadd.f32 %v2658, 1e-05
  %v2663 = vadd.f32 %v2659, 1e-05
  %v2664 = vadd.f32 %v2660, 1e-05
  %v2665 = vadd.f32 %v2661, 1e-05
  %v2666 = vrsqrt.pop %v2662
  %v2667 = vrsqrt.pop %v2663
  %v2668 = vrsqrt.pop %v2664
  %v2669 = vrsqrt.pop %v2665
  %v2670 = vmul.f32 %v2638, %v2666
  %v2671 = vmul.f32 %v2639, %v2667
  %v2672 = vmul.f32 %v2640, %v2668
  %v2673 = vmul.f32 %v2641, %v2669
  %v2674 = vlaneseq
  %v2675 = vshrl.u32 %v2674, 7
  %v2676 = vsub.s32 0, %v2675
  %v2677 = vrot.slane %v271, %v2676
  %v2678 = vmul.f32 %v2670, %v2677
  %v2679 = vmul.f32 %v2671, %v2677
  %v2680 = vmul.f32 %v2672, %v2677
  %v2681 = vmul.f32 %v2673, %v2677
  %2683 = vrot.lane.b32.xlu0 %v2677, 96
  %v2684 = vpop.permute.xlu0 %2683
  %v2686 = vadd.f32 %v2678, %v2684
  %v2687 = vadd.f32 %v2679, %v2684
  %v2688 = vadd.f32 %v2680, %v2684
  %v2689 = vadd.f32 %v2681, %v2684
  %v2691 = vsel %vm391, %v251, 0
  %v2694 = vsel %vm391, %v252, 0
  %v2697 = vsel %vm391, %v253, 0
  %v2700 = vsel %vm391, %v254, 0
  %2702 = vmatprep.subr.mxu0 0.0
  %2703 = vmatpush1.msra.mxu0 %v2686
  %2704 = vmatprep.subr.mxu0 0.0
  %2705 = vmatpush1.msra.mxu0 %v2687
  %2706 = vmatprep.subr.mxu0 0.0
  %2707 = vmatpush1.msra.mxu0 %v2688
  %2708 = vmatprep.subr.mxu0 0.0
  %2709 = vmatpush1.msra.mxu0 %v2689
  %2710 = vmatprep.subr.mxu0 0.0
  %2711 = vmatpush1.msra.mxu0 0.0
  %2712 = vmatprep.subr.mxu0 0.0
  %2713 = vmatpush1.msra.mxu0 0.0
  %2714 = vmatprep.subr.mxu0 0.0
  %2715 = vmatpush1.msra.mxu0 0.0
  %2716 = vmatprep.subr.mxu0 0.0
  %2717 = vmatpush1.msra.mxu0 0.0
  %2718 = vmatprep.subr.mxu0 0.0
  %2719 = vmatpush1.msra.mxu0 0.0
  %2720 = vmatprep.subr.mxu0 0.0
  %2721 = vmatpush1.msra.mxu0 0.0
  %2722 = vmatprep.subr.mxu0 0.0
  %2723 = vmatpush1.msra.mxu0 0.0
  %2724 = vmatprep.subr.mxu0 0.0
  %2725 = vmatpush1.msra.mxu0 0.0
  %2726 = vmatprep.subr.mxu0 0.0
  %2727 = vmatpush1.msra.mxu0 0.0
  %2728 = vmatprep.subr.mxu0 0.0
  %2729 = vmatpush1.msra.mxu0 0.0
  %2730 = vmatprep.subr.mxu0 0.0
  %2731 = vmatpush1.msra.mxu0 0.0
  %2732 = vmatprep.subr.mxu0 0.0
  %2733 = vmatpush1.msra.mxu0 0.0
  %2734 = vmatprep.subr.mxu0 0.0
  %2735 = vmatpush1.msra.mxu0 0.0
  %2736 = vmatprep.subr.mxu0 0.0
  %2737 = vmatpush1.msra.mxu0 0.0
  %2738 = vmatprep.subr.mxu0 0.0
  %2739 = vmatpush1.msra.mxu0 0.0
  %2740 = vmatprep.subr.mxu0 0.0
  %2741 = vmatpush1.msra.mxu0 0.0
  %2742 = vmatprep.subr.mxu0 0.0
  %2743 = vmatpush1.msra.mxu0 0.0
  %2744 = vmatprep.subr.mxu0 0.0
  %2745 = vmatpush1.msra.mxu0 0.0
  %2746 = vmatprep.subr.mxu0 0.0
  %2747 = vmatpush1.msra.mxu0 0.0
  %2748 = vmatprep.subr.mxu0 0.0
  %2749 = vmatpush1.msra.mxu0 0.0
  %2750 = vmatprep.subr.mxu0 0.0
  %2751 = vmatpush1.msra.mxu0 0.0
  %2752 = vmatprep.subr.mxu0 0.0
  %2753 = vmatpush1.msra.mxu0 0.0
  %2754 = vmatprep.subr.mxu0 0.0
  %2755 = vmatpush1.msra.mxu0 0.0
  %2756 = vmatprep.subr.mxu0 0.0
  %2757 = vmatpush1.msra.mxu0 0.0
  %2758 = vmatprep.subr.mxu0 0.0
  %2759 = vmatpush1.msra.mxu0 0.0
  %2760 = vmatprep.subr.mxu0 0.0
  %2761 = vmatpush1.msra.mxu0 0.0
  %2762 = vmatprep.subr.mxu0 0.0
  %2763 = vmatpush1.msra.mxu0 0.0
  %2764 = vmatprep.subr.mxu0 0.0
  %2765 = vmatpush1.msra.mxu0 0.0
  %2766 = vmatprep.mubr.f32.mxu0 0.0
  %2767 = vmatmul.mubr.f32.gmra.mrb[0].mxu0 %v2691
  %v2768 = vpop.f32.mrb[0].mxu0
  %v2769 = vadd.f32 0.0, %v2768
  %v2770 = vpop.f32.mrb[0].mxu0
  %2771 = vmatprep.mubr.f32.mxu0 0.0
  %2772 = vmatmul.mubr.f32.gmra.mrb[0].mxu0 %v2694
  %v2773 = vpop.f32.mrb[0].mxu0
  %v2774 = vadd.f32 0.0, %v2773
  %v2775 = vpop.f32.mrb[0].mxu0
  %2776 = vmatprep.mubr.f32.mxu0 0.0
  %2777 = vmatmul.mubr.f32.gmra.mrb[0].mxu0 %v2697
  %v2778 = vpop.f32.mrb[0].mxu0
  %v2779 = vadd.f32 0.0, %v2778
  %v2780 = vpop.f32.mrb[0].mxu0
  %2781 = vmatprep.mubr.f32.mxu0 0.0
  %2782 = vmatmul.mubr.f32.gmra.mrb[0].mxu0 %v2700
  %v2783 = vpop.f32.mrb[0].mxu0
  %v2784 = vadd.f32 0.0, %v2783
  %v2785 = vpop.f32.mrb[0].mxu0
  %2786 = vdwg.mxu0
  %2787 = vrot.lane.b32.xlu0 %v2677, 64
  %v2788 = vpop.permute.xlu0 %2787
  %v2791 = vsel %vm391, %v2769, 0
  %v2794 = vsel %vm391, %v2774, 0
  %v2797 = vsel %vm391, %v2779, 0
  %v2800 = vsel %vm391, %v2784, 0
  %v2803 = vsel %vm391, %v270, 0
  %2805 = vmatprep.subr.mxu0 0.0
  %2806 = vmatpush1.xpose.msra.mxu0 %v2803
  %2807 = vmatprep.subr.mxu0 0.0
  %2808 = vmatpush1.xpose.msra.mxu0 0.0
  %2809 = vmatprep.subr.mxu0 0.0
  %2810 = vmatpush1.xpose.msra.mxu0 0.0
  %2811 = vmatprep.subr.mxu0 0.0
  %2812 = vmatpush1.xpose.msra.mxu0 0.0
  %2813 = vmatprep.subr.mxu0 0.0
  %2814 = vmatpush1.xpose.msra.mxu0 0.0
  %2815 = vmatprep.subr.mxu0 0.0
  %2816 = vmatpush1.xpose.msra.mxu0 0.0
  %2817 = vmatprep.subr.mxu0 0.0
  %2818 = vmatpush1.xpose.msra.mxu0 0.0
  %2819 = vmatprep.subr.mxu0 0.0
  %2820 = vmatpush1.xpose.msra.mxu0 0.0
  %2821 = vmatprep.subr.mxu0 0.0
  %2822 = vmatpush1.xpose.msra.mxu0 0.0
  %2823 = vmatprep.subr.mxu0 0.0
  %2824 = vmatpush1.xpose.msra.mxu0 0.0
  %2825 = vmatprep.subr.mxu0 0.0
  %2826 = vmatpush1.xpose.msra.mxu0 0.0
  %2827 = vmatprep.subr.mxu0 0.0
  %2828 = vmatpush1.xpose.msra.mxu0 0.0
  %2829 = vmatprep.subr.mxu0 0.0
  %2830 = vmatpush1.xpose.msra.mxu0 0.0
  %2831 = vmatprep.subr.mxu0 0.0
  %2832 = vmatpush1.xpose.msra.mxu0 0.0
  %2833 = vmatprep.subr.mxu0 0.0
  %2834 = vmatpush1.xpose.msra.mxu0 0.0
  %2835 = vmatprep.subr.mxu0 0.0
  %2836 = vmatpush1.xpose.msra.mxu0 0.0
  %2837 = vmatprep.subr.mxu0 0.0
  %2838 = vmatpush1.xpose.msra.mxu0 0.0
  %2839 = vmatprep.subr.mxu0 0.0
  %2840 = vmatpush1.xpose.msra.mxu0 0.0
  %2841 = vmatprep.subr.mxu0 0.0
  %2842 = vmatpush1.xpose.msra.mxu0 0.0
  %2843 = vmatprep.subr.mxu0 0.0
  %2844 = vmatpush1.xpose.msra.mxu0 0.0
  %2845 = vmatprep.subr.mxu0 0.0
  %2846 = vmatpush1.xpose.msra.mxu0 0.0
  %2847 = vmatprep.subr.mxu0 0.0
  %2848 = vmatpush1.xpose.msra.mxu0 0.0
  %2849 = vmatprep.subr.mxu0 0.0
  %2850 = vmatpush1.xpose.msra.mxu0 0.0
  %2851 = vmatprep.subr.mxu0 0.0
  %2852 = vmatpush1.xpose.msra.mxu0 0.0
  %2853 = vmatprep.subr.mxu0 0.0
  %2854 = vmatpush1.xpose.msra.mxu0 0.0
  %2855 = vmatprep.subr.mxu0 0.0
  %2856 = vmatpush1.xpose.msra.mxu0 0.0
  %2857 = vmatprep.subr.mxu0 0.0
  %2858 = vmatpush1.xpose.msra.mxu0 0.0
  %2859 = vmatprep.subr.mxu0 0.0
  %2860 = vmatpush1.xpose.msra.mxu0 0.0
  %2861 = vmatprep.subr.mxu0 0.0
  %2862 = vmatpush1.xpose.msra.mxu0 0.0
  %2863 = vmatprep.subr.mxu0 0.0
  %2864 = vmatpush1.xpose.msra.mxu0 0.0
  %2865 = vmatprep.subr.mxu0 0.0
  %2866 = vmatpush1.xpose.msra.mxu0 0.0
  %2867 = vmatprep.subr.mxu0 0.0
  %2868 = vmatpush1.xpose.msra.mxu0 0.0
  %2869 = vmatprep.mubr.f32.mxu0 0.0
  %2870 = vmatmul.mubr.f32.gmra.mrb[0].mxu0 %v2791
  %v2871 = vpop.f32.mrb[0].mxu0
  %v2872 = vadd.f32 %v2788, %v2871
  %v2873 = vpop.f32.mrb[0].mxu0
  %2874 = vmatprep.mubr.f32.mxu0 0.0
  %2875 = vmatmul.mubr.f32.gmra.mrb[0].mxu0 %v2794
  %v2876 = vpop.f32.mrb[0].mxu0
  %v2877 = vadd.f32 %v2788, %v2876
  %v2878 = vpop.f32.mrb[0].mxu0
  %2879 = vmatprep.mubr.f32.mxu0 0.0
  %2880 = vmatmul.mubr.f32.gmra.mrb[0].mxu0 %v2797
  %v2881 = vpop.f32.mrb[0].mxu0
  %v2882 = vadd.f32 %v2788, %v2881
  %v2883 = vpop.f32.mrb[0].mxu0
  %2884 = vmatprep.mubr.f32.mxu0 0.0
  %2885 = vmatmul.mubr.f32.gmra.mrb[0].mxu0 %v2800
  %v2886 = vpop.f32.mrb[0].mxu0
  %v2887 = vadd.f32 %v2788, %v2886
  %v2888 = vpop.f32.mrb[0].mxu0
  %2889 = vdwg.mxu0
  %2890 = vrot.lane.b32.xlu0 %v263, 4
  %v2891 = vpop.permute.xlu0 %2890
  %2892 = vrot.lane.b32.xlu0 %v264, 4
  %v2893 = vpop.permute.xlu0 %2892
  %2894 = vrot.lane.b32.xlu0 %v265, 4
  %v2895 = vpop.permute.xlu0 %2894
  %2896 = vrot.lane.b32.xlu0 %v266, 4
  %v2897 = vpop.permute.xlu0 %2896
  %v2902 = vmul.f32 %v263, %v2891
  %v2903 = vmul.f32 %v264, %v2893
  %v2904 = vmul.f32 %v265, %v2895
  %v2905 = vmul.f32 %v266, %v2897
  %v2906 = vsub.f32 1.0, %v263
  %v2907 = vsub.f32 1.0, %v264
  %v2908 = vsub.f32 1.0, %v265
  %v2909 = vsub.f32 1.0, %v266
  %2914 = vrot.lane.b32.xlu0 %v2872, 28
  %v2915 = vpop.permute.xlu0 %2914
  %2916 = vrot.lane.b32.xlu0 %v2877, 28
  %v2917 = vpop.permute.xlu0 %2916
  %2918 = vrot.lane.b32.xlu0 %v2882, 28
  %v2919 = vpop.permute.xlu0 %2918
  %2920 = vrot.lane.b32.xlu0 %v2887, 28
  %v2921 = vpop.permute.xlu0 %2920
  %v2926 = vmul.f32 %v2906, %v2915
  %v2927 = vmul.f32 %v2907, %v2917
  %v2928 = vmul.f32 %v2908, %v2919
  %v2929 = vmul.f32 %v2909, %v2921
  %v2930 = vadd.f32 %v2902, %v2926
  %v2931 = vadd.f32 %v2903, %v2927
  %v2932 = vadd.f32 %v2904, %v2928
  %v2933 = vadd.f32 %v2905, %v2929
  %2938 = vrot.lane.b32.xlu0 %v2930, 100
  %v2939 = vpop.permute.xlu0 %2938
  %2940 = vrot.lane.b32.xlu0 %v2931, 100
  %v2941 = vpop.permute.xlu0 %2940
  %2942 = vrot.lane.b32.xlu0 %v2932, 100
  %v2943 = vpop.permute.xlu0 %2942
  %2944 = vrot.lane.b32.xlu0 %v2933, 100
  %v2945 = vpop.permute.xlu0 %2944
  %vm2950 = vcmask 31744
  %2951 = vst.msk [vmem:[%s5] sm:$0xff] %vm2950, %v2939
  %2952 = vst.msk [vmem:[%s5 + $0x8] sm:$0xff] %vm2950, %v2941
  %2953 = vst.msk [vmem:[%s5 + $0x10] sm:$0xff] %vm2950, %v2943
  %2954 = vst.msk [vmem:[%s5 + $0x18] sm:$0xff] %vm2950, %v2945
  %2955 = vrot.lane.b32.xlu0 %v263, 96
  %v2956 = vpop.permute.xlu0 %2955
  %2957 = vrot.lane.b32.xlu0 %v264, 96
  %v2958 = vpop.permute.xlu0 %2957
  %2959 = vrot.lane.b32.xlu0 %v265, 96
  %v2960 = vpop.permute.xlu0 %2959
  %2961 = vrot.lane.b32.xlu0 %v266, 96
  %v2962 = vpop.permute.xlu0 %2961
  %v2967 = vsub.f32 %v2872, %v2956
  %v2968 = vsub.f32 %v2877, %v2958
  %v2969 = vsub.f32 %v2882, %v2960
  %v2970 = vsub.f32 %v2887, %v2962
  %v2971 = vand.u32 2147483647, %v2967
  %v2972 = vand.u32 2147483647, %v2968
  %v2973 = vand.u32 2147483647, %v2969
  %v2974 = vand.u32 2147483647, %v2970
  %2975 = vrot.lane.b32.xlu0 %v263, 100
  %v2976 = vpop.permute.xlu0 %2975
  %2977 = vrot.lane.b32.xlu0 %v264, 100
  %v2978 = vpop.permute.xlu0 %2977
  %2979 = vrot.lane.b32.xlu0 %v265, 100
  %v2980 = vpop.permute.xlu0 %2979
  %2981 = vrot.lane.b32.xlu0 %v266, 100
  %v2982 = vpop.permute.xlu0 %2981
  %v2987 = vmul.f32 %v2971, %v2976
  %v2988 = vmul.f32 %v2972, %v2978
  %v2989 = vmul.f32 %v2973, %v2980
  %v2990 = vmul.f32 %v2974, %v2982
  %2991 = vrot.lane.b32.xlu0 %v263, 92
  %v2992 = vpop.permute.xlu0 %2991
  %2993 = vrot.lane.b32.xlu0 %v264, 92
  %v2994 = vpop.permute.xlu0 %2993
  %2995 = vrot.lane.b32.xlu0 %v265, 92
  %v2996 = vpop.permute.xlu0 %2995
  %2997 = vrot.lane.b32.xlu0 %v266, 92
  %v2998 = vpop.permute.xlu0 %2997
  %v3003 = vmul.f32 %v2971, %v2992
  %v3004 = vmul.f32 %v2972, %v2994
  %v3005 = vmul.f32 %v2973, %v2996
  %v3006 = vmul.f32 %v2974, %v2998
  %3011 = vrot.lane.b32.xlu0 %v3003, 4
  %v3012 = vpop.permute.xlu0 %3011
  %3013 = vrot.lane.b32.xlu0 %v3004, 4
  %v3014 = vpop.permute.xlu0 %3013
  %3015 = vrot.lane.b32.xlu0 %v3005, 4
  %v3016 = vpop.permute.xlu0 %3015
  %3017 = vrot.lane.b32.xlu0 %v3006, 4
  %v3018 = vpop.permute.xlu0 %3017
  %3023 = vrot.lane.b32.xlu0 %v263, 108
  %v3024 = vpop.permute.xlu0 %3023
  %3025 = vrot.lane.b32.xlu0 %v264, 108
  %v3026 = vpop.permute.xlu0 %3025
  %3027 = vrot.lane.b32.xlu0 %v265, 108
  %v3028 = vpop.permute.xlu0 %3027
  %3029 = vrot.lane.b32.xlu0 %v266, 108
  %v3030 = vpop.permute.xlu0 %3029
  %3035 = vrot.lane.b32.xlu0 %v263, 104
  %v3036 = vpop.permute.xlu0 %3035
  %3037 = vrot.lane.b32.xlu0 %v264, 104
  %v3038 = vpop.permute.xlu0 %3037
  %3039 = vrot.lane.b32.xlu0 %v265, 104
  %v3040 = vpop.permute.xlu0 %3039
  %3041 = vrot.lane.b32.xlu0 %v266, 104
  %v3042 = vpop.permute.xlu0 %3041
  %v3047 = vsel %vm2950, %v2987, %v3012
  %v3048 = vsel %vm2950, %v2988, %v3014
  %v3049 = vsel %vm2950, %v2989, %v3016
  %v3050 = vsel %vm2950, %v2990, %v3018
  %vm3051 = vcmask 64512
  %v3052 = vsel %vm3051, %v3047, %v3024
  %v3053 = vsel %vm3051, %v3048, %v3026
  %v3054 = vsel %vm3051, %v3049, %v3028
  %v3055 = vsel %vm3051, %v3050, %v3030
  %vm3056 = vcmask 97280
  %v3057 = vsel %vm3056, %v3052, %v3036
  %v3058 = vsel %vm3056, %v3053, %v3038
  %v3059 = vsel %vm3056, %v3054, %v3040
  %v3060 = vsel %vm3056, %v3055, %v3042
  %v3062 = vsel %vm391, 1.0, 0
  %3064 = vmatprep.subr.mxu0 0.0
  %3065 = vmatpush1.msra.mxu0 %v3057
  %3066 = vmatprep.subr.mxu0 0.0
  %3067 = vmatpush1.msra.mxu0 %v3058
  %3068 = vmatprep.subr.mxu0 0.0
  %3069 = vmatpush1.msra.mxu0 %v3059
  %3070 = vmatprep.subr.mxu0 0.0
  %3071 = vmatpush1.msra.mxu0 %v3060
  %3072 = vmatprep.subr.mxu0 0.0
  %3073 = vmatpush1.msra.mxu0 0.0
  %3074 = vmatprep.subr.mxu0 0.0
  %3075 = vmatpush1.msra.mxu0 0.0
  %3076 = vmatprep.subr.mxu0 0.0
  %3077 = vmatpush1.msra.mxu0 0.0
  %3078 = vmatprep.subr.mxu0 0.0
  %3079 = vmatpush1.msra.mxu0 0.0
  %3080 = vmatprep.subr.mxu0 0.0
  %3081 = vmatpush1.msra.mxu0 0.0
  %3082 = vmatprep.subr.mxu0 0.0
  %3083 = vmatpush1.msra.mxu0 0.0
  %3084 = vmatprep.subr.mxu0 0.0
  %3085 = vmatpush1.msra.mxu0 0.0
  %3086 = vmatprep.subr.mxu0 0.0
  %3087 = vmatpush1.msra.mxu0 0.0
  %3088 = vmatprep.subr.mxu0 0.0
  %3089 = vmatpush1.msra.mxu0 0.0
  %3090 = vmatprep.subr.mxu0 0.0
  %3091 = vmatpush1.msra.mxu0 0.0
  %3092 = vmatprep.subr.mxu0 0.0
  %3093 = vmatpush1.msra.mxu0 0.0
  %3094 = vmatprep.subr.mxu0 0.0
  %3095 = vmatpush1.msra.mxu0 0.0
  %3096 = vmatprep.subr.mxu0 0.0
  %3097 = vmatpush1.msra.mxu0 0.0
  %3098 = vmatprep.subr.mxu0 0.0
  %3099 = vmatpush1.msra.mxu0 0.0
  %3100 = vmatprep.subr.mxu0 0.0
  %3101 = vmatpush1.msra.mxu0 0.0
  %3102 = vmatprep.subr.mxu0 0.0
  %3103 = vmatpush1.msra.mxu0 0.0
  %3104 = vmatprep.subr.mxu0 0.0
  %3105 = vmatpush1.msra.mxu0 0.0
  %3106 = vmatprep.subr.mxu0 0.0
  %3107 = vmatpush1.msra.mxu0 0.0
  %3108 = vmatprep.subr.mxu0 0.0
  %3109 = vmatpush1.msra.mxu0 0.0
  %3110 = vmatprep.subr.mxu0 0.0
  %3111 = vmatpush1.msra.mxu0 0.0
  %3112 = vmatprep.subr.mxu0 0.0
  %3113 = vmatpush1.msra.mxu0 0.0
  %3114 = vmatprep.subr.mxu0 0.0
  %3115 = vmatpush1.msra.mxu0 0.0
  %3116 = vmatprep.subr.mxu0 0.0
  %3117 = vmatpush1.msra.mxu0 0.0
  %3118 = vmatprep.subr.mxu0 0.0
  %3119 = vmatpush1.msra.mxu0 0.0
  %3120 = vmatprep.subr.mxu0 0.0
  %3121 = vmatpush1.msra.mxu0 0.0
  %3122 = vmatprep.subr.mxu0 0.0
  %3123 = vmatpush1.msra.mxu0 0.0
  %3124 = vmatprep.subr.mxu0 0.0
  %3125 = vmatpush1.msra.mxu0 0.0
  %3126 = vmatprep.subr.mxu0 0.0
  %3127 = vmatpush1.msra.mxu0 0.0
  %3128 = vmatprep.mubr.f32.mxu0 0.0
  %3129 = vmatmul.mubr.f32.gmra.mrb[0].mxu0 %v3062
  %v3130 = vpop.f32.mrb[0].mxu0
  %v3131 = vadd.f32 0.0, %v3130
  %v3132 = vpop.f32.mrb[0].mxu0
  %3133 = vdwg.mxu0
  %vm3134 = vcmask 130048
  %v3136 = vsel %vm3134, %v3131, 0
  %3138 = vmatprep.subr.mxu0 0.0
  %3139 = vmatpush1.msra.mxu0 %v261
  %3140 = vmatprep.subr.mxu0 0.0
  %3141 = vmatpush1.msra.mxu0 %v262
  %3142 = vmatprep.subr.mxu0 0.0
  %3143 = vmatpush1.msra.mxu0 0.0
  %3144 = vmatprep.subr.mxu0 0.0
  %3145 = vmatpush1.msra.mxu0 0.0
  %3146 = vmatprep.subr.mxu0 0.0
  %3147 = vmatpush1.msra.mxu0 0.0
  %3148 = vmatprep.subr.mxu0 0.0
  %3149 = vmatpush1.msra.mxu0 0.0
  %3150 = vmatprep.subr.mxu0 0.0
  %3151 = vmatpush1.msra.mxu0 0.0
  %3152 = vmatprep.subr.mxu0 0.0
  %3153 = vmatpush1.msra.mxu0 0.0
  %3154 = vmatprep.subr.mxu0 0.0
  %3155 = vmatpush1.msra.mxu0 0.0
  %3156 = vmatprep.subr.mxu0 0.0
  %3157 = vmatpush1.msra.mxu0 0.0
  %3158 = vmatprep.subr.mxu0 0.0
  %3159 = vmatpush1.msra.mxu0 0.0
  %3160 = vmatprep.subr.mxu0 0.0
  %3161 = vmatpush1.msra.mxu0 0.0
  %3162 = vmatprep.subr.mxu0 0.0
  %3163 = vmatpush1.msra.mxu0 0.0
  %3164 = vmatprep.subr.mxu0 0.0
  %3165 = vmatpush1.msra.mxu0 0.0
  %3166 = vmatprep.subr.mxu0 0.0
  %3167 = vmatpush1.msra.mxu0 0.0
  %3168 = vmatprep.subr.mxu0 0.0
  %3169 = vmatpush1.msra.mxu0 0.0
  %3170 = vmatprep.subr.mxu0 0.0
  %3171 = vmatpush1.msra.mxu0 0.0
  %3172 = vmatprep.subr.mxu0 0.0
  %3173 = vmatpush1.msra.mxu0 0.0
  %3174 = vmatprep.subr.mxu0 0.0
  %3175 = vmatpush1.msra.mxu0 0.0
  %3176 = vmatprep.subr.mxu0 0.0
  %3177 = vmatpush1.msra.mxu0 0.0
  %3178 = vmatprep.subr.mxu0 0.0
  %3179 = vmatpush1.msra.mxu0 0.0
  %3180 = vmatprep.subr.mxu0 0.0
  %3181 = vmatpush1.msra.mxu0 0.0
  %3182 = vmatprep.subr.mxu0 0.0
  %3183 = vmatpush1.msra.mxu0 0.0
  %3184 = vmatprep.subr.mxu0 0.0
  %3185 = vmatpush1.msra.mxu0 0.0
  %3186 = vmatprep.subr.mxu0 0.0
  %3187 = vmatpush1.msra.mxu0 0.0
  %3188 = vmatprep.subr.mxu0 0.0
  %3189 = vmatpush1.msra.mxu0 0.0
  %3190 = vmatprep.subr.mxu0 0.0
  %3191 = vmatpush1.msra.mxu0 0.0
  %3192 = vmatprep.subr.mxu0 0.0
  %3193 = vmatpush1.msra.mxu0 0.0
  %3194 = vmatprep.subr.mxu0 0.0
  %3195 = vmatpush1.msra.mxu0 0.0
  %3196 = vmatprep.subr.mxu0 0.0
  %3197 = vmatpush1.msra.mxu0 0.0
  %3198 = vmatprep.subr.mxu0 0.0
  %3199 = vmatpush1.msra.mxu0 0.0
  %3200 = vmatprep.subr.mxu0 0.0
  %3201 = vmatpush1.msra.mxu0 0.0
  %3202 = vmatprep.mubr.f32.mxu0 0.0
  %3203 = vmatmul.mubr.f32.gmra.mrb[0].mxu0 %v3136
  %v3204 = vpop.f32.mrb[0].mxu0
  %v3205 = vadd.f32 0.0, %v3204
  %v3206 = vpop.f32.mrb[0].mxu0
  %3207 = vdwg.mxu0
  %v3208 = vadd.f32 %v3205, 1e-12
  %3210 = vrot.lane.b32.xlu0 %v3208, 126
  %v3211 = vpop.permute.xlu0 %3210
  %v3213 = vrcp.pop %v3211
  %v3214 = vmul.f32 %v3205, %v3213
  %vm3215 = vcmp.eq.s32.totalorder %v28, 0
  %3217 = vset.pattern.permute.xlu0 0
  %3218 = vperm.xlu0 %3217, %v3214
  %v3219 = vpop.permute.xlu0 %3218
  %v3221 = vsel %vm3215, %v3219, 0.0
  %vm3222 = vcmp.eq.s32.totalorder %v28, 1
  %3223 = vset.pattern.permute.xlu0 1
  %3224 = vperm.xlu0 %3223, %v3214
  %v3225 = vpop.permute.xlu0 %3224
  %v3227 = vsel %vm3222, %v3225, 0.0
  %v3228 = vadd.f32 %v3221, %v3227
  %vm3229 = vcmp.eq.s32.totalorder %v28, 2
  %3230 = vrot.lane.b32.xlu0 %v3214, 127
  %v3231 = vpop.permute.xlu0 %3230
  %v3233 = vadd.f32 %v3214, %v3231
  %3235 = vset.pattern.permute.xlu0 0
  %3236 = vperm.xlu0 %3235, %v3233
  %v3237 = vpop.permute.xlu0 %3236
  %v3239 = vsel %vm3229, %v3237, 0.0
  %v3240 = vadd.f32 %v3228, %v3239
  %vm3241 = vcmask 57344
  %3242 = vst.msk [vmem:[%s6] sm:$0x1] %vm3241, %v3240
  // Predicated region
  $region22: #{_forward_jit.1} parent=0 // pred_check
    _
  $region23: #{_forward_jit.1} parent=0 // pred_check_branch
    %3244 = sbr.rel (0) target = $region25
  $region24: #{_forward_jit.1} parent=0 // pred_region
    _
  $region25: #{_forward_jit.1} parent=0 // pred_fallthru
    _
  // Predicated region
  $region26: #{_forward_jit.1} parent=0 // pred_check
    _
  $region27: #{_forward_jit.1} parent=0 // pred_check_branch
    %3246 = sbr.rel (0) target = $region29
  $region28: #{_forward_jit.1} parent=0 // pred_region
    _
  $region29: #{_forward_jit.1} parent=0 // pred_fallthru
    _
  // Predicated region
  $region30: #{_forward_jit.1} parent=0 // pred_check
    _
  $region31: #{_forward_jit.1} parent=0 // pred_check_branch
    %3248 = sbr.rel (0) target = $region33
  $region32: #{_forward_jit.1} parent=0 // pred_region
    _
  $region33: #{_forward_jit.1} parent=0 // pred_fallthru
    _
  // Predicated region
  $region34: #{_forward_jit.1} parent=0 // pred_check
    _
  $region35: #{_forward_jit.1} parent=0 // pred_check_branch
    %3250 = sbr.rel (0) target = $region37
  $region36: #{_forward_jit.1} parent=0 // pred_region
    _
  $region37: #{_forward_jit.1} parent=0 // pred_fallthru
    _

</llo_original>
